<compile_context>
chip_gen: v5e
topology: v5e:2x2
jax: 0.10.0
libtpu: 0.0.40
codegen_flags: <defaults>
</compile_context>

<pallas_src>
import numpy as np
import jax
import jax.numpy as jnp
from jax import lax
from jax.experimental import pallas as pl
from jax.experimental.pallas import tpu as pltpu


# ------------------------------ fused kernel -------------------------------- #

def _net_kernel(x_ref, B1_ref, b1_ref, E1_ref, B2_ref, b2_ref, E2_ref,
                Wf1_ref, bf1_ref, Wf2_ref, bf2_ref, Wf3_ref, bf3_ref, out_ref):
    f32 = jnp.float32
    tb = x_ref.shape[0]                                        # images per grid step

    # Hoist small shared operands out of the per-image loop.
    b1 = b1_ref[...]
    E1 = E1_ref[...]
    b2 = b2_ref[...]
    E2 = E2_ref[...]

    p2_rows = []                                               # per-image (5, 159) features
    for b in range(tb):                                        # static unrolled loop
        x = x_ref[b]                                           # (96, 32): row = c*32+h, lane = w

        # conv1 + ReLU: 15 row-shifted matmuls against banded (im2col-folded) weights.
        # Output layout (28, 168): row = oh, lane = co*28 + ow.
        acc1 = jnp.zeros((28, 168), f32)
        for ci in range(3):
            for kh in range(5):
                r0 = ci * 32 + kh
                acc1 = acc1 + jnp.dot(x[r0:r0 + 28, :], B1_ref[ci * 5 + kh],
                                      preferred_element_type=f32)
        y1 = jnp.maximum(acc1 + b1, 0.0)

        # pool1 (2x2, stride 2), fused: lane-pair max, row-pair max, even-row selection.
        m1 = jnp.maximum(y1[:, 0:167], y1[:, 1:168])           # (28, 167)
        r1 = jnp.maximum(m1[0:27, :], m1[1:28, :])             # (27, 167)
        p1 = jnp.dot(E1, r1, preferred_element_type=f32)       # (14, 167) valid @ lane ci*28+2w

        # conv2 + ReLU: 5 row-shifted matmuls; even-lane selection folded into B2.
        acc2 = jnp.zeros((10, 160), f32)
        for kh in range(5):
            acc2 = acc2 + jnp.dot(p1[kh:kh + 10, :], B2_ref[kh],
                                  preferred_element_type=f32)
        y2 = jnp.maximum(acc2 + b2, 0.0)                       # (10, 160): lane = co*10 + ow

        # pool2 (2x2, stride 2), fused the same way.
        m2 = jnp.maximum(y2[:, 0:159], y2[:, 1:160])           # (10, 159)
        r2 = jnp.maximum(m2[0:9, :], m2[1:10, :])              # (9, 159)
        p2 = jnp.dot(E2, r2, preferred_element_type=f32)       # (5, 159) valid @ lane co*10+2w
        p2_rows.append(p2)

    # fc1 + ReLU, batched across the tb images of this block (torch NCHW flatten
    # permutation already folded into Wf1; lanes padded 120 -> 128).
    f1 = jnp.zeros((tb, 128), f32)
    for h in range(5):
        rows = [p2_rows[b][h:h + 1, :] for b in range(tb)]
        ph = rows[0] if tb == 1 else jnp.concatenate(rows, axis=0)   # (tb, 159)
        f1 = f1 + jnp.dot(ph, Wf1_ref[h], preferred_element_type=f32)
    f1 = jnp.maximum(f1 + bf1_ref[...], 0.0)

    # fc2 + ReLU, fc3 (all 128-lane padded -> dense (tb, 128) output store).
    f2 = jnp.maximum(jnp.dot(f1, Wf2_ref[...], preferred_element_type=f32)
                     + bf2_ref[...], 0.0)
    f3 = jnp.dot(f2, Wf3_ref[...], preferred_element_type=f32) + bf3_ref[...]
    out_ref[0] = f3


# --------------------------- parameter preparation -------------------------- #

def prep_inference_params(params):
    """Fold im2col, pool lane-selection, the NCHW flatten permutation and the
    128-lane padding into static weight matrices (host-side, done once)."""
    w1 = np.asarray(params["conv1_w"], np.float32)   # (6, 3, 5, 5)  torch OIHW
    b1 = np.asarray(params["conv1_b"], np.float32)
    w2 = np.asarray(params["conv2_w"], np.float32)   # (16, 6, 5, 5)
    b2 = np.asarray(params["conv2_b"], np.float32)
    fw1 = np.asarray(params["fc1_w"], np.float32)    # (120, 400) torch (out, in)
    fb1 = np.asarray(params["fc1_b"], np.float32)
    fw2 = np.asarray(params["fc2_w"], np.float32)    # (84, 120)
    fb2 = np.asarray(params["fc2_b"], np.float32)
    fw3 = np.asarray(params["fc3_w"], np.float32)    # (10, 84)
    fb3 = np.asarray(params["fc3_b"], np.float32)

    # conv1: one banded (32 x 168) matrix per (ci, kh) tap pair.
    B1 = np.zeros((15, 32, 168), np.float32)
    for ci in range(3):
        for kh in range(5):
            for co in range(6):
                for ow in range(28):
                    for kw in range(5):
                        B1[ci * 5 + kh, ow + kw, co * 28 + ow] = w1[co, ci, kh, kw]
    b1row = np.repeat(b1, 28)[None, :].astype(np.float32)             # (1, 168)

    E1 = np.zeros((14, 27), np.float32)                                # even-row selector
    E1[np.arange(14), 2 * np.arange(14)] = 1.0

    # conv2: banded weights over the uncompacted pooled-1 lanes (valid @ ci*28 + 2*w).
    B2 = np.zeros((5, 167, 160), np.float32)
    for kh in range(5):
        for ci in range(6):
            for co in range(16):
                for ow in range(10):
                    for kw in range(5):
                        B2[kh, ci * 28 + 2 * (ow + kw), co * 10 + ow] = w2[co, ci, kh, kw]
    b2row = np.repeat(b2, 10)[None, :].astype(np.float32)             # (1, 160)

    E2 = np.zeros((5, 9), np.float32)
    E2[np.arange(5), 2 * np.arange(5)] = 1.0

    # fc1: fold torch flatten index (c*25 + h*5 + w) and pooled-2 lane layout
    # (valid @ c*10 + 2*w) into a (5, 159, 128) weight; pad out 120 -> 128 lanes.
    Wf1 = np.zeros((5, 159, 128), np.float32)
    for h in range(5):
        for co in range(16):
            for w in range(5):
                Wf1[h, co * 10 + 2 * w, :120] = fw1[:, co * 25 + h * 5 + w]
    bf1 = np.zeros((1, 128), np.float32)
    bf1[0, :120] = fb1

    Wf2 = np.zeros((128, 128), np.float32)
    Wf2[:120, :84] = fw2.T
    bf2 = np.zeros((1, 128), np.float32)
    bf2[0, :84] = fb2

    Wf3 = np.zeros((128, 128), np.float32)
    Wf3[:84, :10] = fw3.T
    bf3 = np.zeros((1, 128), np.float32)
    bf3[0, :10] = fb3

    host = dict(B1=B1, b1=b1row, E1=E1, B2=B2, b2=b2row, E2=E2,
                Wf1=Wf1, bf1=bf1, Wf2=Wf2, bf2=bf2, Wf3=Wf3, bf3=bf3)
    return {k: jnp.asarray(v) for k, v in host.items()}


# --------------------------------- forward ---------------------------------- #

def fused_forward(prep, x_nchw, block_batch=None):
    n, c, h, w = x_nchw.shape
    assert (c, h, w) == (3, 32, 32), "Net requires 3x32x32 inputs (CIFAR-10)."

    if block_batch is not None:
        tb = max(1, min(int(block_batch), n))
    else:
        # Keep >= 2 grid steps when possible (megacore split on v7x) while
        # amortizing per-step pipeline overhead; cap the block at 8 images.
        tb = max(1, min(8, n // 2)) if n > 1 else 1
    n_blocks = -(-n // tb)
    n_pad = n_blocks * tb

    x_rows = x_nchw.reshape(n, 96, 32)        # free reshape of NCHW: row = c*32+h, lane = w
    if n_pad != n:
        x_rows = jnp.pad(x_rows, ((0, n_pad - n), (0, 0), (0, 0)))

    out = pl.pallas_call(
        _net_kernel,
        out_shape=jax.ShapeDtypeStruct((n_blocks, tb, 128), jnp.float32),
        grid=(n_blocks,),
        in_specs=[
            pl.BlockSpec((tb, 96, 32), lambda i: (i, 0, 0)),      # image block
            pl.BlockSpec((15, 32, 168), lambda i: (0, 0, 0)),     # conv1 banded weights
            pl.BlockSpec((1, 168), lambda i: (0, 0)),             # conv1 bias (per lane)
            pl.BlockSpec((14, 27), lambda i: (0, 0)),             # pool1 even-row selector
            pl.BlockSpec((5, 167, 160), lambda i: (0, 0, 0)),     # conv2 banded weights
            pl.BlockSpec((1, 160), lambda i: (0, 0)),             # conv2 bias
            pl.BlockSpec((5, 9), lambda i: (0, 0)),               # pool2 even-row selector
            pl.BlockSpec((5, 159, 128), lambda i: (0, 0, 0)),     # fc1 (flatten folded, padded)
            pl.BlockSpec((1, 128), lambda i: (0, 0)),             # fc1 bias
            pl.BlockSpec((128, 128), lambda i: (0, 0)),           # fc2 (padded)
            pl.BlockSpec((1, 128), lambda i: (0, 0)),             # fc2 bias
            pl.BlockSpec((128, 128), lambda i: (0, 0)),           # fc3 (padded)
            pl.BlockSpec((1, 128), lambda i: (0, 0)),             # fc3 bias
        ],
        out_specs=pl.BlockSpec((1, tb, 128), lambda i: (i, 0, 0)),
        compiler_params=pltpu.CompilerParams(
            dimension_semantics=("parallel",)),
    )(x_rows, prep["B1"], prep["b1"], prep["E1"], prep["B2"], prep["b2"],
      prep["E2"], prep["Wf1"], prep["bf1"], prep["Wf2"], prep["bf2"],
      prep["Wf3"], prep["bf3"])
    # Drop the batch padding and the 10 -> 128 lane padding.
    return out.reshape(n_pad, 128)[:n, :10]


# ------------------------------ params & reference --------------------------- #

def init_params(key):
    ks = jax.random.split(key, 10)
    s = 0.1
    return {
        "conv1_w": jax.random.normal(ks[0], (6, 3, 5, 5), jnp.float32) * s,
        "conv1_b": jax.random.normal(ks[1], (6,), jnp.float32) * s,
        "conv2_w": jax.random.normal(ks[2], (16, 6, 5, 5), jnp.float32) * s,
        "conv2_b": jax.random.normal(ks[3], (16,), jnp.float32) * s,
        "fc1_w": jax.random.normal(ks[4], (120, 400), jnp.float32) * s,   # torch (out, in)
        "fc1_b": jax.random.normal(ks[5], (120,), jnp.float32) * s,
        "fc2_w": jax.random.normal(ks[6], (84, 120), jnp.float32) * s,
        "fc2_b": jax.random.normal(ks[7], (84,), jnp.float32) * s,
        "fc3_w": jax.random.normal(ks[8], (10, 84), jnp.float32) * s,
        "fc3_b": jax.random.normal(ks[9], (10,), jnp.float32) * s,
    }


def reference_forward(params, x_nchw):
    """Pure-JAX reference mirroring the PyTorch module exactly."""
    def conv(x, w, b):
        y = lax.conv_general_dilated(x, w, (1, 1), "VALID",
                                     dimension_numbers=("NCHW", "OIHW", "NCHW"))
        return jnp.maximum(y + b[None, :, None, None], 0.0)

    def pool(x):
        return lax.reduce_window(x, -jnp.inf, lax.max,
                                 (1, 1, 2, 2), (1, 1, 2, 2), "VALID")

    x = pool(conv(x_nchw, params["conv1_w"], params["conv1_b"]))
    x = pool(conv(x, params["conv2_w"], params["conv2_b"]))
    x = x.reshape(x.shape[0], -1)
    x = jnp.maximum(x @ params["fc1_w"].T + params["fc1_b"], 0.0)
    x = jnp.maximum(x @ params["fc2_w"].T + params["fc2_b"], 0.0)
    return x @ params["fc3_w"].T + params["fc3_b"]


if __name__ == "__main__":
    key = jax.random.PRNGKey(0)
    pkey, xkey, xkey2 = jax.random.split(key, 3)
    params = init_params(pkey)
    prep = prep_inference_params(params)

    # CIFAR-10 geometry is required by the 16*5*5 flatten: 32x32 RGB images.
    x = jax.random.normal(xkey, (2, 3, 32, 32), jnp.float32)
    out = jax.block_until_ready(fused_forward(prep, x))
    ref = jax.block_until_ready(reference_forward(params, x))
    assert out.shape == (2, 10), out.shape
    assert jnp.allclose(out, ref, rtol=1e-4, atol=1e-4), \
        f"max abs err {jnp.max(jnp.abs(out - ref))}"

    # Second shape exercising batch blocking (tb=2) and ragged-batch padding.
    x2 = jax.random.normal(xkey2, (5, 3, 32, 32), jnp.float32)
    out2 = jax.block_until_ready(fused_forward(prep, x2))
    ref2 = jax.block_until_ready(reference_forward(params, x2))
    assert out2.shape == (5, 10), out2.shape
    assert jnp.allclose(out2, ref2, rtol=1e-4, atol=1e-4), \
        f"max abs err {jnp.max(jnp.abs(out2 - ref2))}"

    print("KERNEL_OK")
</pallas_src>

<mosaic_0001>
module attributes {stable_mosaic.version = 11 : i64} {
  func.func @_net_kernel(%arg0: i32, %arg1: memref<1x96x32xf32, #tpu.memory_space<vmem>>, %arg2: memref<15x32x168xf32, #tpu.memory_space<vmem>>, %arg3: memref<1x168xf32, #tpu.memory_space<vmem>>, %arg4: memref<14x27xf32, #tpu.memory_space<vmem>>, %arg5: memref<5x167x160xf32, #tpu.memory_space<vmem>>, %arg6: memref<1x160xf32, #tpu.memory_space<vmem>>, %arg7: memref<5x9xf32, #tpu.memory_space<vmem>>, %arg8: memref<5x159x128xf32, #tpu.memory_space<vmem>>, %arg9: memref<1x128xf32, #tpu.memory_space<vmem>>, %arg10: memref<128x128xf32, #tpu.memory_space<vmem>>, %arg11: memref<1x128xf32, #tpu.memory_space<vmem>>, %arg12: memref<128x128xf32, #tpu.memory_space<vmem>>, %arg13: memref<1x128xf32, #tpu.memory_space<vmem>>, %arg14: memref<1x1x128xf32, #tpu.memory_space<vmem>>) attributes {dimension_semantics = [#tpu.dimension_semantics<parallel>], iteration_bounds = array<i64: 2>, scalar_prefetch = 0 : i64, scratch_operands = 0 : i64, tpu.core_type = #tpu.core_type<tc>, window_params = [{transform_indices = @transform_0, window_bounds = array<i64: 1, 96, 32>}, {pipeline_mode = #tpu.pipeline_mode<synchronous>, transform_indices = @transform_1, window_bounds = array<i64: 15, 32, 168>}, {pipeline_mode = #tpu.pipeline_mode<synchronous>, transform_indices = @transform_2, window_bounds = array<i64: 1, 168>}, {pipeline_mode = #tpu.pipeline_mode<synchronous>, transform_indices = @transform_3, window_bounds = array<i64: 14, 27>}, {pipeline_mode = #tpu.pipeline_mode<synchronous>, transform_indices = @transform_4, window_bounds = array<i64: 5, 167, 160>}, {pipeline_mode = #tpu.pipeline_mode<synchronous>, transform_indices = @transform_5, window_bounds = array<i64: 1, 160>}, {pipeline_mode = #tpu.pipeline_mode<synchronous>, transform_indices = @transform_6, window_bounds = array<i64: 5, 9>}, {pipeline_mode = #tpu.pipeline_mode<synchronous>, transform_indices = @transform_7, window_bounds = array<i64: 5, 159, 128>}, {pipeline_mode = #tpu.pipeline_mode<synchronous>, transform_indices = @transform_8, window_bounds = array<i64: 1, 128>}, {pipeline_mode = #tpu.pipeline_mode<synchronous>, transform_indices = @transform_9, window_bounds = array<i64: 128, 128>}, {pipeline_mode = #tpu.pipeline_mode<synchronous>, transform_indices = @transform_10, window_bounds = array<i64: 1, 128>}, {pipeline_mode = #tpu.pipeline_mode<synchronous>, transform_indices = @transform_11, window_bounds = array<i64: 128, 128>}, {pipeline_mode = #tpu.pipeline_mode<synchronous>, transform_indices = @transform_12, window_bounds = array<i64: 1, 128>}, {transform_indices = @transform_13, window_bounds = array<i64: 1, 1, 128>}]} {
    %c0 = arith.constant 0 : index
    %c0_0 = arith.constant 0 : index
    %0 = vector.load %arg3[%c0, %c0_0] : memref<1x168xf32, #tpu.memory_space<vmem>>, vector<1x168xf32>
    %c0_1 = arith.constant 0 : index
    %c0_2 = arith.constant 0 : index
    %1 = vector.load %arg4[%c0_1, %c0_2] : memref<14x27xf32, #tpu.memory_space<vmem>>, vector<14x27xf32>
    %c0_3 = arith.constant 0 : index
    %c0_4 = arith.constant 0 : index
    %2 = vector.load %arg6[%c0_3, %c0_4] : memref<1x160xf32, #tpu.memory_space<vmem>>, vector<1x160xf32>
    %c0_5 = arith.constant 0 : index
    %c0_6 = arith.constant 0 : index
    %3 = vector.load %arg7[%c0_5, %c0_6] : memref<5x9xf32, #tpu.memory_space<vmem>>, vector<5x9xf32>
    %c0_7 = arith.constant 0 : index
    %c0_8 = arith.constant 0 : index
    %c0_9 = arith.constant 0 : index
    %4 = vector.load %arg1[%c0_7, %c0_8, %c0_9] : memref<1x96x32xf32, #tpu.memory_space<vmem>>, vector<1x96x32xf32>
    %5 = vector.shape_cast %4 : vector<1x96x32xf32> to vector<96x32xf32>
    %cst = arith.constant 0.000000e+00 : f32
    %6 = vector.broadcast %cst : f32 to vector<28x168xf32>
    %7 = vector.extract_strided_slice %5 {offsets = [0, 0], sizes = [28, 32], strides = [1, 1]} : vector<96x32xf32> to vector<28x32xf32>
    %c0_10 = arith.constant 0 : index
    %c0_11 = arith.constant 0 : index
    %c0_12 = arith.constant 0 : index
    %8 = vector.load %arg2[%c0_10, %c0_11, %c0_12] : memref<15x32x168xf32, #tpu.memory_space<vmem>>, vector<1x32x168xf32>
    %9 = vector.shape_cast %8 : vector<1x32x168xf32> to vector<32x168xf32>
    %cst_13 = arith.constant dense<0.000000e+00> : vector<28x168xf32>
    %10 = tpu.matmul %7, %9, %cst_13 {dimension_numbers = #tpu.dot_dimension_numbers<[1], [0], [0], [1], [0, 0, 1, 1], [], []>} : vector<28x32xf32>, vector<32x168xf32>, vector<28x168xf32> -> vector<28x168xf32>
    %11 = arith.addf %6, %10 : vector<28x168xf32>
    %12 = vector.extract_strided_slice %5 {offsets = [1, 0], sizes = [28, 32], strides = [1, 1]} : vector<96x32xf32> to vector<28x32xf32>
    %c1 = arith.constant 1 : index
    %c0_14 = arith.constant 0 : index
    %c0_15 = arith.constant 0 : index
    %13 = vector.load %arg2[%c1, %c0_14, %c0_15] : memref<15x32x168xf32, #tpu.memory_space<vmem>>, vector<1x32x168xf32>
    %14 = vector.shape_cast %13 : vector<1x32x168xf32> to vector<32x168xf32>
    %cst_16 = arith.constant dense<0.000000e+00> : vector<28x168xf32>
    %15 = tpu.matmul %12, %14, %cst_16 {dimension_numbers = #tpu.dot_dimension_numbers<[1], [0], [0], [1], [0, 0, 1, 1], [], []>} : vector<28x32xf32>, vector<32x168xf32>, vector<28x168xf32> -> vector<28x168xf32>
    %16 = arith.addf %11, %15 : vector<28x168xf32>
    %17 = vector.extract_strided_slice %5 {offsets = [2, 0], sizes = [28, 32], strides = [1, 1]} : vector<96x32xf32> to vector<28x32xf32>
    %c2 = arith.constant 2 : index
    %c0_17 = arith.constant 0 : index
    %c0_18 = arith.constant 0 : index
    %18 = vector.load %arg2[%c2, %c0_17, %c0_18] : memref<15x32x168xf32, #tpu.memory_space<vmem>>, vector<1x32x168xf32>
    %19 = vector.shape_cast %18 : vector<1x32x168xf32> to vector<32x168xf32>
    %cst_19 = arith.constant dense<0.000000e+00> : vector<28x168xf32>
    %20 = tpu.matmul %17, %19, %cst_19 {dimension_numbers = #tpu.dot_dimension_numbers<[1], [0], [0], [1], [0, 0, 1, 1], [], []>} : vector<28x32xf32>, vector<32x168xf32>, vector<28x168xf32> -> vector<28x168xf32>
    %21 = arith.addf %16, %20 : vector<28x168xf32>
    %22 = vector.extract_strided_slice %5 {offsets = [3, 0], sizes = [28, 32], strides = [1, 1]} : vector<96x32xf32> to vector<28x32xf32>
    %c3 = arith.constant 3 : index
    %c0_20 = arith.constant 0 : index
    %c0_21 = arith.constant 0 : index
    %23 = vector.load %arg2[%c3, %c0_20, %c0_21] : memref<15x32x168xf32, #tpu.memory_space<vmem>>, vector<1x32x168xf32>
    %24 = vector.shape_cast %23 : vector<1x32x168xf32> to vector<32x168xf32>
    %cst_22 = arith.constant dense<0.000000e+00> : vector<28x168xf32>
    %25 = tpu.matmul %22, %24, %cst_22 {dimension_numbers = #tpu.dot_dimension_numbers<[1], [0], [0], [1], [0, 0, 1, 1], [], []>} : vector<28x32xf32>, vector<32x168xf32>, vector<28x168xf32> -> vector<28x168xf32>
    %26 = arith.addf %21, %25 : vector<28x168xf32>
    %27 = vector.extract_strided_slice %5 {offsets = [4, 0], sizes = [28, 32], strides = [1, 1]} : vector<96x32xf32> to vector<28x32xf32>
    %c4 = arith.constant 4 : index
    %c0_23 = arith.constant 0 : index
    %c0_24 = arith.constant 0 : index
    %28 = vector.load %arg2[%c4, %c0_23, %c0_24] : memref<15x32x168xf32, #tpu.memory_space<vmem>>, vector<1x32x168xf32>
    %29 = vector.shape_cast %28 : vector<1x32x168xf32> to vector<32x168xf32>
    %cst_25 = arith.constant dense<0.000000e+00> : vector<28x168xf32>
    %30 = tpu.matmul %27, %29, %cst_25 {dimension_numbers = #tpu.dot_dimension_numbers<[1], [0], [0], [1], [0, 0, 1, 1], [], []>} : vector<28x32xf32>, vector<32x168xf32>, vector<28x168xf32> -> vector<28x168xf32>
    %31 = arith.addf %26, %30 : vector<28x168xf32>
    %32 = vector.extract_strided_slice %5 {offsets = [32, 0], sizes = [28, 32], strides = [1, 1]} : vector<96x32xf32> to vector<28x32xf32>
    %c5 = arith.constant 5 : index
    %c0_26 = arith.constant 0 : index
    %c0_27 = arith.constant 0 : index
    %33 = vector.load %arg2[%c5, %c0_26, %c0_27] : memref<15x32x168xf32, #tpu.memory_space<vmem>>, vector<1x32x168xf32>
    %34 = vector.shape_cast %33 : vector<1x32x168xf32> to vector<32x168xf32>
    %cst_28 = arith.constant dense<0.000000e+00> : vector<28x168xf32>
    %35 = tpu.matmul %32, %34, %cst_28 {dimension_numbers = #tpu.dot_dimension_numbers<[1], [0], [0], [1], [0, 0, 1, 1], [], []>} : vector<28x32xf32>, vector<32x168xf32>, vector<28x168xf32> -> vector<28x168xf32>
    %36 = arith.addf %31, %35 : vector<28x168xf32>
    %37 = vector.extract_strided_slice %5 {offsets = [33, 0], sizes = [28, 32], strides = [1, 1]} : vector<96x32xf32> to vector<28x32xf32>
    %c6 = arith.constant 6 : index
    %c0_29 = arith.constant 0 : index
    %c0_30 = arith.constant 0 : index
    %38 = vector.load %arg2[%c6, %c0_29, %c0_30] : memref<15x32x168xf32, #tpu.memory_space<vmem>>, vector<1x32x168xf32>
    %39 = vector.shape_cast %38 : vector<1x32x168xf32> to vector<32x168xf32>
    %cst_31 = arith.constant dense<0.000000e+00> : vector<28x168xf32>
    %40 = tpu.matmul %37, %39, %cst_31 {dimension_numbers = #tpu.dot_dimension_numbers<[1], [0], [0], [1], [0, 0, 1, 1], [], []>} : vector<28x32xf32>, vector<32x168xf32>, vector<28x168xf32> -> vector<28x168xf32>
    %41 = arith.addf %36, %40 : vector<28x168xf32>
    %42 = vector.extract_strided_slice %5 {offsets = [34, 0], sizes = [28, 32], strides = [1, 1]} : vector<96x32xf32> to vector<28x32xf32>
    %c7 = arith.constant 7 : index
    %c0_32 = arith.constant 0 : index
    %c0_33 = arith.constant 0 : index
    %43 = vector.load %arg2[%c7, %c0_32, %c0_33] : memref<15x32x168xf32, #tpu.memory_space<vmem>>, vector<1x32x168xf32>
    %44 = vector.shape_cast %43 : vector<1x32x168xf32> to vector<32x168xf32>
    %cst_34 = arith.constant dense<0.000000e+00> : vector<28x168xf32>
    %45 = tpu.matmul %42, %44, %cst_34 {dimension_numbers = #tpu.dot_dimension_numbers<[1], [0], [0], [1], [0, 0, 1, 1], [], []>} : vector<28x32xf32>, vector<32x168xf32>, vector<28x168xf32> -> vector<28x168xf32>
    %46 = arith.addf %41, %45 : vector<28x168xf32>
    %47 = vector.extract_strided_slice %5 {offsets = [35, 0], sizes = [28, 32], strides = [1, 1]} : vector<96x32xf32> to vector<28x32xf32>
    %c8 = arith.constant 8 : index
    %c0_35 = arith.constant 0 : index
    %c0_36 = arith.constant 0 : index
    %48 = vector.load %arg2[%c8, %c0_35, %c0_36] : memref<15x32x168xf32, #tpu.memory_space<vmem>>, vector<1x32x168xf32>
    %49 = vector.shape_cast %48 : vector<1x32x168xf32> to vector<32x168xf32>
    %cst_37 = arith.constant dense<0.000000e+00> : vector<28x168xf32>
    %50 = tpu.matmul %47, %49, %cst_37 {dimension_numbers = #tpu.dot_dimension_numbers<[1], [0], [0], [1], [0, 0, 1, 1], [], []>} : vector<28x32xf32>, vector<32x168xf32>, vector<28x168xf32> -> vector<28x168xf32>
    %51 = arith.addf %46, %50 : vector<28x168xf32>
    %52 = vector.extract_strided_slice %5 {offsets = [36, 0], sizes = [28, 32], strides = [1, 1]} : vector<96x32xf32> to vector<28x32xf32>
    %c9 = arith.constant 9 : index
    %c0_38 = arith.constant 0 : index
    %c0_39 = arith.constant 0 : index
    %53 = vector.load %arg2[%c9, %c0_38, %c0_39] : memref<15x32x168xf32, #tpu.memory_space<vmem>>, vector<1x32x168xf32>
    %54 = vector.shape_cast %53 : vector<1x32x168xf32> to vector<32x168xf32>
    %cst_40 = arith.constant dense<0.000000e+00> : vector<28x168xf32>
    %55 = tpu.matmul %52, %54, %cst_40 {dimension_numbers = #tpu.dot_dimension_numbers<[1], [0], [0], [1], [0, 0, 1, 1], [], []>} : vector<28x32xf32>, vector<32x168xf32>, vector<28x168xf32> -> vector<28x168xf32>
    %56 = arith.addf %51, %55 : vector<28x168xf32>
    %57 = vector.extract_strided_slice %5 {offsets = [64, 0], sizes = [28, 32], strides = [1, 1]} : vector<96x32xf32> to vector<28x32xf32>
    %c10 = arith.constant 10 : index
    %c0_41 = arith.constant 0 : index
    %c0_42 = arith.constant 0 : index
    %58 = vector.load %arg2[%c10, %c0_41, %c0_42] : memref<15x32x168xf32, #tpu.memory_space<vmem>>, vector<1x32x168xf32>
    %59 = vector.shape_cast %58 : vector<1x32x168xf32> to vector<32x168xf32>
    %cst_43 = arith.constant dense<0.000000e+00> : vector<28x168xf32>
    %60 = tpu.matmul %57, %59, %cst_43 {dimension_numbers = #tpu.dot_dimension_numbers<[1], [0], [0], [1], [0, 0, 1, 1], [], []>} : vector<28x32xf32>, vector<32x168xf32>, vector<28x168xf32> -> vector<28x168xf32>
    %61 = arith.addf %56, %60 : vector<28x168xf32>
    %62 = vector.extract_strided_slice %5 {offsets = [65, 0], sizes = [28, 32], strides = [1, 1]} : vector<96x32xf32> to vector<28x32xf32>
    %c11 = arith.constant 11 : index
    %c0_44 = arith.constant 0 : index
    %c0_45 = arith.constant 0 : index
    %63 = vector.load %arg2[%c11, %c0_44, %c0_45] : memref<15x32x168xf32, #tpu.memory_space<vmem>>, vector<1x32x168xf32>
    %64 = vector.shape_cast %63 : vector<1x32x168xf32> to vector<32x168xf32>
    %cst_46 = arith.constant dense<0.000000e+00> : vector<28x168xf32>
    %65 = tpu.matmul %62, %64, %cst_46 {dimension_numbers = #tpu.dot_dimension_numbers<[1], [0], [0], [1], [0, 0, 1, 1], [], []>} : vector<28x32xf32>, vector<32x168xf32>, vector<28x168xf32> -> vector<28x168xf32>
    %66 = arith.addf %61, %65 : vector<28x168xf32>
    %67 = vector.extract_strided_slice %5 {offsets = [66, 0], sizes = [28, 32], strides = [1, 1]} : vector<96x32xf32> to vector<28x32xf32>
    %c12 = arith.constant 12 : index
    %c0_47 = arith.constant 0 : index
    %c0_48 = arith.constant 0 : index
    %68 = vector.load %arg2[%c12, %c0_47, %c0_48] : memref<15x32x168xf32, #tpu.memory_space<vmem>>, vector<1x32x168xf32>
    %69 = vector.shape_cast %68 : vector<1x32x168xf32> to vector<32x168xf32>
    %cst_49 = arith.constant dense<0.000000e+00> : vector<28x168xf32>
    %70 = tpu.matmul %67, %69, %cst_49 {dimension_numbers = #tpu.dot_dimension_numbers<[1], [0], [0], [1], [0, 0, 1, 1], [], []>} : vector<28x32xf32>, vector<32x168xf32>, vector<28x168xf32> -> vector<28x168xf32>
    %71 = arith.addf %66, %70 : vector<28x168xf32>
    %72 = vector.extract_strided_slice %5 {offsets = [67, 0], sizes = [28, 32], strides = [1, 1]} : vector<96x32xf32> to vector<28x32xf32>
    %c13 = arith.constant 13 : index
    %c0_50 = arith.constant 0 : index
    %c0_51 = arith.constant 0 : index
    %73 = vector.load %arg2[%c13, %c0_50, %c0_51] : memref<15x32x168xf32, #tpu.memory_space<vmem>>, vector<1x32x168xf32>
    %74 = vector.shape_cast %73 : vector<1x32x168xf32> to vector<32x168xf32>
    %cst_52 = arith.constant dense<0.000000e+00> : vector<28x168xf32>
    %75 = tpu.matmul %72, %74, %cst_52 {dimension_numbers = #tpu.dot_dimension_numbers<[1], [0], [0], [1], [0, 0, 1, 1], [], []>} : vector<28x32xf32>, vector<32x168xf32>, vector<28x168xf32> -> vector<28x168xf32>
    %76 = arith.addf %71, %75 : vector<28x168xf32>
    %77 = vector.extract_strided_slice %5 {offsets = [68, 0], sizes = [28, 32], strides = [1, 1]} : vector<96x32xf32> to vector<28x32xf32>
    %c14 = arith.constant 14 : index
    %c0_53 = arith.constant 0 : index
    %c0_54 = arith.constant 0 : index
    %78 = vector.load %arg2[%c14, %c0_53, %c0_54] : memref<15x32x168xf32, #tpu.memory_space<vmem>>, vector<1x32x168xf32>
    %79 = vector.shape_cast %78 : vector<1x32x168xf32> to vector<32x168xf32>
    %cst_55 = arith.constant dense<0.000000e+00> : vector<28x168xf32>
    %80 = tpu.matmul %77, %79, %cst_55 {dimension_numbers = #tpu.dot_dimension_numbers<[1], [0], [0], [1], [0, 0, 1, 1], [], []>} : vector<28x32xf32>, vector<32x168xf32>, vector<28x168xf32> -> vector<28x168xf32>
    %81 = arith.addf %76, %80 : vector<28x168xf32>
    %82 = vector.broadcast %0 : vector<1x168xf32> to vector<28x168xf32>
    %83 = arith.addf %81, %82 : vector<28x168xf32>
    %cst_56 = arith.constant 0.000000e+00 : f32
    %84 = vector.broadcast %cst_56 : f32 to vector<28x168xf32>
    %85 = arith.maximumf %83, %84 : vector<28x168xf32>
    %86 = vector.extract_strided_slice %85 {offsets = [0, 0], sizes = [28, 167], strides = [1, 1]} : vector<28x168xf32> to vector<28x167xf32>
    %87 = vector.extract_strided_slice %85 {offsets = [0, 1], sizes = [28, 167], strides = [1, 1]} : vector<28x168xf32> to vector<28x167xf32>
    %88 = arith.maximumf %86, %87 : vector<28x167xf32>
    %89 = vector.extract_strided_slice %88 {offsets = [0, 0], sizes = [27, 167], strides = [1, 1]} : vector<28x167xf32> to vector<27x167xf32>
    %90 = vector.extract_strided_slice %88 {offsets = [1, 0], sizes = [27, 167], strides = [1, 1]} : vector<28x167xf32> to vector<27x167xf32>
    %91 = arith.maximumf %89, %90 : vector<27x167xf32>
    %cst_57 = arith.constant dense<0.000000e+00> : vector<14x167xf32>
    %92 = tpu.matmul %1, %91, %cst_57 {dimension_numbers = #tpu.dot_dimension_numbers<[1], [0], [0], [1], [0, 0, 1, 1], [], []>} : vector<14x27xf32>, vector<27x167xf32>, vector<14x167xf32> -> vector<14x167xf32>
    %cst_58 = arith.constant 0.000000e+00 : f32
    %93 = vector.broadcast %cst_58 : f32 to vector<10x160xf32>
    %94 = vector.extract_strided_slice %92 {offsets = [0, 0], sizes = [10, 167], strides = [1, 1]} : vector<14x167xf32> to vector<10x167xf32>
    %c0_59 = arith.constant 0 : index
    %c0_60 = arith.constant 0 : index
    %c0_61 = arith.constant 0 : index
    %95 = vector.load %arg5[%c0_59, %c0_60, %c0_61] : memref<5x167x160xf32, #tpu.memory_space<vmem>>, vector<1x167x160xf32>
    %96 = vector.shape_cast %95 : vector<1x167x160xf32> to vector<167x160xf32>
    %cst_62 = arith.constant dense<0.000000e+00> : vector<10x160xf32>
    %97 = tpu.matmul %94, %96, %cst_62 {dimension_numbers = #tpu.dot_dimension_numbers<[1], [0], [0], [1], [0, 0, 1, 1], [], []>} : vector<10x167xf32>, vector<167x160xf32>, vector<10x160xf32> -> vector<10x160xf32>
    %98 = arith.addf %93, %97 : vector<10x160xf32>
    %99 = vector.extract_strided_slice %92 {offsets = [1, 0], sizes = [10, 167], strides = [1, 1]} : vector<14x167xf32> to vector<10x167xf32>
    %c1_63 = arith.constant 1 : index
    %c0_64 = arith.constant 0 : index
    %c0_65 = arith.constant 0 : index
    %100 = vector.load %arg5[%c1_63, %c0_64, %c0_65] : memref<5x167x160xf32, #tpu.memory_space<vmem>>, vector<1x167x160xf32>
    %101 = vector.shape_cast %100 : vector<1x167x160xf32> to vector<167x160xf32>
    %cst_66 = arith.constant dense<0.000000e+00> : vector<10x160xf32>
    %102 = tpu.matmul %99, %101, %cst_66 {dimension_numbers = #tpu.dot_dimension_numbers<[1], [0], [0], [1], [0, 0, 1, 1], [], []>} : vector<10x167xf32>, vector<167x160xf32>, vector<10x160xf32> -> vector<10x160xf32>
    %103 = arith.addf %98, %102 : vector<10x160xf32>
    %104 = vector.extract_strided_slice %92 {offsets = [2, 0], sizes = [10, 167], strides = [1, 1]} : vector<14x167xf32> to vector<10x167xf32>
    %c2_67 = arith.constant 2 : index
    %c0_68 = arith.constant 0 : index
    %c0_69 = arith.constant 0 : index
    %105 = vector.load %arg5[%c2_67, %c0_68, %c0_69] : memref<5x167x160xf32, #tpu.memory_space<vmem>>, vector<1x167x160xf32>
    %106 = vector.shape_cast %105 : vector<1x167x160xf32> to vector<167x160xf32>
    %cst_70 = arith.constant dense<0.000000e+00> : vector<10x160xf32>
    %107 = tpu.matmul %104, %106, %cst_70 {dimension_numbers = #tpu.dot_dimension_numbers<[1], [0], [0], [1], [0, 0, 1, 1], [], []>} : vector<10x167xf32>, vector<167x160xf32>, vector<10x160xf32> -> vector<10x160xf32>
    %108 = arith.addf %103, %107 : vector<10x160xf32>
    %109 = vector.extract_strided_slice %92 {offsets = [3, 0], sizes = [10, 167], strides = [1, 1]} : vector<14x167xf32> to vector<10x167xf32>
    %c3_71 = arith.constant 3 : index
    %c0_72 = arith.constant 0 : index
    %c0_73 = arith.constant 0 : index
    %110 = vector.load %arg5[%c3_71, %c0_72, %c0_73] : memref<5x167x160xf32, #tpu.memory_space<vmem>>, vector<1x167x160xf32>
    %111 = vector.shape_cast %110 : vector<1x167x160xf32> to vector<167x160xf32>
    %cst_74 = arith.constant dense<0.000000e+00> : vector<10x160xf32>
    %112 = tpu.matmul %109, %111, %cst_74 {dimension_numbers = #tpu.dot_dimension_numbers<[1], [0], [0], [1], [0, 0, 1, 1], [], []>} : vector<10x167xf32>, vector<167x160xf32>, vector<10x160xf32> -> vector<10x160xf32>
    %113 = arith.addf %108, %112 : vector<10x160xf32>
    %114 = vector.extract_strided_slice %92 {offsets = [4, 0], sizes = [10, 167], strides = [1, 1]} : vector<14x167xf32> to vector<10x167xf32>
    %c4_75 = arith.constant 4 : index
    %c0_76 = arith.constant 0 : index
    %c0_77 = arith.constant 0 : index
    %115 = vector.load %arg5[%c4_75, %c0_76, %c0_77] : memref<5x167x160xf32, #tpu.memory_space<vmem>>, vector<1x167x160xf32>
    %116 = vector.shape_cast %115 : vector<1x167x160xf32> to vector<167x160xf32>
    %cst_78 = arith.constant dense<0.000000e+00> : vector<10x160xf32>
    %117 = tpu.matmul %114, %116, %cst_78 {dimension_numbers = #tpu.dot_dimension_numbers<[1], [0], [0], [1], [0, 0, 1, 1], [], []>} : vector<10x167xf32>, vector<167x160xf32>, vector<10x160xf32> -> vector<10x160xf32>
    %118 = arith.addf %113, %117 : vector<10x160xf32>
    %119 = vector.broadcast %2 : vector<1x160xf32> to vector<10x160xf32>
    %120 = arith.addf %118, %119 : vector<10x160xf32>
    %cst_79 = arith.constant 0.000000e+00 : f32
    %121 = vector.broadcast %cst_79 : f32 to vector<10x160xf32>
    %122 = arith.maximumf %120, %121 : vector<10x160xf32>
    %123 = vector.extract_strided_slice %122 {offsets = [0, 0], sizes = [10, 159], strides = [1, 1]} : vector<10x160xf32> to vector<10x159xf32>
    %124 = vector.extract_strided_slice %122 {offsets = [0, 1], sizes = [10, 159], strides = [1, 1]} : vector<10x160xf32> to vector<10x159xf32>
    %125 = arith.maximumf %123, %124 : vector<10x159xf32>
    %126 = vector.extract_strided_slice %125 {offsets = [0, 0], sizes = [9, 159], strides = [1, 1]} : vector<10x159xf32> to vector<9x159xf32>
    %127 = vector.extract_strided_slice %125 {offsets = [1, 0], sizes = [9, 159], strides = [1, 1]} : vector<10x159xf32> to vector<9x159xf32>
    %128 = arith.maximumf %126, %127 : vector<9x159xf32>
    %cst_80 = arith.constant dense<0.000000e+00> : vector<5x159xf32>
    %129 = tpu.matmul %3, %128, %cst_80 {dimension_numbers = #tpu.dot_dimension_numbers<[1], [0], [0], [1], [0, 0, 1, 1], [], []>} : vector<5x9xf32>, vector<9x159xf32>, vector<5x159xf32> -> vector<5x159xf32>
    %cst_81 = arith.constant 0.000000e+00 : f32
    %130 = vector.broadcast %cst_81 : f32 to vector<1x128xf32>
    %131 = vector.extract_strided_slice %129 {offsets = [0, 0], sizes = [1, 159], strides = [1, 1]} : vector<5x159xf32> to vector<1x159xf32>
    %c0_82 = arith.constant 0 : index
    %c0_83 = arith.constant 0 : index
    %c0_84 = arith.constant 0 : index
    %132 = vector.load %arg8[%c0_82, %c0_83, %c0_84] : memref<5x159x128xf32, #tpu.memory_space<vmem>>, vector<1x159x128xf32>
    %133 = vector.shape_cast %132 : vector<1x159x128xf32> to vector<159x128xf32>
    %cst_85 = arith.constant dense<0.000000e+00> : vector<1x128xf32>
    %134 = tpu.matmul %131, %133, %cst_85 {dimension_numbers = #tpu.dot_dimension_numbers<[1], [0], [0], [1], [0, 0, 1, 1], [], []>} : vector<1x159xf32>, vector<159x128xf32>, vector<1x128xf32> -> vector<1x128xf32>
    %135 = arith.addf %130, %134 : vector<1x128xf32>
    %136 = vector.extract_strided_slice %129 {offsets = [1, 0], sizes = [1, 159], strides = [1, 1]} : vector<5x159xf32> to vector<1x159xf32>
    %c1_86 = arith.constant 1 : index
    %c0_87 = arith.constant 0 : index
    %c0_88 = arith.constant 0 : index
    %137 = vector.load %arg8[%c1_86, %c0_87, %c0_88] : memref<5x159x128xf32, #tpu.memory_space<vmem>>, vector<1x159x128xf32>
    %138 = vector.shape_cast %137 : vector<1x159x128xf32> to vector<159x128xf32>
    %cst_89 = arith.constant dense<0.000000e+00> : vector<1x128xf32>
    %139 = tpu.matmul %136, %138, %cst_89 {dimension_numbers = #tpu.dot_dimension_numbers<[1], [0], [0], [1], [0, 0, 1, 1], [], []>} : vector<1x159xf32>, vector<159x128xf32>, vector<1x128xf32> -> vector<1x128xf32>
    %140 = arith.addf %135, %139 : vector<1x128xf32>
    %141 = vector.extract_strided_slice %129 {offsets = [2, 0], sizes = [1, 159], strides = [1, 1]} : vector<5x159xf32> to vector<1x159xf32>
    %c2_90 = arith.constant 2 : index
    %c0_91 = arith.constant 0 : index
    %c0_92 = arith.constant 0 : index
    %142 = vector.load %arg8[%c2_90, %c0_91, %c0_92] : memref<5x159x128xf32, #tpu.memory_space<vmem>>, vector<1x159x128xf32>
    %143 = vector.shape_cast %142 : vector<1x159x128xf32> to vector<159x128xf32>
    %cst_93 = arith.constant dense<0.000000e+00> : vector<1x128xf32>
    %144 = tpu.matmul %141, %143, %cst_93 {dimension_numbers = #tpu.dot_dimension_numbers<[1], [0], [0], [1], [0, 0, 1, 1], [], []>} : vector<1x159xf32>, vector<159x128xf32>, vector<1x128xf32> -> vector<1x128xf32>
    %145 = arith.addf %140, %144 : vector<1x128xf32>
    %146 = vector.extract_strided_slice %129 {offsets = [3, 0], sizes = [1, 159], strides = [1, 1]} : vector<5x159xf32> to vector<1x159xf32>
    %c3_94 = arith.constant 3 : index
    %c0_95 = arith.constant 0 : index
    %c0_96 = arith.constant 0 : index
    %147 = vector.load %arg8[%c3_94, %c0_95, %c0_96] : memref<5x159x128xf32, #tpu.memory_space<vmem>>, vector<1x159x128xf32>
    %148 = vector.shape_cast %147 : vector<1x159x128xf32> to vector<159x128xf32>
    %cst_97 = arith.constant dense<0.000000e+00> : vector<1x128xf32>
    %149 = tpu.matmul %146, %148, %cst_97 {dimension_numbers = #tpu.dot_dimension_numbers<[1], [0], [0], [1], [0, 0, 1, 1], [], []>} : vector<1x159xf32>, vector<159x128xf32>, vector<1x128xf32> -> vector<1x128xf32>
    %150 = arith.addf %145, %149 : vector<1x128xf32>
    %151 = vector.extract_strided_slice %129 {offsets = [4, 0], sizes = [1, 159], strides = [1, 1]} : vector<5x159xf32> to vector<1x159xf32>
    %c4_98 = arith.constant 4 : index
    %c0_99 = arith.constant 0 : index
    %c0_100 = arith.constant 0 : index
    %152 = vector.load %arg8[%c4_98, %c0_99, %c0_100] : memref<5x159x128xf32, #tpu.memory_space<vmem>>, vector<1x159x128xf32>
    %153 = vector.shape_cast %152 : vector<1x159x128xf32> to vector<159x128xf32>
    %cst_101 = arith.constant dense<0.000000e+00> : vector<1x128xf32>
    %154 = tpu.matmul %151, %153, %cst_101 {dimension_numbers = #tpu.dot_dimension_numbers<[1], [0], [0], [1], [0, 0, 1, 1], [], []>} : vector<1x159xf32>, vector<159x128xf32>, vector<1x128xf32> -> vector<1x128xf32>
    %155 = arith.addf %150, %154 : vector<1x128xf32>
    %c0_102 = arith.constant 0 : index
    %c0_103 = arith.constant 0 : index
    %156 = vector.load %arg9[%c0_102, %c0_103] : memref<1x128xf32, #tpu.memory_space<vmem>>, vector<1x128xf32>
    %157 = arith.addf %155, %156 : vector<1x128xf32>
    %cst_104 = arith.constant 0.000000e+00 : f32
    %158 = vector.broadcast %cst_104 : f32 to vector<1x128xf32>
    %159 = arith.maximumf %157, %158 : vector<1x128xf32>
    %c0_105 = arith.constant 0 : index
    %c0_106 = arith.constant 0 : index
    %160 = vector.load %arg10[%c0_105, %c0_106] : memref<128x128xf32, #tpu.memory_space<vmem>>, vector<128x128xf32>
    %cst_107 = arith.constant dense<0.000000e+00> : vector<1x128xf32>
    %161 = tpu.matmul %159, %160, %cst_107 {dimension_numbers = #tpu.dot_dimension_numbers<[1], [0], [0], [1], [0, 0, 1, 1], [], []>} : vector<1x128xf32>, vector<128x128xf32>, vector<1x128xf32> -> vector<1x128xf32>
    %c0_108 = arith.constant 0 : index
    %c0_109 = arith.constant 0 : index
    %162 = vector.load %arg11[%c0_108, %c0_109] : memref<1x128xf32, #tpu.memory_space<vmem>>, vector<1x128xf32>
    %163 = arith.addf %161, %162 : vector<1x128xf32>
    %cst_110 = arith.constant 0.000000e+00 : f32
    %164 = vector.broadcast %cst_110 : f32 to vector<1x128xf32>
    %165 = arith.maximumf %163, %164 : vector<1x128xf32>
    %c0_111 = arith.constant 0 : index
    %c0_112 = arith.constant 0 : index
    %166 = vector.load %arg12[%c0_111, %c0_112] : memref<128x128xf32, #tpu.memory_space<vmem>>, vector<128x128xf32>
    %cst_113 = arith.constant dense<0.000000e+00> : vector<1x128xf32>
    %167 = tpu.matmul %165, %166, %cst_113 {dimension_numbers = #tpu.dot_dimension_numbers<[1], [0], [0], [1], [0, 0, 1, 1], [], []>} : vector<1x128xf32>, vector<128x128xf32>, vector<1x128xf32> -> vector<1x128xf32>
    %c0_114 = arith.constant 0 : index
    %c0_115 = arith.constant 0 : index
    %168 = vector.load %arg13[%c0_114, %c0_115] : memref<1x128xf32, #tpu.memory_space<vmem>>, vector<1x128xf32>
    %169 = arith.addf %167, %168 : vector<1x128xf32>
    %c0_116 = arith.constant 0 : index
    %c0_117 = arith.constant 0 : index
    %c0_118 = arith.constant 0 : index
    %170 = vector.load %arg14[%c0_116, %c0_117, %c0_118] : memref<1x1x128xf32, #tpu.memory_space<vmem>>, vector<1x1x128xf32>
    %171 = vector.shape_cast %170 : vector<1x1x128xf32> to vector<1x128xf32>
    %172 = vector.shape_cast %169 : vector<1x128xf32> to vector<1x1x128xf32>
    tpu.vector_store %arg14[%c0_116, %c0_117, %c0_118], %172 {strides = array<i32>} : memref<1x1x128xf32, #tpu.memory_space<vmem>>, vector<1x1x128xf32>,
    return
  }
  func.func @transform_0(%arg0: i32) -> (i32, i32, i32) {
    %c0_i32 = arith.constant 0 : i32
    %c0_i32_0 = arith.constant 0 : i32
    %c0_i32_1 = arith.constant 0 : i32
    return %arg0, %c0_i32, %c0_i32_0 : i32, i32, i32
  }
  func.func @transform_1(%arg0: i32) -> (i32, i32, i32) {
    %c0_i32 = arith.constant 0 : i32
    %c0_i32_0 = arith.constant 0 : i32
    %c0_i32_1 = arith.constant 0 : i32
    %c0_i32_2 = arith.constant 0 : i32
    return %c0_i32, %c0_i32_0, %c0_i32_1 : i32, i32, i32
  }
  func.func @transform_2(%arg0: i32) -> (i32, i32) {
    %c0_i32 = arith.constant 0 : i32
    %c0_i32_0 = arith.constant 0 : i32
    %c0_i32_1 = arith.constant 0 : i32
    return %c0_i32, %c0_i32_0 : i32, i32
  }
  func.func @transform_3(%arg0: i32) -> (i32, i32) {
    %c0_i32 = arith.constant 0 : i32
    %c0_i32_0 = arith.constant 0 : i32
    %c0_i32_1 = arith.constant 0 : i32
    return %c0_i32, %c0_i32_0 : i32, i32
  }
  func.func @transform_4(%arg0: i32) -> (i32, i32, i32) {
    %c0_i32 = arith.constant 0 : i32
    %c0_i32_0 = arith.constant 0 : i32
    %c0_i32_1 = arith.constant 0 : i32
    %c0_i32_2 = arith.constant 0 : i32
    return %c0_i32, %c0_i32_0, %c0_i32_1 : i32, i32, i32
  }
  func.func @transform_5(%arg0: i32) -> (i32, i32) {
    %c0_i32 = arith.constant 0 : i32
    %c0_i32_0 = arith.constant 0 : i32
    %c0_i32_1 = arith.constant 0 : i32
    return %c0_i32, %c0_i32_0 : i32, i32
  }
  func.func @transform_6(%arg0: i32) -> (i32, i32) {
    %c0_i32 = arith.constant 0 : i32
    %c0_i32_0 = arith.constant 0 : i32
    %c0_i32_1 = arith.constant 0 : i32
    return %c0_i32, %c0_i32_0 : i32, i32
  }
  func.func @transform_7(%arg0: i32) -> (i32, i32, i32) {
    %c0_i32 = arith.constant 0 : i32
    %c0_i32_0 = arith.constant 0 : i32
    %c0_i32_1 = arith.constant 0 : i32
    %c0_i32_2 = arith.constant 0 : i32
    return %c0_i32, %c0_i32_0, %c0_i32_1 : i32, i32, i32
  }
  func.func @transform_8(%arg0: i32) -> (i32, i32) {
    %c0_i32 = arith.constant 0 : i32
    %c0_i32_0 = arith.constant 0 : i32
    %c0_i32_1 = arith.constant 0 : i32
    return %c0_i32, %c0_i32_0 : i32, i32
  }
  func.func @transform_9(%arg0: i32) -> (i32, i32) {
    %c0_i32 = arith.constant 0 : i32
    %c0_i32_0 = arith.constant 0 : i32
    %c0_i32_1 = arith.constant 0 : i32
    return %c0_i32, %c0_i32_0 : i32, i32
  }
  func.func @transform_10(%arg0: i32) -> (i32, i32) {
    %c0_i32 = arith.constant 0 : i32
    %c0_i32_0 = arith.constant 0 : i32
    %c0_i32_1 = arith.constant 0 : i32
    return %c0_i32, %c0_i32_0 : i32, i32
  }
  func.func @transform_11(%arg0: i32) -> (i32, i32) {
    %c0_i32 = arith.constant 0 : i32
    %c0_i32_0 = arith.constant 0 : i32
    %c0_i32_1 = arith.constant 0 : i32
    return %c0_i32, %c0_i32_0 : i32, i32
  }
  func.func @transform_12(%arg0: i32) -> (i32, i32) {
    %c0_i32 = arith.constant 0 : i32
    %c0_i32_0 = arith.constant 0 : i32
    %c0_i32_1 = arith.constant 0 : i32
    return %c0_i32, %c0_i32_0 : i32, i32
  }
  func.func @transform_13(%arg0: i32) -> (i32, i32, i32) {
    %c0_i32 = arith.constant 0 : i32
    %c0_i32_0 = arith.constant 0 : i32
    %c0_i32_1 = arith.constant 0 : i32
    return %arg0, %c0_i32, %c0_i32_0 : i32, i32, i32
  }
}

</mosaic_0001>

<llo_original>
// kernel: tpu_custom_call.1
$region0: #{tpu_custom_call.1}
  #allocation0 [shape = 'u32[]', space=smem, size = 0x4, offset = 0x4, fixed_abs, tag = 'smem constant byte address 0x4 - core index']
  #allocation1 [shape = 'u32[72,128]{1,0:T(1,128)}', space=vmem, size = 0x9000, scoped, tag = 'internal scratch']
  %s0 = inlined_call_operand.vmem [shape: f32[2,96,32], index: 0, kind: input, shape index: {}]
  %s1 = inlined_call_operand.vmem [shape: f32[15,32,168], index: 1, kind: input, shape index: {}]
  %s2 = inlined_call_operand.vmem [shape: f32[1,168], index: 2, kind: input, shape index: {}]
  %s3 = inlined_call_operand.vmem [shape: f32[14,27], index: 3, kind: input, shape index: {}]
  %s4 = inlined_call_operand.vmem [shape: f32[5,167,160], index: 4, kind: input, shape index: {}]
  %s5 = inlined_call_operand.vmem [shape: f32[1,160], index: 5, kind: input, shape index: {}]
  %s6 = inlined_call_operand.vmem [shape: f32[5,9], index: 6, kind: input, shape index: {}]
  %s7 = inlined_call_operand.vmem [shape: f32[5,159,128], index: 7, kind: input, shape index: {}]
  %s8 = inlined_call_operand.vmem [shape: f32[1,128], index: 8, kind: input, shape index: {}]
  %s9 = inlined_call_operand.vmem [shape: f32[128,128], index: 9, kind: input, shape index: {}]
  %s10 = inlined_call_operand.vmem [shape: f32[1,128], index: 10, kind: input, shape index: {}]
  %s11 = inlined_call_operand.vmem [shape: f32[128,128], index: 11, kind: input, shape index: {}]
  %s12 = inlined_call_operand.vmem [shape: f32[1,128], index: 12, kind: input, shape index: {}]
  %s13 = inlined_call_operand.hbm [shape: f32[2,1,128], index: 13, kind: output, shape index: {}]
  %s14 = sld [smem:[#allocation0]]
  $region85: #{tpu_custom_call.1} parent=0
    _
  %s16 = ssub.s32 1, %s14
  %s17 = scalar_select 0, %s16, %s14
  $region1: #{tpu_custom_call.1} parent=0
    #allocation2 [shape = 'u8[1024]{0}', space=vmem, size = 0x400, scoped, tag = 'output window, operand 0']
    #allocation3 [shape = 's32[2]{0}', space=sflag, size = 0x8, scoped, tag = 'scoped memory for tpu_custom_call.1']
    %18 = vsyncpa [#allocation3], 0
    %s19 = scalar_lea.sflag [#allocation3], 1
    %20 = vsyncpa %s19, 0
    loop: start=0, step=1, limit=4
    $region2: #{tpu_custom_call.1} parent=1 // loop_pre_header
      _
    $region3: #{tpu_custom_call.1} parent=1 // loop_header
      %s22 = sphi 0, %s26
      %p23 = scmp.ge.s32.totalorder %s22, 4
      %s32 = sphi 0, %s34
      %s35 = sphi 0, %s32
      %s36 = sphi 0, %s35
      %s52 = sphi 0, %s36
      %s56 = sphi 0, %s56
      %s58 = sphi 0, %s56
      %s59 = sphi 0, %s58
      %s73 = sphi 0, %s59
      %s77 = sphi 0, %s77
      %s79 = sphi 0, %s77
      %s80 = sphi 0, %s79
      %s94 = sphi 0, %s80
      %s98 = sphi 0, %s98
      %s100 = sphi 0, %s98
      %s101 = sphi 0, %s100
      %s115 = sphi 0, %s101
      %s119 = sphi 0, %s119
      %s121 = sphi 0, %s119
      %s122 = sphi 0, %s121
      %s136 = sphi 0, %s122
      %s140 = sphi 0, %s140
      %s142 = sphi 0, %s140
      %s143 = sphi 0, %s142
      %s157 = sphi 0, %s143
      %s161 = sphi 0, %s161
      %s163 = sphi 0, %s161
      %s164 = sphi 0, %s163
      %s178 = sphi 0, %s164
      %s182 = sphi 0, %s182
      %s184 = sphi 0, %s182
      %s185 = sphi 0, %s184
      %s199 = sphi 0, %s185
      %s203 = sphi 0, %s203
      %s205 = sphi 0, %s203
      %s206 = sphi 0, %s205
      %s220 = sphi 0, %s206
      %s224 = sphi 0, %s224
      %s226 = sphi 0, %s224
      %s227 = sphi 0, %s226
      %s241 = sphi 0, %s227
      %s245 = sphi 0, %s245
      %s247 = sphi 0, %s245
      %s248 = sphi 0, %s247
      %s262 = sphi 0, %s248
      %s266 = sphi 0, %s266
      %s268 = sphi 0, %s266
      %s269 = sphi 0, %s268
      %s283 = sphi 0, %s269
      %s287 = sphi 0, %s287
      %s289 = sphi 0, %s287
      %s290 = sphi 0, %s289
      %s304 = sphi 0, %s290
      %s310 = sphi 0, %s312
      %s313 = sphi 0, %s310
      %s314 = sphi 0, %s313
      %s330 = sphi 0, %s314
    $region4: #{tpu_custom_call.1} parent=1 // loop_header_branch
      %25 = sbr.rel (%p23) target = $region8
    $region5: #{tpu_custom_call.1} parent=1 // loop_body
      %s27 = ssub.s32 %s22, 1
      %s28 = ssub.s32 %s22, 2
      %s29 = sadd.s32 %s22, 1
      %s30 = ssub.s32 %s22, %s29
      %p31 = scmp.eq.s32.totalorder %s30, 0
      %s33 = sadd.s32 %s32, 1
      %s34 = scalar_select %p31, %s32, %s33
      %p37 = pneg %p31
      %p38 = scmp.eq.s32.totalorder %s22, 1
      %p39 = por %p37, %p38
      %p40 = scmp.ne.s32.totalorder %s32, %s35
      %p41 = scmp.eq.s32.totalorder %s22, 0
      %p42 = por %p40, %p41
      %p43 = scmp.ne.s32.totalorder %s32, %s35
      %p44 = scmp.eq.s32.totalorder %s27, 1
      %p45 = por %p43, %p44
      %p46 = scmp.ne.s32.totalorder %s35, %s36
      %p47 = scmp.eq.s32.totalorder %s27, 0
      %p48 = por %p46, %p47
      %p49 = scmp.ne.s32.totalorder %s35, %s36
      %p50 = scmp.eq.s32.totalorder %s28, 1
      %p51 = por %p49, %p50
      %p53 = scmp.ne.s32.totalorder %s36, %s52
      %p54 = scmp.eq.s32.totalorder %s28, 0
      %p55 = por %p53, %p54
      %s57 = sadd.s32 %s56, 1
      %p60 = scmp.eq.s32.totalorder %s22, 1
      %p61 = scmp.ne.s32.totalorder %s56, %s58
      %p62 = scmp.eq.s32.totalorder %s22, 0
      %p63 = por %p61, %p62
      %p64 = scmp.ne.s32.totalorder %s56, %s58
      %p65 = scmp.eq.s32.totalorder %s27, 1
      %p66 = por %p64, %p65
      %p67 = scmp.ne.s32.totalorder %s58, %s59
      %p68 = scmp.eq.s32.totalorder %s27, 0
      %p69 = por %p67, %p68
      %p70 = scmp.ne.s32.totalorder %s58, %s59
      %p71 = scmp.eq.s32.totalorder %s28, 1
      %p72 = por %p70, %p71
      %p74 = scmp.ne.s32.totalorder %s59, %s73
      %p75 = scmp.eq.s32.totalorder %s28, 0
      %p76 = por %p74, %p75
      %s78 = sadd.s32 %s77, 1
      %p81 = scmp.eq.s32.totalorder %s22, 1
      %p82 = scmp.ne.s32.totalorder %s77, %s79
      %p83 = scmp.eq.s32.totalorder %s22, 0
      %p84 = por %p82, %p83
      %p85 = scmp.ne.s32.totalorder %s77, %s79
      %p86 = scmp.eq.s32.totalorder %s27, 1
      %p87 = por %p85, %p86
      %p88 = scmp.ne.s32.totalorder %s79, %s80
      %p89 = scmp.eq.s32.totalorder %s27, 0
      %p90 = por %p88, %p89
      %p91 = scmp.ne.s32.totalorder %s79, %s80
      %p92 = scmp.eq.s32.totalorder %s28, 1
      %p93 = por %p91, %p92
      %p95 = scmp.ne.s32.totalorder %s80, %s94
      %p96 = scmp.eq.s32.totalorder %s28, 0
      %p97 = por %p95, %p96
      %s99 = sadd.s32 %s98, 1
      %p102 = scmp.eq.s32.totalorder %s22, 1
      %p103 = scmp.ne.s32.totalorder %s98, %s100
      %p104 = scmp.eq.s32.totalorder %s22, 0
      %p105 = por %p103, %p104
      %p106 = scmp.ne.s32.totalorder %s98, %s100
      %p107 = scmp.eq.s32.totalorder %s27, 1
      %p108 = por %p106, %p107
      %p109 = scmp.ne.s32.totalorder %s100, %s101
      %p110 = scmp.eq.s32.totalorder %s27, 0
      %p111 = por %p109, %p110
      %p112 = scmp.ne.s32.totalorder %s100, %s101
      %p113 = scmp.eq.s32.totalorder %s28, 1
      %p114 = por %p112, %p113
      %p116 = scmp.ne.s32.totalorder %s101, %s115
      %p117 = scmp.eq.s32.totalorder %s28, 0
      %p118 = por %p116, %p117
      %s120 = sadd.s32 %s119, 1
      %p123 = scmp.eq.s32.totalorder %s22, 1
      %p124 = scmp.ne.s32.totalorder %s119, %s121
      %p125 = scmp.eq.s32.totalorder %s22, 0
      %p126 = por %p124, %p125
      %p127 = scmp.ne.s32.totalorder %s119, %s121
      %p128 = scmp.eq.s32.totalorder %s27, 1
      %p129 = por %p127, %p128
      %p130 = scmp.ne.s32.totalorder %s121, %s122
      %p131 = scmp.eq.s32.totalorder %s27, 0
      %p132 = por %p130, %p131
      %p133 = scmp.ne.s32.totalorder %s121, %s122
      %p134 = scmp.eq.s32.totalorder %s28, 1
      %p135 = por %p133, %p134
      %p137 = scmp.ne.s32.totalorder %s122, %s136
      %p138 = scmp.eq.s32.totalorder %s28, 0
      %p139 = por %p137, %p138
      %s141 = sadd.s32 %s140, 1
      %p144 = scmp.eq.s32.totalorder %s22, 1
      %p145 = scmp.ne.s32.totalorder %s140, %s142
      %p146 = scmp.eq.s32.totalorder %s22, 0
      %p147 = por %p145, %p146
      %p148 = scmp.ne.s32.totalorder %s140, %s142
      %p149 = scmp.eq.s32.totalorder %s27, 1
      %p150 = por %p148, %p149
      %p151 = scmp.ne.s32.totalorder %s142, %s143
      %p152 = scmp.eq.s32.totalorder %s27, 0
      %p153 = por %p151, %p152
      %p154 = scmp.ne.s32.totalorder %s142, %s143
      %p155 = scmp.eq.s32.totalorder %s28, 1
      %p156 = por %p154, %p155
      %p158 = scmp.ne.s32.totalorder %s143, %s157
      %p159 = scmp.eq.s32.totalorder %s28, 0
      %p160 = por %p158, %p159
      %s162 = sadd.s32 %s161, 1
      %p165 = scmp.eq.s32.totalorder %s22, 1
      %p166 = scmp.ne.s32.totalorder %s161, %s163
      %p167 = scmp.eq.s32.totalorder %s22, 0
      %p168 = por %p166, %p167
      %p169 = scmp.ne.s32.totalorder %s161, %s163
      %p170 = scmp.eq.s32.totalorder %s27, 1
      %p171 = por %p169, %p170
      %p172 = scmp.ne.s32.totalorder %s163, %s164
      %p173 = scmp.eq.s32.totalorder %s27, 0
      %p174 = por %p172, %p173
      %p175 = scmp.ne.s32.totalorder %s163, %s164
      %p176 = scmp.eq.s32.totalorder %s28, 1
      %p177 = por %p175, %p176
      %p179 = scmp.ne.s32.totalorder %s164, %s178
      %p180 = scmp.eq.s32.totalorder %s28, 0
      %p181 = por %p179, %p180
      %s183 = sadd.s32 %s182, 1
      %p186 = scmp.eq.s32.totalorder %s22, 1
      %p187 = scmp.ne.s32.totalorder %s182, %s184
      %p188 = scmp.eq.s32.totalorder %s22, 0
      %p189 = por %p187, %p188
      %p190 = scmp.ne.s32.totalorder %s182, %s184
      %p191 = scmp.eq.s32.totalorder %s27, 1
      %p192 = por %p190, %p191
      %p193 = scmp.ne.s32.totalorder %s184, %s185
      %p194 = scmp.eq.s32.totalorder %s27, 0
      %p195 = por %p193, %p194
      %p196 = scmp.ne.s32.totalorder %s184, %s185
      %p197 = scmp.eq.s32.totalorder %s28, 1
      %p198 = por %p196, %p197
      %p200 = scmp.ne.s32.totalorder %s185, %s199
      %p201 = scmp.eq.s32.totalorder %s28, 0
      %p202 = por %p200, %p201
      %s204 = sadd.s32 %s203, 1
      %p207 = scmp.eq.s32.totalorder %s22, 1
      %p208 = scmp.ne.s32.totalorder %s203, %s205
      %p209 = scmp.eq.s32.totalorder %s22, 0
      %p210 = por %p208, %p209
      %p211 = scmp.ne.s32.totalorder %s203, %s205
      %p212 = scmp.eq.s32.totalorder %s27, 1
      %p213 = por %p211, %p212
      %p214 = scmp.ne.s32.totalorder %s205, %s206
      %p215 = scmp.eq.s32.totalorder %s27, 0
      %p216 = por %p214, %p215
      %p217 = scmp.ne.s32.totalorder %s205, %s206
      %p218 = scmp.eq.s32.totalorder %s28, 1
      %p219 = por %p217, %p218
      %p221 = scmp.ne.s32.totalorder %s206, %s220
      %p222 = scmp.eq.s32.totalorder %s28, 0
      %p223 = por %p221, %p222
      %s225 = sadd.s32 %s224, 1
      %p228 = scmp.eq.s32.totalorder %s22, 1
      %p229 = scmp.ne.s32.totalorder %s224, %s226
      %p230 = scmp.eq.s32.totalorder %s22, 0
      %p231 = por %p229, %p230
      %p232 = scmp.ne.s32.totalorder %s224, %s226
      %p233 = scmp.eq.s32.totalorder %s27, 1
      %p234 = por %p232, %p233
      %p235 = scmp.ne.s32.totalorder %s226, %s227
      %p236 = scmp.eq.s32.totalorder %s27, 0
      %p237 = por %p235, %p236
      %p238 = scmp.ne.s32.totalorder %s226, %s227
      %p239 = scmp.eq.s32.totalorder %s28, 1
      %p240 = por %p238, %p239
      %p242 = scmp.ne.s32.totalorder %s227, %s241
      %p243 = scmp.eq.s32.totalorder %s28, 0
      %p244 = por %p242, %p243
      %s246 = sadd.s32 %s245, 1
      %p249 = scmp.eq.s32.totalorder %s22, 1
      %p250 = scmp.ne.s32.totalorder %s245, %s247
      %p251 = scmp.eq.s32.totalorder %s22, 0
      %p252 = por %p250, %p251
      %p253 = scmp.ne.s32.totalorder %s245, %s247
      %p254 = scmp.eq.s32.totalorder %s27, 1
      %p255 = por %p253, %p254
      %p256 = scmp.ne.s32.totalorder %s247, %s248
      %p257 = scmp.eq.s32.totalorder %s27, 0
      %p258 = por %p256, %p257
      %p259 = scmp.ne.s32.totalorder %s247, %s248
      %p260 = scmp.eq.s32.totalorder %s28, 1
      %p261 = por %p259, %p260
      %p263 = scmp.ne.s32.totalorder %s248, %s262
      %p264 = scmp.eq.s32.totalorder %s28, 0
      %p265 = por %p263, %p264
      %s267 = sadd.s32 %s266, 1
      %p270 = scmp.eq.s32.totalorder %s22, 1
      %p271 = scmp.ne.s32.totalorder %s266, %s268
      %p272 = scmp.eq.s32.totalorder %s22, 0
      %p273 = por %p271, %p272
      %p274 = scmp.ne.s32.totalorder %s266, %s268
      %p275 = scmp.eq.s32.totalorder %s27, 1
      %p276 = por %p274, %p275
      %p277 = scmp.ne.s32.totalorder %s268, %s269
      %p278 = scmp.eq.s32.totalorder %s27, 0
      %p279 = por %p277, %p278
      %p280 = scmp.ne.s32.totalorder %s268, %s269
      %p281 = scmp.eq.s32.totalorder %s28, 1
      %p282 = por %p280, %p281
      %p284 = scmp.ne.s32.totalorder %s269, %s283
      %p285 = scmp.eq.s32.totalorder %s28, 0
      %p286 = por %p284, %p285
      %s288 = sadd.s32 %s287, 1
      %p291 = scmp.eq.s32.totalorder %s22, 1
      %p292 = scmp.ne.s32.totalorder %s287, %s289
      %p293 = scmp.eq.s32.totalorder %s22, 0
      %p294 = por %p292, %p293
      %p295 = scmp.ne.s32.totalorder %s287, %s289
      %p296 = scmp.eq.s32.totalorder %s27, 1
      %p297 = por %p295, %p296
      %p298 = scmp.ne.s32.totalorder %s289, %s290
      %p299 = scmp.eq.s32.totalorder %s27, 0
      %p300 = por %p298, %p299
      %p301 = scmp.ne.s32.totalorder %s289, %s290
      %p302 = scmp.eq.s32.totalorder %s28, 1
      %p303 = por %p301, %p302
      %p305 = scmp.ne.s32.totalorder %s290, %s304
      %p306 = scmp.eq.s32.totalorder %s28, 0
      %p307 = por %p305, %p306
      %s308 = ssub.s32 %s22, %s29
      %p309 = scmp.eq.s32.totalorder %s308, 0
      %s311 = sadd.s32 %s310, 1
      %s312 = scalar_select %p309, %s310, %s311
      %p315 = pneg %p309
      %p316 = scmp.eq.s32.totalorder %s22, 1
      %p317 = por %p315, %p316
      %p318 = scmp.ne.s32.totalorder %s310, %s313
      %p319 = scmp.eq.s32.totalorder %s22, 0
      %p320 = por %p318, %p319
      %p321 = scmp.ne.s32.totalorder %s310, %s313
      %p322 = scmp.eq.s32.totalorder %s27, 1
      %p323 = por %p321, %p322
      %p324 = scmp.ne.s32.totalorder %s313, %s314
      %p325 = scmp.eq.s32.totalorder %s27, 0
      %p326 = por %p324, %p325
      %p327 = scmp.ne.s32.totalorder %s313, %s314
      %p328 = scmp.eq.s32.totalorder %s28, 1
      %p329 = por %p327, %p328
      %p331 = scmp.ne.s32.totalorder %s314, %s330
      %p332 = scmp.eq.s32.totalorder %s28, 0
      %p333 = por %p331, %p332
      %p334 = scmp.le.s32.totalorder 1, %s22
      %p335 = scmp.lt.s32.totalorder %s22, 3
      %p336 = pnand %p334, %p335
      %p337 = pneg %p336
      // Predicated region
      $region9: #{tpu_custom_call.1} parent=5 // pred_check
        _
      $region10: #{tpu_custom_call.1} parent=5 // pred_check_branch
        %339 = sbr.rel (%p336) target = $region12
      $region11: #{tpu_custom_call.1} parent=5 // pred_region
        %s340 = ssub.s32 %s22, 1
        // Predicated region
        $region13: #{tpu_custom_call.1} parent=11 // pred_check
          %p341 = pneg %p69
        $region14: #{tpu_custom_call.1} parent=11 // pred_check_branch
          %343 = sbr.rel (%p341) target = $region16
        $region15: #{tpu_custom_call.1} parent=11 // pred_region
          _
        $region16: #{tpu_custom_call.1} parent=11 // pred_fallthru
          _
        // Predicated region
        $region17: #{tpu_custom_call.1} parent=11 // pred_check
          %p344 = pneg %p90
        $region18: #{tpu_custom_call.1} parent=11 // pred_check_branch
          %346 = sbr.rel (%p344) target = $region20
        $region19: #{tpu_custom_call.1} parent=11 // pred_region
          _
        $region20: #{tpu_custom_call.1} parent=11 // pred_fallthru
          _
        // Predicated region
        $region21: #{tpu_custom_call.1} parent=11 // pred_check
          %p347 = pneg %p111
        $region22: #{tpu_custom_call.1} parent=11 // pred_check_branch
          %349 = sbr.rel (%p347) target = $region24
        $region23: #{tpu_custom_call.1} parent=11 // pred_region
          _
        $region24: #{tpu_custom_call.1} parent=11 // pred_fallthru
          _
        // Predicated region
        $region25: #{tpu_custom_call.1} parent=11 // pred_check
          %p350 = pneg %p132
        $region26: #{tpu_custom_call.1} parent=11 // pred_check_branch
          %352 = sbr.rel (%p350) target = $region28
        $region27: #{tpu_custom_call.1} parent=11 // pred_region
          _
        $region28: #{tpu_custom_call.1} parent=11 // pred_fallthru
          _
        // Predicated region
        $region29: #{tpu_custom_call.1} parent=11 // pred_check
          %p353 = pneg %p153
        $region30: #{tpu_custom_call.1} parent=11 // pred_check_branch
          %355 = sbr.rel (%p353) target = $region32
        $region31: #{tpu_custom_call.1} parent=11 // pred_region
          _
        $region32: #{tpu_custom_call.1} parent=11 // pred_fallthru
          _
        // Predicated region
        $region33: #{tpu_custom_call.1} parent=11 // pred_check
          %p356 = pneg %p174
        $region34: #{tpu_custom_call.1} parent=11 // pred_check_branch
          %358 = sbr.rel (%p356) target = $region36
        $region35: #{tpu_custom_call.1} parent=11 // pred_region
          _
        $region36: #{tpu_custom_call.1} parent=11 // pred_fallthru
          _
        // Predicated region
        $region37: #{tpu_custom_call.1} parent=11 // pred_check
          %p359 = pneg %p195
        $region38: #{tpu_custom_call.1} parent=11 // pred_check_branch
          %361 = sbr.rel (%p359) target = $region40
        $region39: #{tpu_custom_call.1} parent=11 // pred_region
          _
        $region40: #{tpu_custom_call.1} parent=11 // pred_fallthru
          _
        // Predicated region
        $region41: #{tpu_custom_call.1} parent=11 // pred_check
          %p362 = pneg %p216
        $region42: #{tpu_custom_call.1} parent=11 // pred_check_branch
          %364 = sbr.rel (%p362) target = $region44
        $region43: #{tpu_custom_call.1} parent=11 // pred_region
          _
        $region44: #{tpu_custom_call.1} parent=11 // pred_fallthru
          _
        // Predicated region
        $region45: #{tpu_custom_call.1} parent=11 // pred_check
          %p365 = pneg %p237
        $region46: #{tpu_custom_call.1} parent=11 // pred_check_branch
          %367 = sbr.rel (%p365) target = $region48
        $region47: #{tpu_custom_call.1} parent=11 // pred_region
          _
        $region48: #{tpu_custom_call.1} parent=11 // pred_fallthru
          _
        // Predicated region
        $region49: #{tpu_custom_call.1} parent=11 // pred_check
          %p368 = pneg %p258
        $region50: #{tpu_custom_call.1} parent=11 // pred_check_branch
          %370 = sbr.rel (%p368) target = $region52
        $region51: #{tpu_custom_call.1} parent=11 // pred_region
          _
        $region52: #{tpu_custom_call.1} parent=11 // pred_fallthru
          _
        // Predicated region
        $region53: #{tpu_custom_call.1} parent=11 // pred_check
          %p371 = pneg %p279
        $region54: #{tpu_custom_call.1} parent=11 // pred_check_branch
          %373 = sbr.rel (%p371) target = $region56
        $region55: #{tpu_custom_call.1} parent=11 // pred_region
          _
        $region56: #{tpu_custom_call.1} parent=11 // pred_fallthru
          _
        // Predicated region
        $region57: #{tpu_custom_call.1} parent=11 // pred_check
          %p374 = pneg %p300
        $region58: #{tpu_custom_call.1} parent=11 // pred_check_branch
          %376 = sbr.rel (%p374) target = $region60
        $region59: #{tpu_custom_call.1} parent=11 // pred_region
          _
        $region60: #{tpu_custom_call.1} parent=11 // pred_fallthru
          _
      $region12: #{tpu_custom_call.1} parent=5 // pred_fallthru
        _
      %p377 = scmp.lt.s32.totalorder %s22, 2
      // Predicated region
      $region61: #{tpu_custom_call.1} parent=5 // pred_check
        %p378 = pneg %p377
      $region62: #{tpu_custom_call.1} parent=5 // pred_check_branch
        %380 = sbr.rel (%p378) target = $region64
      $region63: #{tpu_custom_call.1} parent=5 // pred_region
        // Predicated region
        $region65: #{tpu_custom_call.1} parent=63 // pred_check
          %p381 = pneg %p42
        $region66: #{tpu_custom_call.1} parent=63 // pred_check_branch
          %383 = sbr.rel (%p381) target = $region68
        $region67: #{tpu_custom_call.1} parent=63 // pred_region
          %p384 = scmp.lt.s32.totalorder %s22, 1
          %s385 = scalar_select %p384, %s22, 1
          %s386 = smul.addr %s385, 12
          %s387 = smul.addr %s386, 8
          %s388 = scalar_lea.vmem %s0, %s387
        $region68: #{tpu_custom_call.1} parent=63 // pred_fallthru
          _
      $region64: #{tpu_custom_call.1} parent=5 // pred_fallthru
        _
      %p389 = scmp.le.s32.totalorder 1, %s22
      %p390 = scmp.lt.s32.totalorder %s22, 3
      %p391 = pnand %p389, %p390
      %p392 = pneg %p391
      // Predicated region
      $region69: #{tpu_custom_call.1} parent=5 // pred_check
        _
      $region70: #{tpu_custom_call.1} parent=5 // pred_check_branch
        %394 = sbr.rel (%p391) target = $region72
      $region71: #{tpu_custom_call.1} parent=5 // pred_region
        %s395 = ssub.s32 %s22, 1
        %p396 = scmp.lt.s32.totalorder %s27, 1
        %s397 = scalar_select %p396, %s27, 1
        %s398 = smul.addr %s397, 12
        %s399 = smul.addr %s398, 8
        %s400 = scalar_lea.vmem %s0, %s399
        %p401 = pneg %p48
        %p402 = pneg %p45
        %p403 = pneg %p69
        %p404 = pneg %p66
        %p405 = pneg %p90
        %p406 = pneg %p87
        %p407 = pneg %p111
        %p408 = pneg %p108
        %p409 = pneg %p132
        %p410 = pneg %p129
        %p411 = pneg %p153
        %p412 = pneg %p150
        %p413 = pneg %p174
        %p414 = pneg %p171
        %p415 = pneg %p195
        %p416 = pneg %p192
        %p417 = pneg %p216
        %p418 = pneg %p213
        %p419 = pneg %p237
        %p420 = pneg %p234
        %p421 = pneg %p258
        %p422 = pneg %p255
        %p423 = pneg %p279
        %p424 = pneg %p276
        %p425 = pneg %p300
        %p426 = pneg %p297
        %p427 = pneg %p326
        %p428 = pneg %p323
        %s429 = sand.u32 %s313, 1
        %s430 = scalar_lea.sflag [#allocation3], %s429
        %s431 = sand.u32 %s313, 1
        %s432 = scalar_lea.vmem [#allocation2], %s431
        %p433 = scmp.lt.s32.totalorder %s27, 1
        %s434 = scalar_select %p433, %s27, 1
        %s435 = smul.addr %s434, 12
        %s436 = smul.addr %s435, 8
        %s437 = scalar_lea.vmem %s0, %s436
        %v438 = vld [vmem:[%s2] sm:$0x3]
        %v439 = vld [vmem:[%s3] sm:$0xff]
        %v440 = vld [vmem:[%s3 + $0x8] sm:$0x3f]
        %v441 = vld [vmem:[%s5] sm:$0x3]
        %v442 = vld [vmem:[%s6] sm:$0x1f]
        %v443 = vld [vmem:[%s437] sm:$0xff]
        %v444 = vld [vmem:[%s437 + $0x8] sm:$0xff]
        %v445 = vld [vmem:[%s437 + $0x10] sm:$0xff]
        %v446 = vld [vmem:[%s437 + $0x18] sm:$0xff]
        %v447 = vld [vmem:[%s437 + $0x20] sm:$0xff]
        %v448 = vld [vmem:[%s437 + $0x28] sm:$0xff]
        %v449 = vld [vmem:[%s437 + $0x30] sm:$0xff]
        %v450 = vld [vmem:[%s437 + $0x38] sm:$0xff]
        %v451 = vld [vmem:[%s437 + $0x40] sm:$0xff]
        %v452 = vld [vmem:[%s437 + $0x48] sm:$0xff]
        %v453 = vld [vmem:[%s437 + $0x50] sm:$0xff]
        %v454 = vld [vmem:[%s437 + $0x58] sm:$0xff]
        %v455 = vld [vmem:[%s1] sm:$0xff]
        %v456 = vld [vmem:[%s1 + $0x8] sm:$0xff]
        %v457 = vld [vmem:[%s1 + $0x10] sm:$0xff]
        %v458 = vld [vmem:[%s1 + $0x18] sm:$0xff]
        %v459 = vld [vmem:[%s1 + $0x20] sm:$0xff]
        %v460 = vld [vmem:[%s1 + $0x28] sm:$0xff]
        %v461 = vld [vmem:[%s1 + $0x30] sm:$0xff]
        %v462 = vld [vmem:[%s1 + $0x38] sm:$0xff]
        %s463 = scalar_lea.vmem %s1, 64
        %v464 = vld [vmem:[%s463] sm:$0xff]
        %v465 = vld [vmem:[%s463 + $0x8] sm:$0xff]
        %v466 = vld [vmem:[%s463 + $0x10] sm:$0xff]
        %v467 = vld [vmem:[%s463 + $0x18] sm:$0xff]
        %v468 = vld [vmem:[%s463 + $0x20] sm:$0xff]
        %v469 = vld [vmem:[%s463 + $0x28] sm:$0xff]
        %v470 = vld [vmem:[%s463 + $0x30] sm:$0xff]
        %v471 = vld [vmem:[%s463 + $0x38] sm:$0xff]
        %vm476 = vcmask 1046528
        %v477 = vrot.slane %v443, 1
        %v478 = vrot.slane %v444, 1
        %v479 = vsel %vm476, %v477, %v478
        %v480 = vrot.slane %v445, 1
        %v481 = vsel %vm476, %v478, %v480
        %v482 = vrot.slane %v446, 1
        %v483 = vsel %vm476, %v480, %v482
        %vm484 = vcmask 261120
        %v485 = vsel %vm484, %v479, 0
        %v487 = vsel %vm484, %v481, 0
        %v489 = vsel %vm484, %v483, 0
        %v491 = vsel %vm484, %v482, 0
        %493 = vmatpush.msra.mxu0 0.0
        %494 = vmatpush.msra.mxu0 0.0
        %495 = vmatpush.msra.mxu0 0.0
        %496 = vmatpush.msra.mxu0 0.0
        %497 = vmatpush.msra.mxu0 0.0
        %498 = vmatpush.msra.mxu0 0.0
        %499 = vmatpush.msra.mxu0 0.0
        %500 = vmatpush.msra.mxu0 0.0
        %501 = vmatpush.msra.mxu0 0.0
        %502 = vmatpush.msra.mxu0 0.0
        %503 = vmatpush.msra.mxu0 0.0
        %504 = vmatpush.msra.mxu0 0.0
        %505 = vmatpush.msra.mxu0 %v470
        %506 = vmatpush.msra.mxu0 %v468
        %507 = vmatpush.msra.mxu0 %v466
        %508 = vmatpush.msra.mxu0 %v464
        %509 = vmatmul.f32.gmra.mxu0 %v485
        %v510 = vpop.f32.mrf.mxu0
        %v511 = vadd.f32 0.0, %v510
        %512 = vmatmul.f32.gmra.mxu0 %v487
        %v513 = vpop.f32.mrf.mxu0
        %v514 = vadd.f32 0.0, %v513
        %515 = vmatmul.f32.gmra.mxu0 %v489
        %v516 = vpop.f32.mrf.mxu0
        %v517 = vadd.f32 0.0, %v516
        %518 = vmatmul.f32.gmra.mxu0 %v491
        %v519 = vpop.f32.mrf.mxu0
        %v520 = vadd.f32 0.0, %v519
        %521 = vdwg.mxu0
        %522 = vmatpush.msra.mxu0 0.0
        %523 = vmatpush.msra.mxu0 0.0
        %524 = vmatpush.msra.mxu0 0.0
        %525 = vmatpush.msra.mxu0 0.0
        %526 = vmatpush.msra.mxu0 0.0
        %527 = vmatpush.msra.mxu0 0.0
        %528 = vmatpush.msra.mxu0 0.0
        %529 = vmatpush.msra.mxu0 0.0
        %530 = vmatpush.msra.mxu0 0.0
        %531 = vmatpush.msra.mxu0 0.0
        %532 = vmatpush.msra.mxu0 0.0
        %533 = vmatpush.msra.mxu0 0.0
        %534 = vmatpush.msra.mxu0 %v471
        %535 = vmatpush.msra.mxu0 %v469
        %536 = vmatpush.msra.mxu0 %v467
        %537 = vmatpush.msra.mxu0 %v465
        %538 = vmatmul.f32.gmra.mxu0 %v485
        %v539 = vpop.f32.mrf.mxu0
        %v540 = vadd.f32 0.0, %v539
        %541 = vmatmul.f32.gmra.mxu0 %v487
        %v542 = vpop.f32.mrf.mxu0
        %v543 = vadd.f32 0.0, %v542
        %544 = vmatmul.f32.gmra.mxu0 %v489
        %v545 = vpop.f32.mrf.mxu0
        %v546 = vadd.f32 0.0, %v545
        %547 = vmatmul.f32.gmra.mxu0 %v491
        %v548 = vpop.f32.mrf.mxu0
        %v549 = vadd.f32 0.0, %v548
        %550 = vdwg.mxu0
        %v551 = vsel %vm484, %v443, 0
        %v553 = vsel %vm484, %v444, 0
        %v555 = vsel %vm484, %v445, 0
        %v557 = vsel %vm484, %v446, 0
        %559 = vmatpush.msra.mxu0 0.0
        %560 = vmatpush.msra.mxu0 0.0
        %561 = vmatpush.msra.mxu0 0.0
        %562 = vmatpush.msra.mxu0 0.0
        %563 = vmatpush.msra.mxu0 0.0
        %564 = vmatpush.msra.mxu0 0.0
        %565 = vmatpush.msra.mxu0 0.0
        %566 = vmatpush.msra.mxu0 0.0
        %567 = vmatpush.msra.mxu0 0.0
        %568 = vmatpush.msra.mxu0 0.0
        %569 = vmatpush.msra.mxu0 0.0
        %570 = vmatpush.msra.mxu0 0.0
        %571 = vmatpush.msra.mxu0 %v461
        %572 = vmatpush.msra.mxu0 %v459
        %573 = vmatpush.msra.mxu0 %v457
        %574 = vmatpush.msra.mxu0 %v455
        %575 = vmatmul.f32.gmra.mxu0 %v551
        %v576 = vpop.f32.mrf.mxu0
        %v577 = vadd.f32 %v511, %v576
        %578 = vmatmul.f32.gmra.mxu0 %v553
        %v579 = vpop.f32.mrf.mxu0
        %v580 = vadd.f32 %v514, %v579
        %581 = vmatmul.f32.gmra.mxu0 %v555
        %v582 = vpop.f32.mrf.mxu0
        %v583 = vadd.f32 %v517, %v582
        %584 = vmatmul.f32.gmra.mxu0 %v557
        %v585 = vpop.f32.mrf.mxu0
        %v586 = vadd.f32 %v520, %v585
        %587 = vdwg.mxu0
        %588 = vmatpush.msra.mxu0 0.0
        %589 = vmatpush.msra.mxu0 0.0
        %590 = vmatpush.msra.mxu0 0.0
        %591 = vmatpush.msra.mxu0 0.0
        %592 = vmatpush.msra.mxu0 0.0
        %593 = vmatpush.msra.mxu0 0.0
        %594 = vmatpush.msra.mxu0 0.0
        %595 = vmatpush.msra.mxu0 0.0
        %596 = vmatpush.msra.mxu0 0.0
        %597 = vmatpush.msra.mxu0 0.0
        %598 = vmatpush.msra.mxu0 0.0
        %599 = vmatpush.msra.mxu0 0.0
        %600 = vmatpush.msra.mxu0 %v462
        %601 = vmatpush.msra.mxu0 %v460
        %602 = vmatpush.msra.mxu0 %v458
        %603 = vmatpush.msra.mxu0 %v456
        %604 = vmatmul.f32.gmra.mxu0 %v551
        %v605 = vpop.f32.mrf.mxu0
        %v606 = vadd.f32 %v540, %v605
        %607 = vmatmul.f32.gmra.mxu0 %v553
        %v608 = vpop.f32.mrf.mxu0
        %v609 = vadd.f32 %v543, %v608
        %610 = vmatmul.f32.gmra.mxu0 %v555
        %v611 = vpop.f32.mrf.mxu0
        %v612 = vadd.f32 %v546, %v611
        %613 = vmatmul.f32.gmra.mxu0 %v557
        %v614 = vpop.f32.mrf.mxu0
        %v615 = vadd.f32 %v549, %v614
        %616 = vdwg.mxu0
        %s617 = scalar_lea.vmem %s1, 128
        %v618 = vld [vmem:[%s617] sm:$0xff]
        %v619 = vld [vmem:[%s617 + $0x8] sm:$0xff]
        %v620 = vld [vmem:[%s617 + $0x10] sm:$0xff]
        %v621 = vld [vmem:[%s617 + $0x18] sm:$0xff]
        %v622 = vld [vmem:[%s617 + $0x20] sm:$0xff]
        %v623 = vld [vmem:[%s617 + $0x28] sm:$0xff]
        %v624 = vld [vmem:[%s617 + $0x30] sm:$0xff]
        %v625 = vld [vmem:[%s617 + $0x38] sm:$0xff]
        %vm626 = vcmask 1045504
        %v627 = vrot.slane %v443, 2
        %v628 = vrot.slane %v444, 2
        %v629 = vsel %vm626, %v627, %v628
        %v630 = vrot.slane %v445, 2
        %v631 = vsel %vm626, %v628, %v630
        %v632 = vrot.slane %v446, 2
        %v633 = vsel %vm626, %v630, %v632
        %v634 = vsel %vm484, %v629, 0
        %v636 = vsel %vm484, %v631, 0
        %v638 = vsel %vm484, %v633, 0
        %v640 = vsel %vm484, %v632, 0
        %642 = vmatpush.msra.mxu0 0.0
        %643 = vmatpush.msra.mxu0 0.0
        %644 = vmatpush.msra.mxu0 0.0
        %645 = vmatpush.msra.mxu0 0.0
        %646 = vmatpush.msra.mxu0 0.0
        %647 = vmatpush.msra.mxu0 0.0
        %648 = vmatpush.msra.mxu0 0.0
        %649 = vmatpush.msra.mxu0 0.0
        %650 = vmatpush.msra.mxu0 0.0
        %651 = vmatpush.msra.mxu0 0.0
        %652 = vmatpush.msra.mxu0 0.0
        %653 = vmatpush.msra.mxu0 0.0
        %654 = vmatpush.msra.mxu0 %v624
        %655 = vmatpush.msra.mxu0 %v622
        %656 = vmatpush.msra.mxu0 %v620
        %657 = vmatpush.msra.mxu0 %v618
        %658 = vmatmul.f32.gmra.mxu0 %v634
        %v659 = vpop.f32.mrf.mxu0
        %v660 = vadd.f32 0.0, %v659
        %661 = vmatmul.f32.gmra.mxu0 %v636
        %v662 = vpop.f32.mrf.mxu0
        %v663 = vadd.f32 0.0, %v662
        %664 = vmatmul.f32.gmra.mxu0 %v638
        %v665 = vpop.f32.mrf.mxu0
        %v666 = vadd.f32 0.0, %v665
        %667 = vmatmul.f32.gmra.mxu0 %v640
        %v668 = vpop.f32.mrf.mxu0
        %v669 = vadd.f32 0.0, %v668
        %670 = vdwg.mxu0
        %671 = vmatpush.msra.mxu0 0.0
        %672 = vmatpush.msra.mxu0 0.0
        %673 = vmatpush.msra.mxu0 0.0
        %674 = vmatpush.msra.mxu0 0.0
        %675 = vmatpush.msra.mxu0 0.0
        %676 = vmatpush.msra.mxu0 0.0
        %677 = vmatpush.msra.mxu0 0.0
        %678 = vmatpush.msra.mxu0 0.0
        %679 = vmatpush.msra.mxu0 0.0
        %680 = vmatpush.msra.mxu0 0.0
        %681 = vmatpush.msra.mxu0 0.0
        %682 = vmatpush.msra.mxu0 0.0
        %683 = vmatpush.msra.mxu0 %v625
        %684 = vmatpush.msra.mxu0 %v623
        %685 = vmatpush.msra.mxu0 %v621
        %686 = vmatpush.msra.mxu0 %v619
        %687 = vmatmul.f32.gmra.mxu0 %v634
        %v688 = vpop.f32.mrf.mxu0
        %v689 = vadd.f32 0.0, %v688
        %690 = vmatmul.f32.gmra.mxu0 %v636
        %v691 = vpop.f32.mrf.mxu0
        %v692 = vadd.f32 0.0, %v691
        %693 = vmatmul.f32.gmra.mxu0 %v638
        %v694 = vpop.f32.mrf.mxu0
        %v695 = vadd.f32 0.0, %v694
        %696 = vmatmul.f32.gmra.mxu0 %v640
        %v697 = vpop.f32.mrf.mxu0
        %v698 = vadd.f32 0.0, %v697
        %699 = vdwg.mxu0
        %v700 = vadd.f32 %v577, %v660
        %v701 = vadd.f32 %v606, %v689
        %v702 = vadd.f32 %v580, %v663
        %v703 = vadd.f32 %v609, %v692
        %v704 = vadd.f32 %v583, %v666
        %v705 = vadd.f32 %v612, %v695
        %v706 = vadd.f32 %v586, %v669
        %v707 = vadd.f32 %v615, %v698
        %s708 = scalar_lea.vmem %s1, 192
        %v709 = vld [vmem:[%s708] sm:$0xff]
        %v710 = vld [vmem:[%s708 + $0x8] sm:$0xff]
        %v711 = vld [vmem:[%s708 + $0x10] sm:$0xff]
        %v712 = vld [vmem:[%s708 + $0x18] sm:$0xff]
        %v713 = vld [vmem:[%s708 + $0x20] sm:$0xff]
        %v714 = vld [vmem:[%s708 + $0x28] sm:$0xff]
        %v715 = vld [vmem:[%s708 + $0x30] sm:$0xff]
        %v716 = vld [vmem:[%s708 + $0x38] sm:$0xff]
        %vm717 = vcmask 1044480
        %v718 = vrot.slane %v443, 3
        %v719 = vrot.slane %v444, 3
        %v720 = vsel %vm717, %v718, %v719
        %v721 = vrot.slane %v445, 3
        %v722 = vsel %vm717, %v719, %v721
        %v723 = vrot.slane %v446, 3
        %v724 = vsel %vm717, %v721, %v723
        %v725 = vsel %vm484, %v720, 0
        %v727 = vsel %vm484, %v722, 0
        %v729 = vsel %vm484, %v724, 0
        %v731 = vsel %vm484, %v723, 0
        %733 = vmatpush.msra.mxu0 0.0
        %734 = vmatpush.msra.mxu0 0.0
        %735 = vmatpush.msra.mxu0 0.0
        %736 = vmatpush.msra.mxu0 0.0
        %737 = vmatpush.msra.mxu0 0.0
        %738 = vmatpush.msra.mxu0 0.0
        %739 = vmatpush.msra.mxu0 0.0
        %740 = vmatpush.msra.mxu0 0.0
        %741 = vmatpush.msra.mxu0 0.0
        %742 = vmatpush.msra.mxu0 0.0
        %743 = vmatpush.msra.mxu0 0.0
        %744 = vmatpush.msra.mxu0 0.0
        %745 = vmatpush.msra.mxu0 %v715
        %746 = vmatpush.msra.mxu0 %v713
        %747 = vmatpush.msra.mxu0 %v711
        %748 = vmatpush.msra.mxu0 %v709
        %749 = vmatmul.f32.gmra.mxu0 %v725
        %v750 = vpop.f32.mrf.mxu0
        %v751 = vadd.f32 0.0, %v750
        %752 = vmatmul.f32.gmra.mxu0 %v727
        %v753 = vpop.f32.mrf.mxu0
        %v754 = vadd.f32 0.0, %v753
        %755 = vmatmul.f32.gmra.mxu0 %v729
        %v756 = vpop.f32.mrf.mxu0
        %v757 = vadd.f32 0.0, %v756
        %758 = vmatmul.f32.gmra.mxu0 %v731
        %v759 = vpop.f32.mrf.mxu0
        %v760 = vadd.f32 0.0, %v759
        %761 = vdwg.mxu0
        %762 = vmatpush.msra.mxu0 0.0
        %763 = vmatpush.msra.mxu0 0.0
        %764 = vmatpush.msra.mxu0 0.0
        %765 = vmatpush.msra.mxu0 0.0
        %766 = vmatpush.msra.mxu0 0.0
        %767 = vmatpush.msra.mxu0 0.0
        %768 = vmatpush.msra.mxu0 0.0
        %769 = vmatpush.msra.mxu0 0.0
        %770 = vmatpush.msra.mxu0 0.0
        %771 = vmatpush.msra.mxu0 0.0
        %772 = vmatpush.msra.mxu0 0.0
        %773 = vmatpush.msra.mxu0 0.0
        %774 = vmatpush.msra.mxu0 %v716
        %775 = vmatpush.msra.mxu0 %v714
        %776 = vmatpush.msra.mxu0 %v712
        %777 = vmatpush.msra.mxu0 %v710
        %778 = vmatmul.f32.gmra.mxu0 %v725
        %v779 = vpop.f32.mrf.mxu0
        %v780 = vadd.f32 0.0, %v779
        %781 = vmatmul.f32.gmra.mxu0 %v727
        %v782 = vpop.f32.mrf.mxu0
        %v783 = vadd.f32 0.0, %v782
        %784 = vmatmul.f32.gmra.mxu0 %v729
        %v785 = vpop.f32.mrf.mxu0
        %v786 = vadd.f32 0.0, %v785
        %787 = vmatmul.f32.gmra.mxu0 %v731
        %v788 = vpop.f32.mrf.mxu0
        %v789 = vadd.f32 0.0, %v788
        %790 = vdwg.mxu0
        %v791 = vadd.f32 %v700, %v751
        %v792 = vadd.f32 %v701, %v780
        %v793 = vadd.f32 %v702, %v754
        %v794 = vadd.f32 %v703, %v783
        %v795 = vadd.f32 %v704, %v757
        %v796 = vadd.f32 %v705, %v786
        %v797 = vadd.f32 %v706, %v760
        %v798 = vadd.f32 %v707, %v789
        %s799 = scalar_lea.vmem %s1, 256
        %v800 = vld [vmem:[%s799] sm:$0xff]
        %v801 = vld [vmem:[%s799 + $0x8] sm:$0xff]
        %v802 = vld [vmem:[%s799 + $0x10] sm:$0xff]
        %v803 = vld [vmem:[%s799 + $0x18] sm:$0xff]
        %v804 = vld [vmem:[%s799 + $0x20] sm:$0xff]
        %v805 = vld [vmem:[%s799 + $0x28] sm:$0xff]
        %v806 = vld [vmem:[%s799 + $0x30] sm:$0xff]
        %v807 = vld [vmem:[%s799 + $0x38] sm:$0xff]
        %vm808 = vcmask 1043456
        %v809 = vrot.slane %v443, 4
        %v810 = vrot.slane %v444, 4
        %v811 = vsel %vm808, %v809, %v810
        %v812 = vrot.slane %v445, 4
        %v813 = vsel %vm808, %v810, %v812
        %v814 = vrot.slane %v446, 4
        %v815 = vsel %vm808, %v812, %v814
        %v816 = vsel %vm484, %v811, 0
        %v818 = vsel %vm484, %v813, 0
        %v820 = vsel %vm484, %v815, 0
        %v822 = vsel %vm484, %v814, 0
        %824 = vmatpush.msra.mxu0 0.0
        %825 = vmatpush.msra.mxu0 0.0
        %826 = vmatpush.msra.mxu0 0.0
        %827 = vmatpush.msra.mxu0 0.0
        %828 = vmatpush.msra.mxu0 0.0
        %829 = vmatpush.msra.mxu0 0.0
        %830 = vmatpush.msra.mxu0 0.0
        %831 = vmatpush.msra.mxu0 0.0
        %832 = vmatpush.msra.mxu0 0.0
        %833 = vmatpush.msra.mxu0 0.0
        %834 = vmatpush.msra.mxu0 0.0
        %835 = vmatpush.msra.mxu0 0.0
        %836 = vmatpush.msra.mxu0 %v806
        %837 = vmatpush.msra.mxu0 %v804
        %838 = vmatpush.msra.mxu0 %v802
        %839 = vmatpush.msra.mxu0 %v800
        %840 = vmatmul.f32.gmra.mxu0 %v816
        %v841 = vpop.f32.mrf.mxu0
        %v842 = vadd.f32 0.0, %v841
        %843 = vmatmul.f32.gmra.mxu0 %v818
        %v844 = vpop.f32.mrf.mxu0
        %v845 = vadd.f32 0.0, %v844
        %846 = vmatmul.f32.gmra.mxu0 %v820
        %v847 = vpop.f32.mrf.mxu0
        %v848 = vadd.f32 0.0, %v847
        %849 = vmatmul.f32.gmra.mxu0 %v822
        %v850 = vpop.f32.mrf.mxu0
        %v851 = vadd.f32 0.0, %v850
        %852 = vdwg.mxu0
        %853 = vmatpush.msra.mxu0 0.0
        %854 = vmatpush.msra.mxu0 0.0
        %855 = vmatpush.msra.mxu0 0.0
        %856 = vmatpush.msra.mxu0 0.0
        %857 = vmatpush.msra.mxu0 0.0
        %858 = vmatpush.msra.mxu0 0.0
        %859 = vmatpush.msra.mxu0 0.0
        %860 = vmatpush.msra.mxu0 0.0
        %861 = vmatpush.msra.mxu0 0.0
        %862 = vmatpush.msra.mxu0 0.0
        %863 = vmatpush.msra.mxu0 0.0
        %864 = vmatpush.msra.mxu0 0.0
        %865 = vmatpush.msra.mxu0 %v807
        %866 = vmatpush.msra.mxu0 %v805
        %867 = vmatpush.msra.mxu0 %v803
        %868 = vmatpush.msra.mxu0 %v801
        %869 = vmatmul.f32.gmra.mxu0 %v816
        %v870 = vpop.f32.mrf.mxu0
        %v871 = vadd.f32 0.0, %v870
        %872 = vmatmul.f32.gmra.mxu0 %v818
        %v873 = vpop.f32.mrf.mxu0
        %v874 = vadd.f32 0.0, %v873
        %875 = vmatmul.f32.gmra.mxu0 %v820
        %v876 = vpop.f32.mrf.mxu0
        %v877 = vadd.f32 0.0, %v876
        %878 = vmatmul.f32.gmra.mxu0 %v822
        %v879 = vpop.f32.mrf.mxu0
        %v880 = vadd.f32 0.0, %v879
        %881 = vdwg.mxu0
        %v882 = vadd.f32 %v791, %v842
        %v883 = vadd.f32 %v792, %v871
        %v884 = vadd.f32 %v793, %v845
        %v885 = vadd.f32 %v794, %v874
        %v886 = vadd.f32 %v795, %v848
        %v887 = vadd.f32 %v796, %v877
        %v888 = vadd.f32 %v797, %v851
        %v889 = vadd.f32 %v798, %v880
        %s890 = scalar_lea.vmem %s1, 320
        %v891 = vld [vmem:[%s890] sm:$0xff]
        %v892 = vld [vmem:[%s890 + $0x8] sm:$0xff]
        %v893 = vld [vmem:[%s890 + $0x10] sm:$0xff]
        %v894 = vld [vmem:[%s890 + $0x18] sm:$0xff]
        %v895 = vld [vmem:[%s890 + $0x20] sm:$0xff]
        %v896 = vld [vmem:[%s890 + $0x28] sm:$0xff]
        %v897 = vld [vmem:[%s890 + $0x30] sm:$0xff]
        %v898 = vld [vmem:[%s890 + $0x38] sm:$0xff]
        %v900 = vsel %vm484, %v447, 0
        %v903 = vsel %vm484, %v448, 0
        %v906 = vsel %vm484, %v449, 0
        %v909 = vsel %vm484, %v450, 0
        %911 = vmatpush.msra.mxu0 0.0
        %912 = vmatpush.msra.mxu0 0.0
        %913 = vmatpush.msra.mxu0 0.0
        %914 = vmatpush.msra.mxu0 0.0
        %915 = vmatpush.msra.mxu0 0.0
        %916 = vmatpush.msra.mxu0 0.0
        %917 = vmatpush.msra.mxu0 0.0
        %918 = vmatpush.msra.mxu0 0.0
        %919 = vmatpush.msra.mxu0 0.0
        %920 = vmatpush.msra.mxu0 0.0
        %921 = vmatpush.msra.mxu0 0.0
        %922 = vmatpush.msra.mxu0 0.0
        %923 = vmatpush.msra.mxu0 %v897
        %924 = vmatpush.msra.mxu0 %v895
        %925 = vmatpush.msra.mxu0 %v893
        %926 = vmatpush.msra.mxu0 %v891
        %927 = vmatmul.f32.gmra.mxu0 %v900
        %v928 = vpop.f32.mrf.mxu0
        %v929 = vadd.f32 0.0, %v928
        %930 = vmatmul.f32.gmra.mxu0 %v903
        %v931 = vpop.f32.mrf.mxu0
        %v932 = vadd.f32 0.0, %v931
        %933 = vmatmul.f32.gmra.mxu0 %v906
        %v934 = vpop.f32.mrf.mxu0
        %v935 = vadd.f32 0.0, %v934
        %936 = vmatmul.f32.gmra.mxu0 %v909
        %v937 = vpop.f32.mrf.mxu0
        %v938 = vadd.f32 0.0, %v937
        %939 = vdwg.mxu0
        %940 = vmatpush.msra.mxu0 0.0
        %941 = vmatpush.msra.mxu0 0.0
        %942 = vmatpush.msra.mxu0 0.0
        %943 = vmatpush.msra.mxu0 0.0
        %944 = vmatpush.msra.mxu0 0.0
        %945 = vmatpush.msra.mxu0 0.0
        %946 = vmatpush.msra.mxu0 0.0
        %947 = vmatpush.msra.mxu0 0.0
        %948 = vmatpush.msra.mxu0 0.0
        %949 = vmatpush.msra.mxu0 0.0
        %950 = vmatpush.msra.mxu0 0.0
        %951 = vmatpush.msra.mxu0 0.0
        %952 = vmatpush.msra.mxu0 %v898
        %953 = vmatpush.msra.mxu0 %v896
        %954 = vmatpush.msra.mxu0 %v894
        %955 = vmatpush.msra.mxu0 %v892
        %956 = vmatmul.f32.gmra.mxu0 %v900
        %v957 = vpop.f32.mrf.mxu0
        %v958 = vadd.f32 0.0, %v957
        %959 = vmatmul.f32.gmra.mxu0 %v903
        %v960 = vpop.f32.mrf.mxu0
        %v961 = vadd.f32 0.0, %v960
        %962 = vmatmul.f32.gmra.mxu0 %v906
        %v963 = vpop.f32.mrf.mxu0
        %v964 = vadd.f32 0.0, %v963
        %965 = vmatmul.f32.gmra.mxu0 %v909
        %v966 = vpop.f32.mrf.mxu0
        %v967 = vadd.f32 0.0, %v966
        %968 = vdwg.mxu0
        %v969 = vadd.f32 %v882, %v929
        %v970 = vadd.f32 %v883, %v958
        %v971 = vadd.f32 %v884, %v932
        %v972 = vadd.f32 %v885, %v961
        %v973 = vadd.f32 %v886, %v935
        %v974 = vadd.f32 %v887, %v964
        %v975 = vadd.f32 %v888, %v938
        %v976 = vadd.f32 %v889, %v967
        %s977 = scalar_lea.vmem %s1, 384
        %v978 = vld [vmem:[%s977] sm:$0xff]
        %v979 = vld [vmem:[%s977 + $0x8] sm:$0xff]
        %v980 = vld [vmem:[%s977 + $0x10] sm:$0xff]
        %v981 = vld [vmem:[%s977 + $0x18] sm:$0xff]
        %v982 = vld [vmem:[%s977 + $0x20] sm:$0xff]
        %v983 = vld [vmem:[%s977 + $0x28] sm:$0xff]
        %v984 = vld [vmem:[%s977 + $0x30] sm:$0xff]
        %v985 = vld [vmem:[%s977 + $0x38] sm:$0xff]
        %v986 = vrot.slane %v447, 1
        %v987 = vrot.slane %v448, 1
        %v988 = vsel %vm476, %v986, %v987
        %v989 = vrot.slane %v449, 1
        %v990 = vsel %vm476, %v987, %v989
        %v991 = vrot.slane %v450, 1
        %v992 = vsel %vm476, %v989, %v991
        %v993 = vsel %vm484, %v988, 0
        %v995 = vsel %vm484, %v990, 0
        %v997 = vsel %vm484, %v992, 0
        %v999 = vsel %vm484, %v991, 0
        %1001 = vmatpush.msra.mxu0 0.0
        %1002 = vmatpush.msra.mxu0 0.0
        %1003 = vmatpush.msra.mxu0 0.0
        %1004 = vmatpush.msra.mxu0 0.0
        %1005 = vmatpush.msra.mxu0 0.0
        %1006 = vmatpush.msra.mxu0 0.0
        %1007 = vmatpush.msra.mxu0 0.0
        %1008 = vmatpush.msra.mxu0 0.0
        %1009 = vmatpush.msra.mxu0 0.0
        %1010 = vmatpush.msra.mxu0 0.0
        %1011 = vmatpush.msra.mxu0 0.0
        %1012 = vmatpush.msra.mxu0 0.0
        %1013 = vmatpush.msra.mxu0 %v984
        %1014 = vmatpush.msra.mxu0 %v982
        %1015 = vmatpush.msra.mxu0 %v980
        %1016 = vmatpush.msra.mxu0 %v978
        %1017 = vmatmul.f32.gmra.mxu0 %v993
        %v1018 = vpop.f32.mrf.mxu0
        %v1019 = vadd.f32 0.0, %v1018
        %1020 = vmatmul.f32.gmra.mxu0 %v995
        %v1021 = vpop.f32.mrf.mxu0
        %v1022 = vadd.f32 0.0, %v1021
        %1023 = vmatmul.f32.gmra.mxu0 %v997
        %v1024 = vpop.f32.mrf.mxu0
        %v1025 = vadd.f32 0.0, %v1024
        %1026 = vmatmul.f32.gmra.mxu0 %v999
        %v1027 = vpop.f32.mrf.mxu0
        %v1028 = vadd.f32 0.0, %v1027
        %1029 = vdwg.mxu0
        %1030 = vmatpush.msra.mxu0 0.0
        %1031 = vmatpush.msra.mxu0 0.0
        %1032 = vmatpush.msra.mxu0 0.0
        %1033 = vmatpush.msra.mxu0 0.0
        %1034 = vmatpush.msra.mxu0 0.0
        %1035 = vmatpush.msra.mxu0 0.0
        %1036 = vmatpush.msra.mxu0 0.0
        %1037 = vmatpush.msra.mxu0 0.0
        %1038 = vmatpush.msra.mxu0 0.0
        %1039 = vmatpush.msra.mxu0 0.0
        %1040 = vmatpush.msra.mxu0 0.0
        %1041 = vmatpush.msra.mxu0 0.0
        %1042 = vmatpush.msra.mxu0 %v985
        %1043 = vmatpush.msra.mxu0 %v983
        %1044 = vmatpush.msra.mxu0 %v981
        %1045 = vmatpush.msra.mxu0 %v979
        %1046 = vmatmul.f32.gmra.mxu0 %v993
        %v1047 = vpop.f32.mrf.mxu0
        %v1048 = vadd.f32 0.0, %v1047
        %1049 = vmatmul.f32.gmra.mxu0 %v995
        %v1050 = vpop.f32.mrf.mxu0
        %v1051 = vadd.f32 0.0, %v1050
        %1052 = vmatmul.f32.gmra.mxu0 %v997
        %v1053 = vpop.f32.mrf.mxu0
        %v1054 = vadd.f32 0.0, %v1053
        %1055 = vmatmul.f32.gmra.mxu0 %v999
        %v1056 = vpop.f32.mrf.mxu0
        %v1057 = vadd.f32 0.0, %v1056
        %1058 = vdwg.mxu0
        %v1059 = vadd.f32 %v969, %v1019
        %v1060 = vadd.f32 %v970, %v1048
        %v1061 = vadd.f32 %v971, %v1022
        %v1062 = vadd.f32 %v972, %v1051
        %v1063 = vadd.f32 %v973, %v1025
        %v1064 = vadd.f32 %v974, %v1054
        %v1065 = vadd.f32 %v975, %v1028
        %v1066 = vadd.f32 %v976, %v1057
        %s1067 = scalar_lea.vmem %s1, 448
        %v1068 = vld [vmem:[%s1067] sm:$0xff]
        %v1069 = vld [vmem:[%s1067 + $0x8] sm:$0xff]
        %v1070 = vld [vmem:[%s1067 + $0x10] sm:$0xff]
        %v1071 = vld [vmem:[%s1067 + $0x18] sm:$0xff]
        %v1072 = vld [vmem:[%s1067 + $0x20] sm:$0xff]
        %v1073 = vld [vmem:[%s1067 + $0x28] sm:$0xff]
        %v1074 = vld [vmem:[%s1067 + $0x30] sm:$0xff]
        %v1075 = vld [vmem:[%s1067 + $0x38] sm:$0xff]
        %v1076 = vrot.slane %v447, 2
        %v1077 = vrot.slane %v448, 2
        %v1078 = vsel %vm626, %v1076, %v1077
        %v1079 = vrot.slane %v449, 2
        %v1080 = vsel %vm626, %v1077, %v1079
        %v1081 = vrot.slane %v450, 2
        %v1082 = vsel %vm626, %v1079, %v1081
        %v1083 = vsel %vm484, %v1078, 0
        %v1085 = vsel %vm484, %v1080, 0
        %v1087 = vsel %vm484, %v1082, 0
        %v1089 = vsel %vm484, %v1081, 0
        %1091 = vmatpush.msra.mxu0 0.0
        %1092 = vmatpush.msra.mxu0 0.0
        %1093 = vmatpush.msra.mxu0 0.0
        %1094 = vmatpush.msra.mxu0 0.0
        %1095 = vmatpush.msra.mxu0 0.0
        %1096 = vmatpush.msra.mxu0 0.0
        %1097 = vmatpush.msra.mxu0 0.0
        %1098 = vmatpush.msra.mxu0 0.0
        %1099 = vmatpush.msra.mxu0 0.0
        %1100 = vmatpush.msra.mxu0 0.0
        %1101 = vmatpush.msra.mxu0 0.0
        %1102 = vmatpush.msra.mxu0 0.0
        %1103 = vmatpush.msra.mxu0 %v1074
        %1104 = vmatpush.msra.mxu0 %v1072
        %1105 = vmatpush.msra.mxu0 %v1070
        %1106 = vmatpush.msra.mxu0 %v1068
        %1107 = vmatmul.f32.gmra.mxu0 %v1083
        %v1108 = vpop.f32.mrf.mxu0
        %v1109 = vadd.f32 0.0, %v1108
        %1110 = vmatmul.f32.gmra.mxu0 %v1085
        %v1111 = vpop.f32.mrf.mxu0
        %v1112 = vadd.f32 0.0, %v1111
        %1113 = vmatmul.f32.gmra.mxu0 %v1087
        %v1114 = vpop.f32.mrf.mxu0
        %v1115 = vadd.f32 0.0, %v1114
        %1116 = vmatmul.f32.gmra.mxu0 %v1089
        %v1117 = vpop.f32.mrf.mxu0
        %v1118 = vadd.f32 0.0, %v1117
        %1119 = vdwg.mxu0
        %1120 = vmatpush.msra.mxu0 0.0
        %1121 = vmatpush.msra.mxu0 0.0
        %1122 = vmatpush.msra.mxu0 0.0
        %1123 = vmatpush.msra.mxu0 0.0
        %1124 = vmatpush.msra.mxu0 0.0
        %1125 = vmatpush.msra.mxu0 0.0
        %1126 = vmatpush.msra.mxu0 0.0
        %1127 = vmatpush.msra.mxu0 0.0
        %1128 = vmatpush.msra.mxu0 0.0
        %1129 = vmatpush.msra.mxu0 0.0
        %1130 = vmatpush.msra.mxu0 0.0
        %1131 = vmatpush.msra.mxu0 0.0
        %1132 = vmatpush.msra.mxu0 %v1075
        %1133 = vmatpush.msra.mxu0 %v1073
        %1134 = vmatpush.msra.mxu0 %v1071
        %1135 = vmatpush.msra.mxu0 %v1069
        %1136 = vmatmul.f32.gmra.mxu0 %v1083
        %v1137 = vpop.f32.mrf.mxu0
        %v1138 = vadd.f32 0.0, %v1137
        %1139 = vmatmul.f32.gmra.mxu0 %v1085
        %v1140 = vpop.f32.mrf.mxu0
        %v1141 = vadd.f32 0.0, %v1140
        %1142 = vmatmul.f32.gmra.mxu0 %v1087
        %v1143 = vpop.f32.mrf.mxu0
        %v1144 = vadd.f32 0.0, %v1143
        %1145 = vmatmul.f32.gmra.mxu0 %v1089
        %v1146 = vpop.f32.mrf.mxu0
        %v1147 = vadd.f32 0.0, %v1146
        %1148 = vdwg.mxu0
        %v1149 = vadd.f32 %v1059, %v1109
        %v1150 = vadd.f32 %v1060, %v1138
        %v1151 = vadd.f32 %v1061, %v1112
        %v1152 = vadd.f32 %v1062, %v1141
        %v1153 = vadd.f32 %v1063, %v1115
        %v1154 = vadd.f32 %v1064, %v1144
        %v1155 = vadd.f32 %v1065, %v1118
        %v1156 = vadd.f32 %v1066, %v1147
        %s1157 = scalar_lea.vmem %s1, 512
        %v1158 = vld [vmem:[%s1157] sm:$0xff]
        %v1159 = vld [vmem:[%s1157 + $0x8] sm:$0xff]
        %v1160 = vld [vmem:[%s1157 + $0x10] sm:$0xff]
        %v1161 = vld [vmem:[%s1157 + $0x18] sm:$0xff]
        %v1162 = vld [vmem:[%s1157 + $0x20] sm:$0xff]
        %v1163 = vld [vmem:[%s1157 + $0x28] sm:$0xff]
        %v1164 = vld [vmem:[%s1157 + $0x30] sm:$0xff]
        %v1165 = vld [vmem:[%s1157 + $0x38] sm:$0xff]
        %v1166 = vrot.slane %v447, 3
        %v1167 = vrot.slane %v448, 3
        %v1168 = vsel %vm717, %v1166, %v1167
        %v1169 = vrot.slane %v449, 3
        %v1170 = vsel %vm717, %v1167, %v1169
        %v1171 = vrot.slane %v450, 3
        %v1172 = vsel %vm717, %v1169, %v1171
        %v1173 = vsel %vm484, %v1168, 0
        %v1175 = vsel %vm484, %v1170, 0
        %v1177 = vsel %vm484, %v1172, 0
        %v1179 = vsel %vm484, %v1171, 0
        %1181 = vmatpush.msra.mxu0 0.0
        %1182 = vmatpush.msra.mxu0 0.0
        %1183 = vmatpush.msra.mxu0 0.0
        %1184 = vmatpush.msra.mxu0 0.0
        %1185 = vmatpush.msra.mxu0 0.0
        %1186 = vmatpush.msra.mxu0 0.0
        %1187 = vmatpush.msra.mxu0 0.0
        %1188 = vmatpush.msra.mxu0 0.0
        %1189 = vmatpush.msra.mxu0 0.0
        %1190 = vmatpush.msra.mxu0 0.0
        %1191 = vmatpush.msra.mxu0 0.0
        %1192 = vmatpush.msra.mxu0 0.0
        %1193 = vmatpush.msra.mxu0 %v1164
        %1194 = vmatpush.msra.mxu0 %v1162
        %1195 = vmatpush.msra.mxu0 %v1160
        %1196 = vmatpush.msra.mxu0 %v1158
        %1197 = vmatmul.f32.gmra.mxu0 %v1173
        %v1198 = vpop.f32.mrf.mxu0
        %v1199 = vadd.f32 0.0, %v1198
        %1200 = vmatmul.f32.gmra.mxu0 %v1175
        %v1201 = vpop.f32.mrf.mxu0
        %v1202 = vadd.f32 0.0, %v1201
        %1203 = vmatmul.f32.gmra.mxu0 %v1177
        %v1204 = vpop.f32.mrf.mxu0
        %v1205 = vadd.f32 0.0, %v1204
        %1206 = vmatmul.f32.gmra.mxu0 %v1179
        %v1207 = vpop.f32.mrf.mxu0
        %v1208 = vadd.f32 0.0, %v1207
        %1209 = vdwg.mxu0
        %1210 = vmatpush.msra.mxu0 0.0
        %1211 = vmatpush.msra.mxu0 0.0
        %1212 = vmatpush.msra.mxu0 0.0
        %1213 = vmatpush.msra.mxu0 0.0
        %1214 = vmatpush.msra.mxu0 0.0
        %1215 = vmatpush.msra.mxu0 0.0
        %1216 = vmatpush.msra.mxu0 0.0
        %1217 = vmatpush.msra.mxu0 0.0
        %1218 = vmatpush.msra.mxu0 0.0
        %1219 = vmatpush.msra.mxu0 0.0
        %1220 = vmatpush.msra.mxu0 0.0
        %1221 = vmatpush.msra.mxu0 0.0
        %1222 = vmatpush.msra.mxu0 %v1165
        %1223 = vmatpush.msra.mxu0 %v1163
        %1224 = vmatpush.msra.mxu0 %v1161
        %1225 = vmatpush.msra.mxu0 %v1159
        %1226 = vmatmul.f32.gmra.mxu0 %v1173
        %v1227 = vpop.f32.mrf.mxu0
        %v1228 = vadd.f32 0.0, %v1227
        %1229 = vmatmul.f32.gmra.mxu0 %v1175
        %v1230 = vpop.f32.mrf.mxu0
        %v1231 = vadd.f32 0.0, %v1230
        %1232 = vmatmul.f32.gmra.mxu0 %v1177
        %v1233 = vpop.f32.mrf.mxu0
        %v1234 = vadd.f32 0.0, %v1233
        %1235 = vmatmul.f32.gmra.mxu0 %v1179
        %v1236 = vpop.f32.mrf.mxu0
        %v1237 = vadd.f32 0.0, %v1236
        %1238 = vdwg.mxu0
        %v1239 = vadd.f32 %v1149, %v1199
        %v1240 = vadd.f32 %v1150, %v1228
        %v1241 = vadd.f32 %v1151, %v1202
        %v1242 = vadd.f32 %v1152, %v1231
        %v1243 = vadd.f32 %v1153, %v1205
        %v1244 = vadd.f32 %v1154, %v1234
        %v1245 = vadd.f32 %v1155, %v1208
        %v1246 = vadd.f32 %v1156, %v1237
        %s1247 = scalar_lea.vmem %s1, 576
        %v1248 = vld [vmem:[%s1247] sm:$0xff]
        %v1249 = vld [vmem:[%s1247 + $0x8] sm:$0xff]
        %v1250 = vld [vmem:[%s1247 + $0x10] sm:$0xff]
        %v1251 = vld [vmem:[%s1247 + $0x18] sm:$0xff]
        %v1252 = vld [vmem:[%s1247 + $0x20] sm:$0xff]
        %v1253 = vld [vmem:[%s1247 + $0x28] sm:$0xff]
        %v1254 = vld [vmem:[%s1247 + $0x30] sm:$0xff]
        %v1255 = vld [vmem:[%s1247 + $0x38] sm:$0xff]
        %v1256 = vrot.slane %v447, 4
        %v1257 = vrot.slane %v448, 4
        %v1258 = vsel %vm808, %v1256, %v1257
        %v1259 = vrot.slane %v449, 4
        %v1260 = vsel %vm808, %v1257, %v1259
        %v1261 = vrot.slane %v450, 4
        %v1262 = vsel %vm808, %v1259, %v1261
        %v1263 = vsel %vm484, %v1258, 0
        %v1265 = vsel %vm484, %v1260, 0
        %v1267 = vsel %vm484, %v1262, 0
        %v1269 = vsel %vm484, %v1261, 0
        %1271 = vmatpush.msra.mxu0 0.0
        %1272 = vmatpush.msra.mxu0 0.0
        %1273 = vmatpush.msra.mxu0 0.0
        %1274 = vmatpush.msra.mxu0 0.0
        %1275 = vmatpush.msra.mxu0 0.0
        %1276 = vmatpush.msra.mxu0 0.0
        %1277 = vmatpush.msra.mxu0 0.0
        %1278 = vmatpush.msra.mxu0 0.0
        %1279 = vmatpush.msra.mxu0 0.0
        %1280 = vmatpush.msra.mxu0 0.0
        %1281 = vmatpush.msra.mxu0 0.0
        %1282 = vmatpush.msra.mxu0 0.0
        %1283 = vmatpush.msra.mxu0 %v1254
        %1284 = vmatpush.msra.mxu0 %v1252
        %1285 = vmatpush.msra.mxu0 %v1250
        %1286 = vmatpush.msra.mxu0 %v1248
        %1287 = vmatmul.f32.gmra.mxu0 %v1263
        %v1288 = vpop.f32.mrf.mxu0
        %v1289 = vadd.f32 0.0, %v1288
        %1290 = vmatmul.f32.gmra.mxu0 %v1265
        %v1291 = vpop.f32.mrf.mxu0
        %v1292 = vadd.f32 0.0, %v1291
        %1293 = vmatmul.f32.gmra.mxu0 %v1267
        %v1294 = vpop.f32.mrf.mxu0
        %v1295 = vadd.f32 0.0, %v1294
        %1296 = vmatmul.f32.gmra.mxu0 %v1269
        %v1297 = vpop.f32.mrf.mxu0
        %v1298 = vadd.f32 0.0, %v1297
        %1299 = vdwg.mxu0
        %1300 = vmatpush.msra.mxu0 0.0
        %1301 = vmatpush.msra.mxu0 0.0
        %1302 = vmatpush.msra.mxu0 0.0
        %1303 = vmatpush.msra.mxu0 0.0
        %1304 = vmatpush.msra.mxu0 0.0
        %1305 = vmatpush.msra.mxu0 0.0
        %1306 = vmatpush.msra.mxu0 0.0
        %1307 = vmatpush.msra.mxu0 0.0
        %1308 = vmatpush.msra.mxu0 0.0
        %1309 = vmatpush.msra.mxu0 0.0
        %1310 = vmatpush.msra.mxu0 0.0
        %1311 = vmatpush.msra.mxu0 0.0
        %1312 = vmatpush.msra.mxu0 %v1255
        %1313 = vmatpush.msra.mxu0 %v1253
        %1314 = vmatpush.msra.mxu0 %v1251
        %1315 = vmatpush.msra.mxu0 %v1249
        %1316 = vmatmul.f32.gmra.mxu0 %v1263
        %v1317 = vpop.f32.mrf.mxu0
        %v1318 = vadd.f32 0.0, %v1317
        %1319 = vmatmul.f32.gmra.mxu0 %v1265
        %v1320 = vpop.f32.mrf.mxu0
        %v1321 = vadd.f32 0.0, %v1320
        %1322 = vmatmul.f32.gmra.mxu0 %v1267
        %v1323 = vpop.f32.mrf.mxu0
        %v1324 = vadd.f32 0.0, %v1323
        %1325 = vmatmul.f32.gmra.mxu0 %v1269
        %v1326 = vpop.f32.mrf.mxu0
        %v1327 = vadd.f32 0.0, %v1326
        %1328 = vdwg.mxu0
        %v1329 = vadd.f32 %v1239, %v1289
        %v1330 = vadd.f32 %v1240, %v1318
        %v1331 = vadd.f32 %v1241, %v1292
        %v1332 = vadd.f32 %v1242, %v1321
        %v1333 = vadd.f32 %v1243, %v1295
        %v1334 = vadd.f32 %v1244, %v1324
        %v1335 = vadd.f32 %v1245, %v1298
        %v1336 = vadd.f32 %v1246, %v1327
        %s1337 = scalar_lea.vmem %s1, 640
        %v1338 = vld [vmem:[%s1337] sm:$0xff]
        %v1339 = vld [vmem:[%s1337 + $0x8] sm:$0xff]
        %v1340 = vld [vmem:[%s1337 + $0x10] sm:$0xff]
        %v1341 = vld [vmem:[%s1337 + $0x18] sm:$0xff]
        %v1342 = vld [vmem:[%s1337 + $0x20] sm:$0xff]
        %v1343 = vld [vmem:[%s1337 + $0x28] sm:$0xff]
        %v1344 = vld [vmem:[%s1337 + $0x30] sm:$0xff]
        %v1345 = vld [vmem:[%s1337 + $0x38] sm:$0xff]
        %v1347 = vsel %vm484, %v451, 0
        %v1350 = vsel %vm484, %v452, 0
        %v1353 = vsel %vm484, %v453, 0
        %v1356 = vsel %vm484, %v454, 0
        %1358 = vmatpush.msra.mxu0 0.0
        %1359 = vmatpush.msra.mxu0 0.0
        %1360 = vmatpush.msra.mxu0 0.0
        %1361 = vmatpush.msra.mxu0 0.0
        %1362 = vmatpush.msra.mxu0 0.0
        %1363 = vmatpush.msra.mxu0 0.0
        %1364 = vmatpush.msra.mxu0 0.0
        %1365 = vmatpush.msra.mxu0 0.0
        %1366 = vmatpush.msra.mxu0 0.0
        %1367 = vmatpush.msra.mxu0 0.0
        %1368 = vmatpush.msra.mxu0 0.0
        %1369 = vmatpush.msra.mxu0 0.0
        %1370 = vmatpush.msra.mxu0 %v1344
        %1371 = vmatpush.msra.mxu0 %v1342
        %1372 = vmatpush.msra.mxu0 %v1340
        %1373 = vmatpush.msra.mxu0 %v1338
        %1374 = vmatmul.f32.gmra.mxu0 %v1347
        %v1375 = vpop.f32.mrf.mxu0
        %v1376 = vadd.f32 0.0, %v1375
        %1377 = vmatmul.f32.gmra.mxu0 %v1350
        %v1378 = vpop.f32.mrf.mxu0
        %v1379 = vadd.f32 0.0, %v1378
        %1380 = vmatmul.f32.gmra.mxu0 %v1353
        %v1381 = vpop.f32.mrf.mxu0
        %v1382 = vadd.f32 0.0, %v1381
        %1383 = vmatmul.f32.gmra.mxu0 %v1356
        %v1384 = vpop.f32.mrf.mxu0
        %v1385 = vadd.f32 0.0, %v1384
        %1386 = vdwg.mxu0
        %1387 = vmatpush.msra.mxu0 0.0
        %1388 = vmatpush.msra.mxu0 0.0
        %1389 = vmatpush.msra.mxu0 0.0
        %1390 = vmatpush.msra.mxu0 0.0
        %1391 = vmatpush.msra.mxu0 0.0
        %1392 = vmatpush.msra.mxu0 0.0
        %1393 = vmatpush.msra.mxu0 0.0
        %1394 = vmatpush.msra.mxu0 0.0
        %1395 = vmatpush.msra.mxu0 0.0
        %1396 = vmatpush.msra.mxu0 0.0
        %1397 = vmatpush.msra.mxu0 0.0
        %1398 = vmatpush.msra.mxu0 0.0
        %1399 = vmatpush.msra.mxu0 %v1345
        %1400 = vmatpush.msra.mxu0 %v1343
        %1401 = vmatpush.msra.mxu0 %v1341
        %1402 = vmatpush.msra.mxu0 %v1339
        %1403 = vmatmul.f32.gmra.mxu0 %v1347
        %v1404 = vpop.f32.mrf.mxu0
        %v1405 = vadd.f32 0.0, %v1404
        %1406 = vmatmul.f32.gmra.mxu0 %v1350
        %v1407 = vpop.f32.mrf.mxu0
        %v1408 = vadd.f32 0.0, %v1407
        %1409 = vmatmul.f32.gmra.mxu0 %v1353
        %v1410 = vpop.f32.mrf.mxu0
        %v1411 = vadd.f32 0.0, %v1410
        %1412 = vmatmul.f32.gmra.mxu0 %v1356
        %v1413 = vpop.f32.mrf.mxu0
        %v1414 = vadd.f32 0.0, %v1413
        %1415 = vdwg.mxu0
        %v1416 = vadd.f32 %v1329, %v1376
        %v1417 = vadd.f32 %v1330, %v1405
        %v1418 = vadd.f32 %v1331, %v1379
        %v1419 = vadd.f32 %v1332, %v1408
        %v1420 = vadd.f32 %v1333, %v1382
        %v1421 = vadd.f32 %v1334, %v1411
        %v1422 = vadd.f32 %v1335, %v1385
        %v1423 = vadd.f32 %v1336, %v1414
        %s1424 = scalar_lea.vmem %s1, 704
        %v1425 = vld [vmem:[%s1424] sm:$0xff]
        %v1426 = vld [vmem:[%s1424 + $0x8] sm:$0xff]
        %v1427 = vld [vmem:[%s1424 + $0x10] sm:$0xff]
        %v1428 = vld [vmem:[%s1424 + $0x18] sm:$0xff]
        %v1429 = vld [vmem:[%s1424 + $0x20] sm:$0xff]
        %v1430 = vld [vmem:[%s1424 + $0x28] sm:$0xff]
        %v1431 = vld [vmem:[%s1424 + $0x30] sm:$0xff]
        %v1432 = vld [vmem:[%s1424 + $0x38] sm:$0xff]
        %v1433 = vrot.slane %v451, 1
        %v1434 = vrot.slane %v452, 1
        %v1435 = vsel %vm476, %v1433, %v1434
        %v1436 = vrot.slane %v453, 1
        %v1437 = vsel %vm476, %v1434, %v1436
        %v1438 = vrot.slane %v454, 1
        %v1439 = vsel %vm476, %v1436, %v1438
        %v1440 = vsel %vm484, %v1435, 0
        %v1442 = vsel %vm484, %v1437, 0
        %v1444 = vsel %vm484, %v1439, 0
        %v1446 = vsel %vm484, %v1438, 0
        %1448 = vmatpush.msra.mxu0 0.0
        %1449 = vmatpush.msra.mxu0 0.0
        %1450 = vmatpush.msra.mxu0 0.0
        %1451 = vmatpush.msra.mxu0 0.0
        %1452 = vmatpush.msra.mxu0 0.0
        %1453 = vmatpush.msra.mxu0 0.0
        %1454 = vmatpush.msra.mxu0 0.0
        %1455 = vmatpush.msra.mxu0 0.0
        %1456 = vmatpush.msra.mxu0 0.0
        %1457 = vmatpush.msra.mxu0 0.0
        %1458 = vmatpush.msra.mxu0 0.0
        %1459 = vmatpush.msra.mxu0 0.0
        %1460 = vmatpush.msra.mxu0 %v1431
        %1461 = vmatpush.msra.mxu0 %v1429
        %1462 = vmatpush.msra.mxu0 %v1427
        %1463 = vmatpush.msra.mxu0 %v1425
        %1464 = vmatmul.f32.gmra.mxu0 %v1440
        %v1465 = vpop.f32.mrf.mxu0
        %v1466 = vadd.f32 0.0, %v1465
        %1467 = vmatmul.f32.gmra.mxu0 %v1442
        %v1468 = vpop.f32.mrf.mxu0
        %v1469 = vadd.f32 0.0, %v1468
        %1470 = vmatmul.f32.gmra.mxu0 %v1444
        %v1471 = vpop.f32.mrf.mxu0
        %v1472 = vadd.f32 0.0, %v1471
        %1473 = vmatmul.f32.gmra.mxu0 %v1446
        %v1474 = vpop.f32.mrf.mxu0
        %v1475 = vadd.f32 0.0, %v1474
        %1476 = vdwg.mxu0
        %1477 = vmatpush.msra.mxu0 0.0
        %1478 = vmatpush.msra.mxu0 0.0
        %1479 = vmatpush.msra.mxu0 0.0
        %1480 = vmatpush.msra.mxu0 0.0
        %1481 = vmatpush.msra.mxu0 0.0
        %1482 = vmatpush.msra.mxu0 0.0
        %1483 = vmatpush.msra.mxu0 0.0
        %1484 = vmatpush.msra.mxu0 0.0
        %1485 = vmatpush.msra.mxu0 0.0
        %1486 = vmatpush.msra.mxu0 0.0
        %1487 = vmatpush.msra.mxu0 0.0
        %1488 = vmatpush.msra.mxu0 0.0
        %1489 = vmatpush.msra.mxu0 %v1432
        %1490 = vmatpush.msra.mxu0 %v1430
        %1491 = vmatpush.msra.mxu0 %v1428
        %1492 = vmatpush.msra.mxu0 %v1426
        %1493 = vmatmul.f32.gmra.mxu0 %v1440
        %v1494 = vpop.f32.mrf.mxu0
        %v1495 = vadd.f32 0.0, %v1494
        %1496 = vmatmul.f32.gmra.mxu0 %v1442
        %v1497 = vpop.f32.mrf.mxu0
        %v1498 = vadd.f32 0.0, %v1497
        %1499 = vmatmul.f32.gmra.mxu0 %v1444
        %v1500 = vpop.f32.mrf.mxu0
        %v1501 = vadd.f32 0.0, %v1500
        %1502 = vmatmul.f32.gmra.mxu0 %v1446
        %v1503 = vpop.f32.mrf.mxu0
        %v1504 = vadd.f32 0.0, %v1503
        %1505 = vdwg.mxu0
        %v1506 = vadd.f32 %v1416, %v1466
        %v1507 = vadd.f32 %v1417, %v1495
        %v1508 = vadd.f32 %v1418, %v1469
        %v1509 = vadd.f32 %v1419, %v1498
        %v1510 = vadd.f32 %v1420, %v1472
        %v1511 = vadd.f32 %v1421, %v1501
        %v1512 = vadd.f32 %v1422, %v1475
        %v1513 = vadd.f32 %v1423, %v1504
        %s1514 = scalar_lea.vmem %s1, 768
        %v1515 = vld [vmem:[%s1514] sm:$0xff]
        %v1516 = vld [vmem:[%s1514 + $0x8] sm:$0xff]
        %v1517 = vld [vmem:[%s1514 + $0x10] sm:$0xff]
        %v1518 = vld [vmem:[%s1514 + $0x18] sm:$0xff]
        %v1519 = vld [vmem:[%s1514 + $0x20] sm:$0xff]
        %v1520 = vld [vmem:[%s1514 + $0x28] sm:$0xff]
        %v1521 = vld [vmem:[%s1514 + $0x30] sm:$0xff]
        %v1522 = vld [vmem:[%s1514 + $0x38] sm:$0xff]
        %v1523 = vrot.slane %v451, 2
        %v1524 = vrot.slane %v452, 2
        %v1525 = vsel %vm626, %v1523, %v1524
        %v1526 = vrot.slane %v453, 2
        %v1527 = vsel %vm626, %v1524, %v1526
        %v1528 = vrot.slane %v454, 2
        %v1529 = vsel %vm626, %v1526, %v1528
        %v1530 = vsel %vm484, %v1525, 0
        %v1532 = vsel %vm484, %v1527, 0
        %v1534 = vsel %vm484, %v1529, 0
        %v1536 = vsel %vm484, %v1528, 0
        %1538 = vmatpush.msra.mxu0 0.0
        %1539 = vmatpush.msra.mxu0 0.0
        %1540 = vmatpush.msra.mxu0 0.0
        %1541 = vmatpush.msra.mxu0 0.0
        %1542 = vmatpush.msra.mxu0 0.0
        %1543 = vmatpush.msra.mxu0 0.0
        %1544 = vmatpush.msra.mxu0 0.0
        %1545 = vmatpush.msra.mxu0 0.0
        %1546 = vmatpush.msra.mxu0 0.0
        %1547 = vmatpush.msra.mxu0 0.0
        %1548 = vmatpush.msra.mxu0 0.0
        %1549 = vmatpush.msra.mxu0 0.0
        %1550 = vmatpush.msra.mxu0 %v1521
        %1551 = vmatpush.msra.mxu0 %v1519
        %1552 = vmatpush.msra.mxu0 %v1517
        %1553 = vmatpush.msra.mxu0 %v1515
        %1554 = vmatmul.f32.gmra.mxu0 %v1530
        %v1555 = vpop.f32.mrf.mxu0
        %v1556 = vadd.f32 0.0, %v1555
        %1557 = vmatmul.f32.gmra.mxu0 %v1532
        %v1558 = vpop.f32.mrf.mxu0
        %v1559 = vadd.f32 0.0, %v1558
        %1560 = vmatmul.f32.gmra.mxu0 %v1534
        %v1561 = vpop.f32.mrf.mxu0
        %v1562 = vadd.f32 0.0, %v1561
        %1563 = vmatmul.f32.gmra.mxu0 %v1536
        %v1564 = vpop.f32.mrf.mxu0
        %v1565 = vadd.f32 0.0, %v1564
        %1566 = vdwg.mxu0
        %1567 = vmatpush.msra.mxu0 0.0
        %1568 = vmatpush.msra.mxu0 0.0
        %1569 = vmatpush.msra.mxu0 0.0
        %1570 = vmatpush.msra.mxu0 0.0
        %1571 = vmatpush.msra.mxu0 0.0
        %1572 = vmatpush.msra.mxu0 0.0
        %1573 = vmatpush.msra.mxu0 0.0
        %1574 = vmatpush.msra.mxu0 0.0
        %1575 = vmatpush.msra.mxu0 0.0
        %1576 = vmatpush.msra.mxu0 0.0
        %1577 = vmatpush.msra.mxu0 0.0
        %1578 = vmatpush.msra.mxu0 0.0
        %1579 = vmatpush.msra.mxu0 %v1522
        %1580 = vmatpush.msra.mxu0 %v1520
        %1581 = vmatpush.msra.mxu0 %v1518
        %1582 = vmatpush.msra.mxu0 %v1516
        %1583 = vmatmul.f32.gmra.mxu0 %v1530
        %v1584 = vpop.f32.mrf.mxu0
        %v1585 = vadd.f32 0.0, %v1584
        %1586 = vmatmul.f32.gmra.mxu0 %v1532
        %v1587 = vpop.f32.mrf.mxu0
        %v1588 = vadd.f32 0.0, %v1587
        %1589 = vmatmul.f32.gmra.mxu0 %v1534
        %v1590 = vpop.f32.mrf.mxu0
        %v1591 = vadd.f32 0.0, %v1590
        %1592 = vmatmul.f32.gmra.mxu0 %v1536
        %v1593 = vpop.f32.mrf.mxu0
        %v1594 = vadd.f32 0.0, %v1593
        %1595 = vdwg.mxu0
        %v1596 = vadd.f32 %v1506, %v1556
        %v1597 = vadd.f32 %v1507, %v1585
        %v1598 = vadd.f32 %v1508, %v1559
        %v1599 = vadd.f32 %v1509, %v1588
        %v1600 = vadd.f32 %v1510, %v1562
        %v1601 = vadd.f32 %v1511, %v1591
        %v1602 = vadd.f32 %v1512, %v1565
        %v1603 = vadd.f32 %v1513, %v1594
        %s1604 = scalar_lea.vmem %s1, 832
        %v1605 = vld [vmem:[%s1604] sm:$0xff]
        %v1606 = vld [vmem:[%s1604 + $0x8] sm:$0xff]
        %v1607 = vld [vmem:[%s1604 + $0x10] sm:$0xff]
        %v1608 = vld [vmem:[%s1604 + $0x18] sm:$0xff]
        %v1609 = vld [vmem:[%s1604 + $0x20] sm:$0xff]
        %v1610 = vld [vmem:[%s1604 + $0x28] sm:$0xff]
        %v1611 = vld [vmem:[%s1604 + $0x30] sm:$0xff]
        %v1612 = vld [vmem:[%s1604 + $0x38] sm:$0xff]
        %v1613 = vrot.slane %v451, 3
        %v1614 = vrot.slane %v452, 3
        %v1615 = vsel %vm717, %v1613, %v1614
        %v1616 = vrot.slane %v453, 3
        %v1617 = vsel %vm717, %v1614, %v1616
        %v1618 = vrot.slane %v454, 3
        %v1619 = vsel %vm717, %v1616, %v1618
        %v1620 = vsel %vm484, %v1615, 0
        %v1622 = vsel %vm484, %v1617, 0
        %v1624 = vsel %vm484, %v1619, 0
        %v1626 = vsel %vm484, %v1618, 0
        %1628 = vmatpush.msra.mxu0 0.0
        %1629 = vmatpush.msra.mxu0 0.0
        %1630 = vmatpush.msra.mxu0 0.0
        %1631 = vmatpush.msra.mxu0 0.0
        %1632 = vmatpush.msra.mxu0 0.0
        %1633 = vmatpush.msra.mxu0 0.0
        %1634 = vmatpush.msra.mxu0 0.0
        %1635 = vmatpush.msra.mxu0 0.0
        %1636 = vmatpush.msra.mxu0 0.0
        %1637 = vmatpush.msra.mxu0 0.0
        %1638 = vmatpush.msra.mxu0 0.0
        %1639 = vmatpush.msra.mxu0 0.0
        %1640 = vmatpush.msra.mxu0 %v1611
        %1641 = vmatpush.msra.mxu0 %v1609
        %1642 = vmatpush.msra.mxu0 %v1607
        %1643 = vmatpush.msra.mxu0 %v1605
        %1644 = vmatmul.f32.gmra.mxu0 %v1620
        %v1645 = vpop.f32.mrf.mxu0
        %v1646 = vadd.f32 0.0, %v1645
        %1647 = vmatmul.f32.gmra.mxu0 %v1622
        %v1648 = vpop.f32.mrf.mxu0
        %v1649 = vadd.f32 0.0, %v1648
        %1650 = vmatmul.f32.gmra.mxu0 %v1624
        %v1651 = vpop.f32.mrf.mxu0
        %v1652 = vadd.f32 0.0, %v1651
        %1653 = vmatmul.f32.gmra.mxu0 %v1626
        %v1654 = vpop.f32.mrf.mxu0
        %v1655 = vadd.f32 0.0, %v1654
        %1656 = vdwg.mxu0
        %1657 = vmatpush.msra.mxu0 0.0
        %1658 = vmatpush.msra.mxu0 0.0
        %1659 = vmatpush.msra.mxu0 0.0
        %1660 = vmatpush.msra.mxu0 0.0
        %1661 = vmatpush.msra.mxu0 0.0
        %1662 = vmatpush.msra.mxu0 0.0
        %1663 = vmatpush.msra.mxu0 0.0
        %1664 = vmatpush.msra.mxu0 0.0
        %1665 = vmatpush.msra.mxu0 0.0
        %1666 = vmatpush.msra.mxu0 0.0
        %1667 = vmatpush.msra.mxu0 0.0
        %1668 = vmatpush.msra.mxu0 0.0
        %1669 = vmatpush.msra.mxu0 %v1612
        %1670 = vmatpush.msra.mxu0 %v1610
        %1671 = vmatpush.msra.mxu0 %v1608
        %1672 = vmatpush.msra.mxu0 %v1606
        %1673 = vmatmul.f32.gmra.mxu0 %v1620
        %v1674 = vpop.f32.mrf.mxu0
        %v1675 = vadd.f32 0.0, %v1674
        %1676 = vmatmul.f32.gmra.mxu0 %v1622
        %v1677 = vpop.f32.mrf.mxu0
        %v1678 = vadd.f32 0.0, %v1677
        %1679 = vmatmul.f32.gmra.mxu0 %v1624
        %v1680 = vpop.f32.mrf.mxu0
        %v1681 = vadd.f32 0.0, %v1680
        %1682 = vmatmul.f32.gmra.mxu0 %v1626
        %v1683 = vpop.f32.mrf.mxu0
        %v1684 = vadd.f32 0.0, %v1683
        %1685 = vdwg.mxu0
        %v1686 = vadd.f32 %v1596, %v1646
        %v1687 = vadd.f32 %v1597, %v1675
        %v1688 = vadd.f32 %v1598, %v1649
        %v1689 = vadd.f32 %v1599, %v1678
        %v1690 = vadd.f32 %v1600, %v1652
        %v1691 = vadd.f32 %v1601, %v1681
        %v1692 = vadd.f32 %v1602, %v1655
        %v1693 = vadd.f32 %v1603, %v1684
        %s1694 = scalar_lea.vmem %s1, 896
        %v1695 = vld [vmem:[%s1694] sm:$0xff]
        %v1696 = vld [vmem:[%s1694 + $0x8] sm:$0xff]
        %v1697 = vld [vmem:[%s1694 + $0x10] sm:$0xff]
        %v1698 = vld [vmem:[%s1694 + $0x18] sm:$0xff]
        %v1699 = vld [vmem:[%s1694 + $0x20] sm:$0xff]
        %v1700 = vld [vmem:[%s1694 + $0x28] sm:$0xff]
        %v1701 = vld [vmem:[%s1694 + $0x30] sm:$0xff]
        %v1702 = vld [vmem:[%s1694 + $0x38] sm:$0xff]
        %v1703 = vrot.slane %v451, 4
        %v1704 = vrot.slane %v452, 4
        %v1705 = vsel %vm808, %v1703, %v1704
        %v1706 = vrot.slane %v453, 4
        %v1707 = vsel %vm808, %v1704, %v1706
        %v1708 = vrot.slane %v454, 4
        %v1709 = vsel %vm808, %v1706, %v1708
        %v1710 = vsel %vm484, %v1705, 0
        %v1712 = vsel %vm484, %v1707, 0
        %v1714 = vsel %vm484, %v1709, 0
        %v1716 = vsel %vm484, %v1708, 0
        %1718 = vmatpush.msra.mxu0 0.0
        %1719 = vmatpush.msra.mxu0 0.0
        %1720 = vmatpush.msra.mxu0 0.0
        %1721 = vmatpush.msra.mxu0 0.0
        %1722 = vmatpush.msra.mxu0 0.0
        %1723 = vmatpush.msra.mxu0 0.0
        %1724 = vmatpush.msra.mxu0 0.0
        %1725 = vmatpush.msra.mxu0 0.0
        %1726 = vmatpush.msra.mxu0 0.0
        %1727 = vmatpush.msra.mxu0 0.0
        %1728 = vmatpush.msra.mxu0 0.0
        %1729 = vmatpush.msra.mxu0 0.0
        %1730 = vmatpush.msra.mxu0 %v1701
        %1731 = vmatpush.msra.mxu0 %v1699
        %1732 = vmatpush.msra.mxu0 %v1697
        %1733 = vmatpush.msra.mxu0 %v1695
        %1734 = vmatmul.f32.gmra.mxu0 %v1710
        %v1735 = vpop.f32.mrf.mxu0
        %v1736 = vadd.f32 0.0, %v1735
        %1737 = vmatmul.f32.gmra.mxu0 %v1712
        %v1738 = vpop.f32.mrf.mxu0
        %v1739 = vadd.f32 0.0, %v1738
        %1740 = vmatmul.f32.gmra.mxu0 %v1714
        %v1741 = vpop.f32.mrf.mxu0
        %v1742 = vadd.f32 0.0, %v1741
        %1743 = vmatmul.f32.gmra.mxu0 %v1716
        %v1744 = vpop.f32.mrf.mxu0
        %v1745 = vadd.f32 0.0, %v1744
        %1746 = vdwg.mxu0
        %1747 = vmatpush.msra.mxu0 0.0
        %1748 = vmatpush.msra.mxu0 0.0
        %1749 = vmatpush.msra.mxu0 0.0
        %1750 = vmatpush.msra.mxu0 0.0
        %1751 = vmatpush.msra.mxu0 0.0
        %1752 = vmatpush.msra.mxu0 0.0
        %1753 = vmatpush.msra.mxu0 0.0
        %1754 = vmatpush.msra.mxu0 0.0
        %1755 = vmatpush.msra.mxu0 0.0
        %1756 = vmatpush.msra.mxu0 0.0
        %1757 = vmatpush.msra.mxu0 0.0
        %1758 = vmatpush.msra.mxu0 0.0
        %1759 = vmatpush.msra.mxu0 %v1702
        %1760 = vmatpush.msra.mxu0 %v1700
        %1761 = vmatpush.msra.mxu0 %v1698
        %1762 = vmatpush.msra.mxu0 %v1696
        %1763 = vmatmul.f32.gmra.mxu0 %v1710
        %v1764 = vpop.f32.mrf.mxu0
        %v1765 = vadd.f32 0.0, %v1764
        %1766 = vmatmul.f32.gmra.mxu0 %v1712
        %v1767 = vpop.f32.mrf.mxu0
        %v1768 = vadd.f32 0.0, %v1767
        %1769 = vmatmul.f32.gmra.mxu0 %v1714
        %v1770 = vpop.f32.mrf.mxu0
        %v1771 = vadd.f32 0.0, %v1770
        %1772 = vmatmul.f32.gmra.mxu0 %v1716
        %v1773 = vpop.f32.mrf.mxu0
        %v1774 = vadd.f32 0.0, %v1773
        %1775 = vdwg.mxu0
        %v1776 = vadd.f32 %v1686, %v1736
        %v1777 = vadd.f32 %v1687, %v1765
        %v1778 = vadd.f32 %v1688, %v1739
        %v1779 = vadd.f32 %v1689, %v1768
        %v1780 = vadd.f32 %v1690, %v1742
        %v1781 = vadd.f32 %v1691, %v1771
        %v1782 = vadd.f32 %v1692, %v1745
        %v1783 = vadd.f32 %v1693, %v1774
        %v1785 = vperm.slane %v438, 0
        %v1786 = vperm.slane %v438, 1
        %v1789 = vadd.f32 %v1776, %v1785
        %v1790 = vadd.f32 %v1777, %v1786
        %v1791 = vadd.f32 %v1778, %v1785
        %v1792 = vadd.f32 %v1779, %v1786
        %v1793 = vadd.f32 %v1780, %v1785
        %v1794 = vadd.f32 %v1781, %v1786
        %v1795 = vadd.f32 %v1782, %v1785
        %v1796 = vadd.f32 %v1783, %v1786
        %v1797 = vmax.f32 %v1789, 0.0
        %v1798 = vmax.f32 %v1790, 0.0
        %v1799 = vmax.f32 %v1791, 0.0
        %v1800 = vmax.f32 %v1792, 0.0
        %v1801 = vmax.f32 %v1793, 0.0
        %v1802 = vmax.f32 %v1794, 0.0
        %v1803 = vmax.f32 %v1795, 0.0
        %v1804 = vmax.f32 %v1796, 0.0
        %1813 = vrot.lane.b32.xlu0 %v1797, 127
        %v1814 = vpop.permute.xlu0 %1813
        %1815 = vrot.lane.b32.xlu0 %v1798, 127
        %v1816 = vpop.permute.xlu0 %1815
        %1817 = vrot.lane.b32.xlu0 %v1799, 127
        %v1818 = vpop.permute.xlu0 %1817
        %1819 = vrot.lane.b32.xlu0 %v1800, 127
        %v1820 = vpop.permute.xlu0 %1819
        %1821 = vrot.lane.b32.xlu0 %v1801, 127
        %v1822 = vpop.permute.xlu0 %1821
        %1823 = vrot.lane.b32.xlu0 %v1802, 127
        %v1824 = vpop.permute.xlu0 %1823
        %1825 = vrot.lane.b32.xlu0 %v1803, 127
        %v1826 = vpop.permute.xlu0 %1825
        %1827 = vrot.lane.b32.xlu0 %v1804, 127
        %v1828 = vpop.permute.xlu0 %1827
        %vm1829 = vcmask 1039360
        %v1830 = vsel %vm1829, %v1814, %v1816
        %v1831 = vsel %vm1829, %v1818, %v1820
        %v1832 = vsel %vm1829, %v1822, %v1824
        %v1833 = vsel %vm1829, %v1826, %v1828
        %v1842 = vmax.f32 %v1797, %v1830
        %v1843 = vmax.f32 %v1798, %v1816
        %v1844 = vmax.f32 %v1799, %v1831
        %v1845 = vmax.f32 %v1800, %v1820
        %v1846 = vmax.f32 %v1801, %v1832
        %v1847 = vmax.f32 %v1802, %v1824
        %v1848 = vmax.f32 %v1803, %v1833
        %v1849 = vmax.f32 %v1804, %v1828
        %v1858 = vrot.slane %v1842, 1
        %v1859 = vrot.slane %v1844, 1
        %v1860 = vsel %vm476, %v1858, %v1859
        %v1861 = vrot.slane %v1843, 1
        %v1862 = vrot.slane %v1845, 1
        %v1863 = vsel %vm476, %v1861, %v1862
        %v1864 = vrot.slane %v1846, 1
        %v1865 = vsel %vm476, %v1859, %v1864
        %v1866 = vrot.slane %v1847, 1
        %v1867 = vsel %vm476, %v1862, %v1866
        %v1868 = vrot.slane %v1848, 1
        %v1869 = vsel %vm476, %v1864, %v1868
        %v1870 = vrot.slane %v1849, 1
        %v1871 = vsel %vm476, %v1866, %v1870
        %v1880 = vmax.f32 %v1842, %v1860
        %v1881 = vmax.f32 %v1843, %v1863
        %v1882 = vmax.f32 %v1844, %v1865
        %v1883 = vmax.f32 %v1845, %v1867
        %v1884 = vmax.f32 %v1846, %v1869
        %v1885 = vmax.f32 %v1847, %v1871
        %v1886 = vmax.f32 %v1848, %v1868
        %v1887 = vmax.f32 %v1849, %v1870
        %vm1888 = vcmask 220160
        %v1890 = vsel %vm1888, %v439, 0
        %v1893 = vsel %vm1888, %v440, 0
        %vm1895 = vcmask 1042432
        %v1897 = vsel %vm1895, %v1886, 0
        %v1900 = vsel %vm1895, %v1887, 0
        %1902 = vmatpush.msra.mxu0 0.0
        %1903 = vmatpush.msra.mxu0 0.0
        %1904 = vmatpush.msra.mxu0 0.0
        %1905 = vmatpush.msra.mxu0 0.0
        %1906 = vmatpush.msra.mxu0 0.0
        %1907 = vmatpush.msra.mxu0 0.0
        %1908 = vmatpush.msra.mxu0 0.0
        %1909 = vmatpush.msra.mxu0 0.0
        %1910 = vmatpush.msra.mxu0 0.0
        %1911 = vmatpush.msra.mxu0 0.0
        %1912 = vmatpush.msra.mxu0 0.0
        %1913 = vmatpush.msra.mxu0 0.0
        %1914 = vmatpush.msra.mxu0 %v1897
        %1915 = vmatpush.msra.mxu0 %v1884
        %1916 = vmatpush.msra.mxu0 %v1882
        %1917 = vmatpush.msra.mxu0 %v1880
        %1918 = vmatmul.f32.gmra.mxu0 %v1890
        %v1919 = vpop.f32.mrf.mxu0
        %v1920 = vadd.f32 0.0, %v1919
        %1921 = vmatmul.f32.gmra.mxu0 %v1893
        %v1922 = vpop.f32.mrf.mxu0
        %v1923 = vadd.f32 0.0, %v1922
        %1924 = vdwg.mxu0
        %1925 = vmatpush.msra.mxu0 0.0
        %1926 = vmatpush.msra.mxu0 0.0
        %1927 = vmatpush.msra.mxu0 0.0
        %1928 = vmatpush.msra.mxu0 0.0
        %1929 = vmatpush.msra.mxu0 0.0
        %1930 = vmatpush.msra.mxu0 0.0
        %1931 = vmatpush.msra.mxu0 0.0
        %1932 = vmatpush.msra.mxu0 0.0
        %1933 = vmatpush.msra.mxu0 0.0
        %1934 = vmatpush.msra.mxu0 0.0
        %1935 = vmatpush.msra.mxu0 0.0
        %1936 = vmatpush.msra.mxu0 0.0
        %1937 = vmatpush.msra.mxu0 %v1900
        %1938 = vmatpush.msra.mxu0 %v1885
        %1939 = vmatpush.msra.mxu0 %v1883
        %1940 = vmatpush.msra.mxu0 %v1881
        %1941 = vmatmul.f32.gmra.mxu0 %v1890
        %v1942 = vpop.f32.mrf.mxu0
        %v1943 = vadd.f32 0.0, %v1942
        %1944 = vmatmul.f32.gmra.mxu0 %v1893
        %v1945 = vpop.f32.mrf.mxu0
        %v1946 = vadd.f32 0.0, %v1945
        %1947 = vdwg.mxu0
        %v1948 = vld [vmem:[%s4] sm:$0xff]
        %v1949 = vld [vmem:[%s4 + $0x8] sm:$0xff]
        %v1950 = vld [vmem:[%s4 + $0x10] sm:$0xff]
        %v1951 = vld [vmem:[%s4 + $0x18] sm:$0xff]
        %v1952 = vld [vmem:[%s4 + $0x20] sm:$0xff]
        %v1953 = vld [vmem:[%s4 + $0x28] sm:$0xff]
        %v1954 = vld [vmem:[%s4 + $0x30] sm:$0xff]
        %v1955 = vld [vmem:[%s4 + $0x38] sm:$0xff]
        %v1956 = vld [vmem:[%s4 + $0x40] sm:$0xff]
        %v1957 = vld [vmem:[%s4 + $0x48] sm:$0xff]
        %v1958 = vld [vmem:[%s4 + $0x50] sm:$0xff]
        %v1959 = vld [vmem:[%s4 + $0x58] sm:$0xff]
        %v1960 = vld [vmem:[%s4 + $0x60] sm:$0xff]
        %v1961 = vld [vmem:[%s4 + $0x68] sm:$0xff]
        %v1962 = vld [vmem:[%s4 + $0x70] sm:$0xff]
        %v1963 = vld [vmem:[%s4 + $0x78] sm:$0xff]
        %v1964 = vld [vmem:[%s4 + $0x80] sm:$0xff]
        %v1965 = vld [vmem:[%s4 + $0x88] sm:$0xff]
        %v1966 = vld [vmem:[%s4 + $0x90] sm:$0xff]
        %v1967 = vld [vmem:[%s4 + $0x98] sm:$0xff]
        %v1968 = vld [vmem:[%s4 + $0xa0] sm:$0xff]
        %v1969 = vld [vmem:[%s4 + $0xa8] sm:$0xff]
        %v1970 = vld [vmem:[%s4 + $0xb0] sm:$0xff]
        %v1971 = vld [vmem:[%s4 + $0xb8] sm:$0xff]
        %v1972 = vld [vmem:[%s4 + $0xc0] sm:$0xff]
        %v1973 = vld [vmem:[%s4 + $0xc8] sm:$0xff]
        %v1974 = vld [vmem:[%s4 + $0xd0] sm:$0xff]
        %v1975 = vld [vmem:[%s4 + $0xd8] sm:$0xff]
        %v1976 = vld [vmem:[%s4 + $0xe0] sm:$0xff]
        %v1977 = vld [vmem:[%s4 + $0xe8] sm:$0xff]
        %v1978 = vld [vmem:[%s4 + $0xf0] sm:$0xff]
        %v1979 = vld [vmem:[%s4 + $0xf8] sm:$0xff]
        %v1980 = vld [vmem:[%s4 + $0x100] sm:$0xff]
        %v1981 = vld [vmem:[%s4 + $0x108] sm:$0xff]
        %v1982 = vld [vmem:[%s4 + $0x110] sm:$0xff]
        %v1983 = vld [vmem:[%s4 + $0x118] sm:$0xff]
        %v1984 = vld [vmem:[%s4 + $0x120] sm:$0xff]
        %v1985 = vld [vmem:[%s4 + $0x128] sm:$0xff]
        %v1986 = vld [vmem:[%s4 + $0x130] sm:$0xff]
        %v1987 = vld [vmem:[%s4 + $0x138] sm:$0xff]
        %v1988 = vld [vmem:[%s4 + $0x140] sm:$0x7f]
        %v1989 = vld [vmem:[%s4 + $0x148] sm:$0x7f]
        %s1990 = scalar_lea.vmem %s4, 336
        %v1991 = vld [vmem:[%s1990] sm:$0xff]
        %v1992 = vld [vmem:[%s1990 + $0x8] sm:$0xff]
        %v1993 = vld [vmem:[%s1990 + $0x10] sm:$0xff]
        %v1994 = vld [vmem:[%s1990 + $0x18] sm:$0xff]
        %v1995 = vld [vmem:[%s1990 + $0x20] sm:$0xff]
        %v1996 = vld [vmem:[%s1990 + $0x28] sm:$0xff]
        %v1997 = vld [vmem:[%s1990 + $0x30] sm:$0xff]
        %v1998 = vld [vmem:[%s1990 + $0x38] sm:$0xff]
        %v1999 = vld [vmem:[%s1990 + $0x40] sm:$0xff]
        %v2000 = vld [vmem:[%s1990 + $0x48] sm:$0xff]
        %v2001 = vld [vmem:[%s1990 + $0x50] sm:$0xff]
        %v2002 = vld [vmem:[%s1990 + $0x58] sm:$0xff]
        %v2003 = vld [vmem:[%s1990 + $0x60] sm:$0xff]
        %v2004 = vld [vmem:[%s1990 + $0x68] sm:$0xff]
        %v2005 = vld [vmem:[%s1990 + $0x70] sm:$0xff]
        %v2006 = vld [vmem:[%s1990 + $0x78] sm:$0xff]
        %v2007 = vld [vmem:[%s1990 + $0x80] sm:$0xff]
        %v2008 = vld [vmem:[%s1990 + $0x88] sm:$0xff]
        %v2009 = vld [vmem:[%s1990 + $0x90] sm:$0xff]
        %v2010 = vld [vmem:[%s1990 + $0x98] sm:$0xff]
        %v2011 = vld [vmem:[%s1990 + $0xa0] sm:$0xff]
        %v2012 = vld [vmem:[%s1990 + $0xa8] sm:$0xff]
        %v2013 = vld [vmem:[%s1990 + $0xb0] sm:$0xff]
        %v2014 = vld [vmem:[%s1990 + $0xb8] sm:$0xff]
        %v2015 = vld [vmem:[%s1990 + $0xc0] sm:$0xff]
        %v2016 = vld [vmem:[%s1990 + $0xc8] sm:$0xff]
        %v2017 = vld [vmem:[%s1990 + $0xd0] sm:$0xff]
        %v2018 = vld [vmem:[%s1990 + $0xd8] sm:$0xff]
        %v2019 = vld [vmem:[%s1990 + $0xe0] sm:$0xff]
        %v2020 = vld [vmem:[%s1990 + $0xe8] sm:$0xff]
        %v2021 = vld [vmem:[%s1990 + $0xf0] sm:$0xff]
        %v2022 = vld [vmem:[%s1990 + $0xf8] sm:$0xff]
        %v2023 = vld [vmem:[%s1990 + $0x100] sm:$0xff]
        %v2024 = vld [vmem:[%s1990 + $0x108] sm:$0xff]
        %v2025 = vld [vmem:[%s1990 + $0x110] sm:$0xff]
        %v2026 = vld [vmem:[%s1990 + $0x118] sm:$0xff]
        %v2027 = vld [vmem:[%s1990 + $0x120] sm:$0xff]
        %v2028 = vld [vmem:[%s1990 + $0x128] sm:$0xff]
        %v2029 = vld [vmem:[%s1990 + $0x130] sm:$0xff]
        %v2030 = vld [vmem:[%s1990 + $0x138] sm:$0xff]
        %v2031 = vld [vmem:[%s1990 + $0x140] sm:$0x7f]
        %v2032 = vld [vmem:[%s1990 + $0x148] sm:$0x7f]
        %v2037 = vrot.slane %v1920, 1
        %v2038 = vrot.slane %v1923, 1
        %v2039 = vsel %vm476, %v2037, %v2038
        %v2040 = vrot.slane %v1943, 1
        %v2041 = vrot.slane %v1946, 1
        %v2042 = vsel %vm476, %v2040, %v2041
        %vm2045 = vcmask 318464
        %v2046 = vsel %vm2045, %v2042, 0
        %v2048 = vsel %vm2045, %v2041, 0
        %v2051 = vsel %vm476, %v2031, 0
        %v2054 = vsel %vm476, %v2032, 0
        %2056 = vmatpush.msra.mxu0 %v2021
        %2057 = vmatpush.msra.mxu0 %v2019
        %2058 = vmatpush.msra.mxu0 %v2017
        %2059 = vmatpush.msra.mxu0 %v2015
        %2060 = vmatpush.msra.mxu0 %v2013
        %2061 = vmatpush.msra.mxu0 %v2011
        %2062 = vmatpush.msra.mxu0 %v2009
        %2063 = vmatpush.msra.mxu0 %v2007
        %2064 = vmatpush.msra.mxu0 %v2005
        %2065 = vmatpush.msra.mxu0 %v2003
        %2066 = vmatpush.msra.mxu0 %v2001
        %2067 = vmatpush.msra.mxu0 %v1999
        %2068 = vmatpush.msra.mxu0 %v1997
        %2069 = vmatpush.msra.mxu0 %v1995
        %2070 = vmatpush.msra.mxu0 %v1993
        %2071 = vmatpush.msra.mxu0 %v1991
        %2072 = vmatmul.f32.gmra.mxu0 %v2039
        %v2073 = vpop.f32.mrf.mxu0
        %v2074 = vadd.f32 0.0, %v2073
        %2075 = vmatmul.f32.gmra.mxu0 %v2038
        %v2076 = vpop.f32.mrf.mxu0
        %v2077 = vadd.f32 0.0, %v2076
        %2078 = vdwg.mxu0
        %2079 = vmatpush.msra.mxu0 0.0
        %2080 = vmatpush.msra.mxu0 0.0
        %2081 = vmatpush.msra.mxu0 0.0
        %2082 = vmatpush.msra.mxu0 0.0
        %2083 = vmatpush.msra.mxu0 0.0
        %2084 = vmatpush.msra.mxu0 0.0
        %2085 = vmatpush.msra.mxu0 0.0
        %2086 = vmatpush.msra.mxu0 0.0
        %2087 = vmatpush.msra.mxu0 0.0
        %2088 = vmatpush.msra.mxu0 0.0
        %2089 = vmatpush.msra.mxu0 0.0
        %2090 = vmatpush.msra.mxu0 %v2051
        %2091 = vmatpush.msra.mxu0 %v2029
        %2092 = vmatpush.msra.mxu0 %v2027
        %2093 = vmatpush.msra.mxu0 %v2025
        %2094 = vmatpush.msra.mxu0 %v2023
        %2095 = vmatmul.f32.gmra.mxu0 %v2046
        %v2096 = vpop.f32.mrf.mxu0
        %v2097 = vadd.f32 %v2074, %v2096
        %2098 = vmatmul.f32.gmra.mxu0 %v2048
        %v2099 = vpop.f32.mrf.mxu0
        %v2100 = vadd.f32 %v2077, %v2099
        %2101 = vdwg.mxu0
        %2102 = vmatpush.msra.mxu0 %v2022
        %2103 = vmatpush.msra.mxu0 %v2020
        %2104 = vmatpush.msra.mxu0 %v2018
        %2105 = vmatpush.msra.mxu0 %v2016
        %2106 = vmatpush.msra.mxu0 %v2014
        %2107 = vmatpush.msra.mxu0 %v2012
        %2108 = vmatpush.msra.mxu0 %v2010
        %2109 = vmatpush.msra.mxu0 %v2008
        %2110 = vmatpush.msra.mxu0 %v2006
        %2111 = vmatpush.msra.mxu0 %v2004
        %2112 = vmatpush.msra.mxu0 %v2002
        %2113 = vmatpush.msra.mxu0 %v2000
        %2114 = vmatpush.msra.mxu0 %v1998
        %2115 = vmatpush.msra.mxu0 %v1996
        %2116 = vmatpush.msra.mxu0 %v1994
        %2117 = vmatpush.msra.mxu0 %v1992
        %2118 = vmatmul.f32.gmra.mxu0 %v2039
        %v2119 = vpop.f32.mrf.mxu0
        %v2120 = vadd.f32 0.0, %v2119
        %2121 = vmatmul.f32.gmra.mxu0 %v2038
        %v2122 = vpop.f32.mrf.mxu0
        %v2123 = vadd.f32 0.0, %v2122
        %2124 = vdwg.mxu0
        %2125 = vmatpush.msra.mxu0 0.0
        %2126 = vmatpush.msra.mxu0 0.0
        %2127 = vmatpush.msra.mxu0 0.0
        %2128 = vmatpush.msra.mxu0 0.0
        %2129 = vmatpush.msra.mxu0 0.0
        %2130 = vmatpush.msra.mxu0 0.0
        %2131 = vmatpush.msra.mxu0 0.0
        %2132 = vmatpush.msra.mxu0 0.0
        %2133 = vmatpush.msra.mxu0 0.0
        %2134 = vmatpush.msra.mxu0 0.0
        %2135 = vmatpush.msra.mxu0 0.0
        %2136 = vmatpush.msra.mxu0 %v2054
        %2137 = vmatpush.msra.mxu0 %v2030
        %2138 = vmatpush.msra.mxu0 %v2028
        %2139 = vmatpush.msra.mxu0 %v2026
        %2140 = vmatpush.msra.mxu0 %v2024
        %2141 = vmatmul.f32.gmra.mxu0 %v2046
        %v2142 = vpop.f32.mrf.mxu0
        %v2143 = vadd.f32 %v2120, %v2142
        %2144 = vmatmul.f32.gmra.mxu0 %v2048
        %v2145 = vpop.f32.mrf.mxu0
        %v2146 = vadd.f32 %v2123, %v2145
        %2147 = vdwg.mxu0
        %v2148 = vsel %vm2045, %v1943, 0
        %v2150 = vsel %vm2045, %v1946, 0
        %v2153 = vsel %vm476, %v1988, 0
        %v2156 = vsel %vm476, %v1989, 0
        %2158 = vmatpush.msra.mxu0 %v1978
        %2159 = vmatpush.msra.mxu0 %v1976
        %2160 = vmatpush.msra.mxu0 %v1974
        %2161 = vmatpush.msra.mxu0 %v1972
        %2162 = vmatpush.msra.mxu0 %v1970
        %2163 = vmatpush.msra.mxu0 %v1968
        %2164 = vmatpush.msra.mxu0 %v1966
        %2165 = vmatpush.msra.mxu0 %v1964
        %2166 = vmatpush.msra.mxu0 %v1962
        %2167 = vmatpush.msra.mxu0 %v1960
        %2168 = vmatpush.msra.mxu0 %v1958
        %2169 = vmatpush.msra.mxu0 %v1956
        %2170 = vmatpush.msra.mxu0 %v1954
        %2171 = vmatpush.msra.mxu0 %v1952
        %2172 = vmatpush.msra.mxu0 %v1950
        %2173 = vmatpush.msra.mxu0 %v1948
        %2174 = vmatmul.f32.gmra.mxu0 %v1920
        %v2175 = vpop.f32.mrf.mxu0
        %v2176 = vadd.f32 %v2097, %v2175
        %2177 = vmatmul.f32.gmra.mxu0 %v1923
        %v2178 = vpop.f32.mrf.mxu0
        %v2179 = vadd.f32 %v2100, %v2178
        %2180 = vdwg.mxu0
        %2181 = vmatpush.msra.mxu0 0.0
        %2182 = vmatpush.msra.mxu0 0.0
        %2183 = vmatpush.msra.mxu0 0.0
        %2184 = vmatpush.msra.mxu0 0.0
        %2185 = vmatpush.msra.mxu0 0.0
        %2186 = vmatpush.msra.mxu0 0.0
        %2187 = vmatpush.msra.mxu0 0.0
        %2188 = vmatpush.msra.mxu0 0.0
        %2189 = vmatpush.msra.mxu0 0.0
        %2190 = vmatpush.msra.mxu0 0.0
        %2191 = vmatpush.msra.mxu0 0.0
        %2192 = vmatpush.msra.mxu0 %v2153
        %2193 = vmatpush.msra.mxu0 %v1986
        %2194 = vmatpush.msra.mxu0 %v1984
        %2195 = vmatpush.msra.mxu0 %v1982
        %2196 = vmatpush.msra.mxu0 %v1980
        %2197 = vmatmul.f32.gmra.mxu0 %v2148
        %v2198 = vpop.f32.mrf.mxu0
        %v2199 = vadd.f32 %v2176, %v2198
        %2200 = vmatmul.f32.gmra.mxu0 %v2150
        %v2201 = vpop.f32.mrf.mxu0
        %v2202 = vadd.f32 %v2179, %v2201
        %2203 = vdwg.mxu0
        %2204 = vmatpush.msra.mxu0 %v1979
        %2205 = vmatpush.msra.mxu0 %v1977
        %2206 = vmatpush.msra.mxu0 %v1975
        %2207 = vmatpush.msra.mxu0 %v1973
        %2208 = vmatpush.msra.mxu0 %v1971
        %2209 = vmatpush.msra.mxu0 %v1969
        %2210 = vmatpush.msra.mxu0 %v1967
        %2211 = vmatpush.msra.mxu0 %v1965
        %2212 = vmatpush.msra.mxu0 %v1963
        %2213 = vmatpush.msra.mxu0 %v1961
        %2214 = vmatpush.msra.mxu0 %v1959
        %2215 = vmatpush.msra.mxu0 %v1957
        %2216 = vmatpush.msra.mxu0 %v1955
        %2217 = vmatpush.msra.mxu0 %v1953
        %2218 = vmatpush.msra.mxu0 %v1951
        %2219 = vmatpush.msra.mxu0 %v1949
        %2220 = vmatmul.f32.gmra.mxu0 %v1920
        %v2221 = vpop.f32.mrf.mxu0
        %v2222 = vadd.f32 %v2143, %v2221
        %2223 = vmatmul.f32.gmra.mxu0 %v1923
        %v2224 = vpop.f32.mrf.mxu0
        %v2225 = vadd.f32 %v2146, %v2224
        %2226 = vdwg.mxu0
        %2227 = vmatpush.msra.mxu0 0.0
        %2228 = vmatpush.msra.mxu0 0.0
        %2229 = vmatpush.msra.mxu0 0.0
        %2230 = vmatpush.msra.mxu0 0.0
        %2231 = vmatpush.msra.mxu0 0.0
        %2232 = vmatpush.msra.mxu0 0.0
        %2233 = vmatpush.msra.mxu0 0.0
        %2234 = vmatpush.msra.mxu0 0.0
        %2235 = vmatpush.msra.mxu0 0.0
        %2236 = vmatpush.msra.mxu0 0.0
        %2237 = vmatpush.msra.mxu0 0.0
        %2238 = vmatpush.msra.mxu0 %v2156
        %2239 = vmatpush.msra.mxu0 %v1987
        %2240 = vmatpush.msra.mxu0 %v1985
        %2241 = vmatpush.msra.mxu0 %v1983
        %2242 = vmatpush.msra.mxu0 %v1981
        %2243 = vmatmul.f32.gmra.mxu0 %v2148
        %v2244 = vpop.f32.mrf.mxu0
        %v2245 = vadd.f32 %v2222, %v2244
        %2246 = vmatmul.f32.gmra.mxu0 %v2150
        %v2247 = vpop.f32.mrf.mxu0
        %v2248 = vadd.f32 %v2225, %v2247
        %2249 = vdwg.mxu0
        %s2250 = scalar_lea.vmem %s4, 672
        %v2251 = vld [vmem:[%s2250] sm:$0xff]
        %v2252 = vld [vmem:[%s2250 + $0x8] sm:$0xff]
        %v2253 = vld [vmem:[%s2250 + $0x10] sm:$0xff]
        %v2254 = vld [vmem:[%s2250 + $0x18] sm:$0xff]
        %v2255 = vld [vmem:[%s2250 + $0x20] sm:$0xff]
        %v2256 = vld [vmem:[%s2250 + $0x28] sm:$0xff]
        %v2257 = vld [vmem:[%s2250 + $0x30] sm:$0xff]
        %v2258 = vld [vmem:[%s2250 + $0x38] sm:$0xff]
        %v2259 = vld [vmem:[%s2250 + $0x40] sm:$0xff]
        %v2260 = vld [vmem:[%s2250 + $0x48] sm:$0xff]
        %v2261 = vld [vmem:[%s2250 + $0x50] sm:$0xff]
        %v2262 = vld [vmem:[%s2250 + $0x58] sm:$0xff]
        %v2263 = vld [vmem:[%s2250 + $0x60] sm:$0xff]
        %v2264 = vld [vmem:[%s2250 + $0x68] sm:$0xff]
        %v2265 = vld [vmem:[%s2250 + $0x70] sm:$0xff]
        %v2266 = vld [vmem:[%s2250 + $0x78] sm:$0xff]
        %v2267 = vld [vmem:[%s2250 + $0x80] sm:$0xff]
        %v2268 = vld [vmem:[%s2250 + $0x88] sm:$0xff]
        %v2269 = vld [vmem:[%s2250 + $0x90] sm:$0xff]
        %v2270 = vld [vmem:[%s2250 + $0x98] sm:$0xff]
        %v2271 = vld [vmem:[%s2250 + $0xa0] sm:$0xff]
        %v2272 = vld [vmem:[%s2250 + $0xa8] sm:$0xff]
        %v2273 = vld [vmem:[%s2250 + $0xb0] sm:$0xff]
        %v2274 = vld [vmem:[%s2250 + $0xb8] sm:$0xff]
        %v2275 = vld [vmem:[%s2250 + $0xc0] sm:$0xff]
        %v2276 = vld [vmem:[%s2250 + $0xc8] sm:$0xff]
        %v2277 = vld [vmem:[%s2250 + $0xd0] sm:$0xff]
        %v2278 = vld [vmem:[%s2250 + $0xd8] sm:$0xff]
        %v2279 = vld [vmem:[%s2250 + $0xe0] sm:$0xff]
        %v2280 = vld [vmem:[%s2250 + $0xe8] sm:$0xff]
        %v2281 = vld [vmem:[%s2250 + $0xf0] sm:$0xff]
        %v2282 = vld [vmem:[%s2250 + $0xf8] sm:$0xff]
        %v2283 = vld [vmem:[%s2250 + $0x100] sm:$0xff]
        %v2284 = vld [vmem:[%s2250 + $0x108] sm:$0xff]
        %v2285 = vld [vmem:[%s2250 + $0x110] sm:$0xff]
        %v2286 = vld [vmem:[%s2250 + $0x118] sm:$0xff]
        %v2287 = vld [vmem:[%s2250 + $0x120] sm:$0xff]
        %v2288 = vld [vmem:[%s2250 + $0x128] sm:$0xff]
        %v2289 = vld [vmem:[%s2250 + $0x130] sm:$0xff]
        %v2290 = vld [vmem:[%s2250 + $0x138] sm:$0xff]
        %v2291 = vld [vmem:[%s2250 + $0x140] sm:$0x7f]
        %v2292 = vld [vmem:[%s2250 + $0x148] sm:$0x7f]
        %v2293 = vrot.slane %v1920, 2
        %v2294 = vrot.slane %v1923, 2
        %v2295 = vsel %vm626, %v2293, %v2294
        %v2296 = vrot.slane %v1943, 2
        %v2297 = vrot.slane %v1946, 2
        %v2298 = vsel %vm626, %v2296, %v2297
        %v2301 = vsel %vm2045, %v2298, 0
        %v2303 = vsel %vm2045, %v2297, 0
        %v2306 = vsel %vm476, %v2291, 0
        %v2309 = vsel %vm476, %v2292, 0
        %2311 = vmatpush.msra.mxu0 %v2281
        %2312 = vmatpush.msra.mxu0 %v2279
        %2313 = vmatpush.msra.mxu0 %v2277
        %2314 = vmatpush.msra.mxu0 %v2275
        %2315 = vmatpush.msra.mxu0 %v2273
        %2316 = vmatpush.msra.mxu0 %v2271
        %2317 = vmatpush.msra.mxu0 %v2269
        %2318 = vmatpush.msra.mxu0 %v2267
        %2319 = vmatpush.msra.mxu0 %v2265
        %2320 = vmatpush.msra.mxu0 %v2263
        %2321 = vmatpush.msra.mxu0 %v2261
        %2322 = vmatpush.msra.mxu0 %v2259
        %2323 = vmatpush.msra.mxu0 %v2257
        %2324 = vmatpush.msra.mxu0 %v2255
        %2325 = vmatpush.msra.mxu0 %v2253
        %2326 = vmatpush.msra.mxu0 %v2251
        %2327 = vmatmul.f32.gmra.mxu0 %v2295
        %v2328 = vpop.f32.mrf.mxu0
        %v2329 = vadd.f32 0.0, %v2328
        %2330 = vmatmul.f32.gmra.mxu0 %v2294
        %v2331 = vpop.f32.mrf.mxu0
        %v2332 = vadd.f32 0.0, %v2331
        %2333 = vdwg.mxu0
        %2334 = vmatpush.msra.mxu0 0.0
        %2335 = vmatpush.msra.mxu0 0.0
        %2336 = vmatpush.msra.mxu0 0.0
        %2337 = vmatpush.msra.mxu0 0.0
        %2338 = vmatpush.msra.mxu0 0.0
        %2339 = vmatpush.msra.mxu0 0.0
        %2340 = vmatpush.msra.mxu0 0.0
        %2341 = vmatpush.msra.mxu0 0.0
        %2342 = vmatpush.msra.mxu0 0.0
        %2343 = vmatpush.msra.mxu0 0.0
        %2344 = vmatpush.msra.mxu0 0.0
        %2345 = vmatpush.msra.mxu0 %v2306
        %2346 = vmatpush.msra.mxu0 %v2289
        %2347 = vmatpush.msra.mxu0 %v2287
        %2348 = vmatpush.msra.mxu0 %v2285
        %2349 = vmatpush.msra.mxu0 %v2283
        %2350 = vmatmul.f32.gmra.mxu0 %v2301
        %v2351 = vpop.f32.mrf.mxu0
        %v2352 = vadd.f32 %v2329, %v2351
        %2353 = vmatmul.f32.gmra.mxu0 %v2303
        %v2354 = vpop.f32.mrf.mxu0
        %v2355 = vadd.f32 %v2332, %v2354
        %2356 = vdwg.mxu0
        %2357 = vmatpush.msra.mxu0 %v2282
        %2358 = vmatpush.msra.mxu0 %v2280
        %2359 = vmatpush.msra.mxu0 %v2278
        %2360 = vmatpush.msra.mxu0 %v2276
        %2361 = vmatpush.msra.mxu0 %v2274
        %2362 = vmatpush.msra.mxu0 %v2272
        %2363 = vmatpush.msra.mxu0 %v2270
        %2364 = vmatpush.msra.mxu0 %v2268
        %2365 = vmatpush.msra.mxu0 %v2266
        %2366 = vmatpush.msra.mxu0 %v2264
        %2367 = vmatpush.msra.mxu0 %v2262
        %2368 = vmatpush.msra.mxu0 %v2260
        %2369 = vmatpush.msra.mxu0 %v2258
        %2370 = vmatpush.msra.mxu0 %v2256
        %2371 = vmatpush.msra.mxu0 %v2254
        %2372 = vmatpush.msra.mxu0 %v2252
        %2373 = vmatmul.f32.gmra.mxu0 %v2295
        %v2374 = vpop.f32.mrf.mxu0
        %v2375 = vadd.f32 0.0, %v2374
        %2376 = vmatmul.f32.gmra.mxu0 %v2294
        %v2377 = vpop.f32.mrf.mxu0
        %v2378 = vadd.f32 0.0, %v2377
        %2379 = vdwg.mxu0
        %2380 = vmatpush.msra.mxu0 0.0
        %2381 = vmatpush.msra.mxu0 0.0
        %2382 = vmatpush.msra.mxu0 0.0
        %2383 = vmatpush.msra.mxu0 0.0
        %2384 = vmatpush.msra.mxu0 0.0
        %2385 = vmatpush.msra.mxu0 0.0
        %2386 = vmatpush.msra.mxu0 0.0
        %2387 = vmatpush.msra.mxu0 0.0
        %2388 = vmatpush.msra.mxu0 0.0
        %2389 = vmatpush.msra.mxu0 0.0
        %2390 = vmatpush.msra.mxu0 0.0
        %2391 = vmatpush.msra.mxu0 %v2309
        %2392 = vmatpush.msra.mxu0 %v2290
        %2393 = vmatpush.msra.mxu0 %v2288
        %2394 = vmatpush.msra.mxu0 %v2286
        %2395 = vmatpush.msra.mxu0 %v2284
        %2396 = vmatmul.f32.gmra.mxu0 %v2301
        %v2397 = vpop.f32.mrf.mxu0
        %v2398 = vadd.f32 %v2375, %v2397
        %2399 = vmatmul.f32.gmra.mxu0 %v2303
        %v2400 = vpop.f32.mrf.mxu0
        %v2401 = vadd.f32 %v2378, %v2400
        %2402 = vdwg.mxu0
        %v2403 = vadd.f32 %v2199, %v2352
        %v2404 = vadd.f32 %v2245, %v2398
        %v2405 = vadd.f32 %v2202, %v2355
        %v2406 = vadd.f32 %v2248, %v2401
        %s2407 = scalar_lea.vmem %s4, 1008
        %v2408 = vld [vmem:[%s2407] sm:$0xff]
        %v2409 = vld [vmem:[%s2407 + $0x8] sm:$0xff]
        %v2410 = vld [vmem:[%s2407 + $0x10] sm:$0xff]
        %v2411 = vld [vmem:[%s2407 + $0x18] sm:$0xff]
        %v2412 = vld [vmem:[%s2407 + $0x20] sm:$0xff]
        %v2413 = vld [vmem:[%s2407 + $0x28] sm:$0xff]
        %v2414 = vld [vmem:[%s2407 + $0x30] sm:$0xff]
        %v2415 = vld [vmem:[%s2407 + $0x38] sm:$0xff]
        %v2416 = vld [vmem:[%s2407 + $0x40] sm:$0xff]
        %v2417 = vld [vmem:[%s2407 + $0x48] sm:$0xff]
        %v2418 = vld [vmem:[%s2407 + $0x50] sm:$0xff]
        %v2419 = vld [vmem:[%s2407 + $0x58] sm:$0xff]
        %v2420 = vld [vmem:[%s2407 + $0x60] sm:$0xff]
        %v2421 = vld [vmem:[%s2407 + $0x68] sm:$0xff]
        %v2422 = vld [vmem:[%s2407 + $0x70] sm:$0xff]
        %v2423 = vld [vmem:[%s2407 + $0x78] sm:$0xff]
        %v2424 = vld [vmem:[%s2407 + $0x80] sm:$0xff]
        %v2425 = vld [vmem:[%s2407 + $0x88] sm:$0xff]
        %v2426 = vld [vmem:[%s2407 + $0x90] sm:$0xff]
        %v2427 = vld [vmem:[%s2407 + $0x98] sm:$0xff]
        %v2428 = vld [vmem:[%s2407 + $0xa0] sm:$0xff]
        %v2429 = vld [vmem:[%s2407 + $0xa8] sm:$0xff]
        %v2430 = vld [vmem:[%s2407 + $0xb0] sm:$0xff]
        %v2431 = vld [vmem:[%s2407 + $0xb8] sm:$0xff]
        %v2432 = vld [vmem:[%s2407 + $0xc0] sm:$0xff]
        %v2433 = vld [vmem:[%s2407 + $0xc8] sm:$0xff]
        %v2434 = vld [vmem:[%s2407 + $0xd0] sm:$0xff]
        %v2435 = vld [vmem:[%s2407 + $0xd8] sm:$0xff]
        %v2436 = vld [vmem:[%s2407 + $0xe0] sm:$0xff]
        %v2437 = vld [vmem:[%s2407 + $0xe8] sm:$0xff]
        %v2438 = vld [vmem:[%s2407 + $0xf0] sm:$0xff]
        %v2439 = vld [vmem:[%s2407 + $0xf8] sm:$0xff]
        %v2440 = vld [vmem:[%s2407 + $0x100] sm:$0xff]
        %v2441 = vld [vmem:[%s2407 + $0x108] sm:$0xff]
        %v2442 = vld [vmem:[%s2407 + $0x110] sm:$0xff]
        %v2443 = vld [vmem:[%s2407 + $0x118] sm:$0xff]
        %v2444 = vld [vmem:[%s2407 + $0x120] sm:$0xff]
        %v2445 = vld [vmem:[%s2407 + $0x128] sm:$0xff]
        %v2446 = vld [vmem:[%s2407 + $0x130] sm:$0xff]
        %v2447 = vld [vmem:[%s2407 + $0x138] sm:$0xff]
        %v2448 = vld [vmem:[%s2407 + $0x140] sm:$0x7f]
        %v2449 = vld [vmem:[%s2407 + $0x148] sm:$0x7f]
        %v2450 = vrot.slane %v1920, 3
        %v2451 = vrot.slane %v1923, 3
        %v2452 = vsel %vm717, %v2450, %v2451
        %v2453 = vrot.slane %v1943, 3
        %v2454 = vrot.slane %v1946, 3
        %v2455 = vsel %vm717, %v2453, %v2454
        %v2458 = vsel %vm2045, %v2455, 0
        %v2460 = vsel %vm2045, %v2454, 0
        %v2463 = vsel %vm476, %v2448, 0
        %v2466 = vsel %vm476, %v2449, 0
        %2468 = vmatpush.msra.mxu0 %v2438
        %2469 = vmatpush.msra.mxu0 %v2436
        %2470 = vmatpush.msra.mxu0 %v2434
        %2471 = vmatpush.msra.mxu0 %v2432
        %2472 = vmatpush.msra.mxu0 %v2430
        %2473 = vmatpush.msra.mxu0 %v2428
        %2474 = vmatpush.msra.mxu0 %v2426
        %2475 = vmatpush.msra.mxu0 %v2424
        %2476 = vmatpush.msra.mxu0 %v2422
        %2477 = vmatpush.msra.mxu0 %v2420
        %2478 = vmatpush.msra.mxu0 %v2418
        %2479 = vmatpush.msra.mxu0 %v2416
        %2480 = vmatpush.msra.mxu0 %v2414
        %2481 = vmatpush.msra.mxu0 %v2412
        %2482 = vmatpush.msra.mxu0 %v2410
        %2483 = vmatpush.msra.mxu0 %v2408
        %2484 = vmatmul.f32.gmra.mxu0 %v2452
        %v2485 = vpop.f32.mrf.mxu0
        %v2486 = vadd.f32 0.0, %v2485
        %2487 = vmatmul.f32.gmra.mxu0 %v2451
        %v2488 = vpop.f32.mrf.mxu0
        %v2489 = vadd.f32 0.0, %v2488
        %2490 = vdwg.mxu0
        %2491 = vmatpush.msra.mxu0 0.0
        %2492 = vmatpush.msra.mxu0 0.0
        %2493 = vmatpush.msra.mxu0 0.0
        %2494 = vmatpush.msra.mxu0 0.0
        %2495 = vmatpush.msra.mxu0 0.0
        %2496 = vmatpush.msra.mxu0 0.0
        %2497 = vmatpush.msra.mxu0 0.0
        %2498 = vmatpush.msra.mxu0 0.0
        %2499 = vmatpush.msra.mxu0 0.0
        %2500 = vmatpush.msra.mxu0 0.0
        %2501 = vmatpush.msra.mxu0 0.0
        %2502 = vmatpush.msra.mxu0 %v2463
        %2503 = vmatpush.msra.mxu0 %v2446
        %2504 = vmatpush.msra.mxu0 %v2444
        %2505 = vmatpush.msra.mxu0 %v2442
        %2506 = vmatpush.msra.mxu0 %v2440
        %2507 = vmatmul.f32.gmra.mxu0 %v2458
        %v2508 = vpop.f32.mrf.mxu0
        %v2509 = vadd.f32 %v2486, %v2508
        %2510 = vmatmul.f32.gmra.mxu0 %v2460
        %v2511 = vpop.f32.mrf.mxu0
        %v2512 = vadd.f32 %v2489, %v2511
        %2513 = vdwg.mxu0
        %2514 = vmatpush.msra.mxu0 %v2439
        %2515 = vmatpush.msra.mxu0 %v2437
        %2516 = vmatpush.msra.mxu0 %v2435
        %2517 = vmatpush.msra.mxu0 %v2433
        %2518 = vmatpush.msra.mxu0 %v2431
        %2519 = vmatpush.msra.mxu0 %v2429
        %2520 = vmatpush.msra.mxu0 %v2427
        %2521 = vmatpush.msra.mxu0 %v2425
        %2522 = vmatpush.msra.mxu0 %v2423
        %2523 = vmatpush.msra.mxu0 %v2421
        %2524 = vmatpush.msra.mxu0 %v2419
        %2525 = vmatpush.msra.mxu0 %v2417
        %2526 = vmatpush.msra.mxu0 %v2415
        %2527 = vmatpush.msra.mxu0 %v2413
        %2528 = vmatpush.msra.mxu0 %v2411
        %2529 = vmatpush.msra.mxu0 %v2409
        %2530 = vmatmul.f32.gmra.mxu0 %v2452
        %v2531 = vpop.f32.mrf.mxu0
        %v2532 = vadd.f32 0.0, %v2531
        %2533 = vmatmul.f32.gmra.mxu0 %v2451
        %v2534 = vpop.f32.mrf.mxu0
        %v2535 = vadd.f32 0.0, %v2534
        %2536 = vdwg.mxu0
        %2537 = vmatpush.msra.mxu0 0.0
        %2538 = vmatpush.msra.mxu0 0.0
        %2539 = vmatpush.msra.mxu0 0.0
        %2540 = vmatpush.msra.mxu0 0.0
        %2541 = vmatpush.msra.mxu0 0.0
        %2542 = vmatpush.msra.mxu0 0.0
        %2543 = vmatpush.msra.mxu0 0.0
        %2544 = vmatpush.msra.mxu0 0.0
        %2545 = vmatpush.msra.mxu0 0.0
        %2546 = vmatpush.msra.mxu0 0.0
        %2547 = vmatpush.msra.mxu0 0.0
        %2548 = vmatpush.msra.mxu0 %v2466
        %2549 = vmatpush.msra.mxu0 %v2447
        %2550 = vmatpush.msra.mxu0 %v2445
        %2551 = vmatpush.msra.mxu0 %v2443
        %2552 = vmatpush.msra.mxu0 %v2441
        %2553 = vmatmul.f32.gmra.mxu0 %v2458
        %v2554 = vpop.f32.mrf.mxu0
        %v2555 = vadd.f32 %v2532, %v2554
        %2556 = vmatmul.f32.gmra.mxu0 %v2460
        %v2557 = vpop.f32.mrf.mxu0
        %v2558 = vadd.f32 %v2535, %v2557
        %2559 = vdwg.mxu0
        %v2560 = vadd.f32 %v2403, %v2509
        %v2561 = vadd.f32 %v2404, %v2555
        %v2562 = vadd.f32 %v2405, %v2512
        %v2563 = vadd.f32 %v2406, %v2558
        %s2564 = scalar_lea.vmem %s4, 1344
        %v2565 = vld [vmem:[%s2564] sm:$0xff]
        %v2566 = vld [vmem:[%s2564 + $0x8] sm:$0xff]
        %v2567 = vld [vmem:[%s2564 + $0x10] sm:$0xff]
        %v2568 = vld [vmem:[%s2564 + $0x18] sm:$0xff]
        %v2569 = vld [vmem:[%s2564 + $0x20] sm:$0xff]
        %v2570 = vld [vmem:[%s2564 + $0x28] sm:$0xff]
        %v2571 = vld [vmem:[%s2564 + $0x30] sm:$0xff]
        %v2572 = vld [vmem:[%s2564 + $0x38] sm:$0xff]
        %v2573 = vld [vmem:[%s2564 + $0x40] sm:$0xff]
        %v2574 = vld [vmem:[%s2564 + $0x48] sm:$0xff]
        %v2575 = vld [vmem:[%s2564 + $0x50] sm:$0xff]
        %v2576 = vld [vmem:[%s2564 + $0x58] sm:$0xff]
        %v2577 = vld [vmem:[%s2564 + $0x60] sm:$0xff]
        %v2578 = vld [vmem:[%s2564 + $0x68] sm:$0xff]
        %v2579 = vld [vmem:[%s2564 + $0x70] sm:$0xff]
        %v2580 = vld [vmem:[%s2564 + $0x78] sm:$0xff]
        %v2581 = vld [vmem:[%s2564 + $0x80] sm:$0xff]
        %v2582 = vld [vmem:[%s2564 + $0x88] sm:$0xff]
        %v2583 = vld [vmem:[%s2564 + $0x90] sm:$0xff]
        %v2584 = vld [vmem:[%s2564 + $0x98] sm:$0xff]
        %v2585 = vld [vmem:[%s2564 + $0xa0] sm:$0xff]
        %v2586 = vld [vmem:[%s2564 + $0xa8] sm:$0xff]
        %v2587 = vld [vmem:[%s2564 + $0xb0] sm:$0xff]
        %v2588 = vld [vmem:[%s2564 + $0xb8] sm:$0xff]
        %v2589 = vld [vmem:[%s2564 + $0xc0] sm:$0xff]
        %v2590 = vld [vmem:[%s2564 + $0xc8] sm:$0xff]
        %v2591 = vld [vmem:[%s2564 + $0xd0] sm:$0xff]
        %v2592 = vld [vmem:[%s2564 + $0xd8] sm:$0xff]
        %v2593 = vld [vmem:[%s2564 + $0xe0] sm:$0xff]
        %v2594 = vld [vmem:[%s2564 + $0xe8] sm:$0xff]
        %v2595 = vld [vmem:[%s2564 + $0xf0] sm:$0xff]
        %v2596 = vld [vmem:[%s2564 + $0xf8] sm:$0xff]
        %v2597 = vld [vmem:[%s2564 + $0x100] sm:$0xff]
        %v2598 = vld [vmem:[%s2564 + $0x108] sm:$0xff]
        %v2599 = vld [vmem:[%s2564 + $0x110] sm:$0xff]
        %v2600 = vld [vmem:[%s2564 + $0x118] sm:$0xff]
        %v2601 = vld [vmem:[%s2564 + $0x120] sm:$0xff]
        %v2602 = vld [vmem:[%s2564 + $0x128] sm:$0xff]
        %v2603 = vld [vmem:[%s2564 + $0x130] sm:$0xff]
        %v2604 = vld [vmem:[%s2564 + $0x138] sm:$0xff]
        %v2605 = vld [vmem:[%s2564 + $0x140] sm:$0x7f]
        %v2606 = vld [vmem:[%s2564 + $0x148] sm:$0x7f]
        %v2607 = vrot.slane %v1920, 4
        %v2608 = vrot.slane %v1923, 4
        %v2609 = vsel %vm808, %v2607, %v2608
        %v2610 = vrot.slane %v1943, 4
        %v2611 = vrot.slane %v1946, 4
        %v2612 = vsel %vm808, %v2610, %v2611
        %v2615 = vsel %vm2045, %v2612, 0
        %v2617 = vsel %vm2045, %v2611, 0
        %v2620 = vsel %vm476, %v2605, 0
        %v2623 = vsel %vm476, %v2606, 0
        %2625 = vmatpush.msra.mxu0 %v2595
        %2626 = vmatpush.msra.mxu0 %v2593
        %2627 = vmatpush.msra.mxu0 %v2591
        %2628 = vmatpush.msra.mxu0 %v2589
        %2629 = vmatpush.msra.mxu0 %v2587
        %2630 = vmatpush.msra.mxu0 %v2585
        %2631 = vmatpush.msra.mxu0 %v2583
        %2632 = vmatpush.msra.mxu0 %v2581
        %2633 = vmatpush.msra.mxu0 %v2579
        %2634 = vmatpush.msra.mxu0 %v2577
        %2635 = vmatpush.msra.mxu0 %v2575
        %2636 = vmatpush.msra.mxu0 %v2573
        %2637 = vmatpush.msra.mxu0 %v2571
        %2638 = vmatpush.msra.mxu0 %v2569
        %2639 = vmatpush.msra.mxu0 %v2567
        %2640 = vmatpush.msra.mxu0 %v2565
        %2641 = vmatmul.f32.gmra.mxu0 %v2609
        %v2642 = vpop.f32.mrf.mxu0
        %v2643 = vadd.f32 0.0, %v2642
        %2644 = vmatmul.f32.gmra.mxu0 %v2608
        %v2645 = vpop.f32.mrf.mxu0
        %v2646 = vadd.f32 0.0, %v2645
        %2647 = vdwg.mxu0
        %2648 = vmatpush.msra.mxu0 0.0
        %2649 = vmatpush.msra.mxu0 0.0
        %2650 = vmatpush.msra.mxu0 0.0
        %2651 = vmatpush.msra.mxu0 0.0
        %2652 = vmatpush.msra.mxu0 0.0
        %2653 = vmatpush.msra.mxu0 0.0
        %2654 = vmatpush.msra.mxu0 0.0
        %2655 = vmatpush.msra.mxu0 0.0
        %2656 = vmatpush.msra.mxu0 0.0
        %2657 = vmatpush.msra.mxu0 0.0
        %2658 = vmatpush.msra.mxu0 0.0
        %2659 = vmatpush.msra.mxu0 %v2620
        %2660 = vmatpush.msra.mxu0 %v2603
        %2661 = vmatpush.msra.mxu0 %v2601
        %2662 = vmatpush.msra.mxu0 %v2599
        %2663 = vmatpush.msra.mxu0 %v2597
        %2664 = vmatmul.f32.gmra.mxu0 %v2615
        %v2665 = vpop.f32.mrf.mxu0
        %v2666 = vadd.f32 %v2643, %v2665
        %2667 = vmatmul.f32.gmra.mxu0 %v2617
        %v2668 = vpop.f32.mrf.mxu0
        %v2669 = vadd.f32 %v2646, %v2668
        %2670 = vdwg.mxu0
        %2671 = vmatpush.msra.mxu0 %v2596
        %2672 = vmatpush.msra.mxu0 %v2594
        %2673 = vmatpush.msra.mxu0 %v2592
        %2674 = vmatpush.msra.mxu0 %v2590
        %2675 = vmatpush.msra.mxu0 %v2588
        %2676 = vmatpush.msra.mxu0 %v2586
        %2677 = vmatpush.msra.mxu0 %v2584
        %2678 = vmatpush.msra.mxu0 %v2582
        %2679 = vmatpush.msra.mxu0 %v2580
        %2680 = vmatpush.msra.mxu0 %v2578
        %2681 = vmatpush.msra.mxu0 %v2576
        %2682 = vmatpush.msra.mxu0 %v2574
        %2683 = vmatpush.msra.mxu0 %v2572
        %2684 = vmatpush.msra.mxu0 %v2570
        %2685 = vmatpush.msra.mxu0 %v2568
        %2686 = vmatpush.msra.mxu0 %v2566
        %2687 = vmatmul.f32.gmra.mxu0 %v2609
        %v2688 = vpop.f32.mrf.mxu0
        %v2689 = vadd.f32 0.0, %v2688
        %2690 = vmatmul.f32.gmra.mxu0 %v2608
        %v2691 = vpop.f32.mrf.mxu0
        %v2692 = vadd.f32 0.0, %v2691
        %2693 = vdwg.mxu0
        %2694 = vmatpush.msra.mxu0 0.0
        %2695 = vmatpush.msra.mxu0 0.0
        %2696 = vmatpush.msra.mxu0 0.0
        %2697 = vmatpush.msra.mxu0 0.0
        %2698 = vmatpush.msra.mxu0 0.0
        %2699 = vmatpush.msra.mxu0 0.0
        %2700 = vmatpush.msra.mxu0 0.0
        %2701 = vmatpush.msra.mxu0 0.0
        %2702 = vmatpush.msra.mxu0 0.0
        %2703 = vmatpush.msra.mxu0 0.0
        %2704 = vmatpush.msra.mxu0 0.0
        %2705 = vmatpush.msra.mxu0 %v2623
        %2706 = vmatpush.msra.mxu0 %v2604
        %2707 = vmatpush.msra.mxu0 %v2602
        %2708 = vmatpush.msra.mxu0 %v2600
        %2709 = vmatpush.msra.mxu0 %v2598
        %2710 = vmatmul.f32.gmra.mxu0 %v2615
        %v2711 = vpop.f32.mrf.mxu0
        %v2712 = vadd.f32 %v2689, %v2711
        %2713 = vmatmul.f32.gmra.mxu0 %v2617
        %v2714 = vpop.f32.mrf.mxu0
        %v2715 = vadd.f32 %v2692, %v2714
        %2716 = vdwg.mxu0
        %v2717 = vadd.f32 %v2560, %v2666
        %v2718 = vadd.f32 %v2561, %v2712
        %v2719 = vadd.f32 %v2562, %v2669
        %v2720 = vadd.f32 %v2563, %v2715
        %v2722 = vperm.slane %v441, 0
        %v2723 = vperm.slane %v441, 1
        %v2726 = vadd.f32 %v2717, %v2722
        %v2727 = vadd.f32 %v2718, %v2723
        %v2728 = vadd.f32 %v2719, %v2722
        %v2729 = vadd.f32 %v2720, %v2723
        %v2730 = vmax.f32 %v2726, 0.0
        %v2731 = vmax.f32 %v2727, 0.0
        %v2732 = vmax.f32 %v2728, 0.0
        %v2733 = vmax.f32 %v2729, 0.0
        %2738 = vrot.lane.b32.xlu0 %v2730, 127
        %v2739 = vpop.permute.xlu0 %2738
        %2740 = vrot.lane.b32.xlu0 %v2731, 127
        %v2741 = vpop.permute.xlu0 %2740
        %2742 = vrot.lane.b32.xlu0 %v2732, 127
        %v2743 = vpop.permute.xlu0 %2742
        %2744 = vrot.lane.b32.xlu0 %v2733, 127
        %v2745 = vpop.permute.xlu0 %2744
        %v2746 = vsel %vm1829, %v2739, %v2741
        %v2747 = vsel %vm1829, %v2743, %v2745
        %v2752 = vmax.f32 %v2730, %v2746
        %v2753 = vmax.f32 %v2731, %v2741
        %v2754 = vmax.f32 %v2732, %v2747
        %v2755 = vmax.f32 %v2733, %v2745
        %v2760 = vrot.slane %v2752, 1
        %v2761 = vrot.slane %v2754, 1
        %v2762 = vsel %vm476, %v2760, %v2761
        %v2763 = vrot.slane %v2753, 1
        %v2764 = vrot.slane %v2755, 1
        %v2765 = vsel %vm476, %v2763, %v2764
        %v2770 = vmax.f32 %v2752, %v2762
        %v2771 = vmax.f32 %v2753, %v2765
        %v2772 = vmax.f32 %v2754, %v2761
        %v2773 = vmax.f32 %v2755, %v2764
        %vm2774 = vcmask 72704
        %v2776 = vsel %vm2774, %v442, 0
        %vm2778 = vcmask 1040384
        %v2780 = vsel %vm2778, %v2772, 0
        %v2783 = vsel %vm2778, %v2773, 0
        %2785 = vmatpush.msra.mxu0 0.0
        %2786 = vmatpush.msra.mxu0 0.0
        %2787 = vmatpush.msra.mxu0 0.0
        %2788 = vmatpush.msra.mxu0 0.0
        %2789 = vmatpush.msra.mxu0 0.0
        %2790 = vmatpush.msra.mxu0 0.0
        %2791 = vmatpush.msra.mxu0 0.0
        %2792 = vmatpush.msra.mxu0 0.0
        %2793 = vmatpush.msra.mxu0 0.0
        %2794 = vmatpush.msra.mxu0 0.0
        %2795 = vmatpush.msra.mxu0 0.0
        %2796 = vmatpush.msra.mxu0 0.0
        %2797 = vmatpush.msra.mxu0 0.0
        %2798 = vmatpush.msra.mxu0 0.0
        %2799 = vmatpush.msra.mxu0 %v2780
        %2800 = vmatpush.msra.mxu0 %v2770
        %2801 = vmatmul.f32.gmra.mxu0 %v2776
        %v2802 = vpop.f32.mrf.mxu0
        %v2803 = vadd.f32 0.0, %v2802
        %2804 = vdwg.mxu0
        %2805 = vmatpush.msra.mxu0 0.0
        %2806 = vmatpush.msra.mxu0 0.0
        %2807 = vmatpush.msra.mxu0 0.0
        %2808 = vmatpush.msra.mxu0 0.0
        %2809 = vmatpush.msra.mxu0 0.0
        %2810 = vmatpush.msra.mxu0 0.0
        %2811 = vmatpush.msra.mxu0 0.0
        %2812 = vmatpush.msra.mxu0 0.0
        %2813 = vmatpush.msra.mxu0 0.0
        %2814 = vmatpush.msra.mxu0 0.0
        %2815 = vmatpush.msra.mxu0 0.0
        %2816 = vmatpush.msra.mxu0 0.0
        %2817 = vmatpush.msra.mxu0 0.0
        %2818 = vmatpush.msra.mxu0 0.0
        %2819 = vmatpush.msra.mxu0 %v2783
        %2820 = vmatpush.msra.mxu0 %v2771
        %2821 = vmatmul.f32.gmra.mxu0 %v2776
        %v2822 = vpop.f32.mrf.mxu0
        %v2823 = vadd.f32 0.0, %v2822
        %2824 = vdwg.mxu0
        %v2825 = vld [vmem:[%s7] sm:$0xff]
        %v2826 = vld [vmem:[%s7 + $0x8] sm:$0xff]
        %v2827 = vld [vmem:[%s7 + $0x10] sm:$0xff]
        %v2828 = vld [vmem:[%s7 + $0x18] sm:$0xff]
        %v2829 = vld [vmem:[%s7 + $0x20] sm:$0xff]
        %v2830 = vld [vmem:[%s7 + $0x28] sm:$0xff]
        %v2831 = vld [vmem:[%s7 + $0x30] sm:$0xff]
        %v2832 = vld [vmem:[%s7 + $0x38] sm:$0xff]
        %v2833 = vld [vmem:[%s7 + $0x40] sm:$0xff]
        %v2834 = vld [vmem:[%s7 + $0x48] sm:$0xff]
        %v2835 = vld [vmem:[%s7 + $0x50] sm:$0xff]
        %v2836 = vld [vmem:[%s7 + $0x58] sm:$0xff]
        %v2837 = vld [vmem:[%s7 + $0x60] sm:$0xff]
        %v2838 = vld [vmem:[%s7 + $0x68] sm:$0xff]
        %v2839 = vld [vmem:[%s7 + $0x70] sm:$0xff]
        %v2840 = vld [vmem:[%s7 + $0x78] sm:$0xff]
        %v2841 = vld [vmem:[%s7 + $0x80] sm:$0xff]
        %v2842 = vld [vmem:[%s7 + $0x88] sm:$0xff]
        %v2843 = vld [vmem:[%s7 + $0x90] sm:$0xff]
        %v2844 = vld [vmem:[%s7 + $0x98] sm:$0x7f]
        %s2845 = scalar_lea.vmem %s7, 160
        %v2846 = vld [vmem:[%s2845] sm:$0xff]
        %v2847 = vld [vmem:[%s2845 + $0x8] sm:$0xff]
        %v2848 = vld [vmem:[%s2845 + $0x10] sm:$0xff]
        %v2849 = vld [vmem:[%s2845 + $0x18] sm:$0xff]
        %v2850 = vld [vmem:[%s2845 + $0x20] sm:$0xff]
        %v2851 = vld [vmem:[%s2845 + $0x28] sm:$0xff]
        %v2852 = vld [vmem:[%s2845 + $0x30] sm:$0xff]
        %v2853 = vld [vmem:[%s2845 + $0x38] sm:$0xff]
        %v2854 = vld [vmem:[%s2845 + $0x40] sm:$0xff]
        %v2855 = vld [vmem:[%s2845 + $0x48] sm:$0xff]
        %v2856 = vld [vmem:[%s2845 + $0x50] sm:$0xff]
        %v2857 = vld [vmem:[%s2845 + $0x58] sm:$0xff]
        %v2858 = vld [vmem:[%s2845 + $0x60] sm:$0xff]
        %v2859 = vld [vmem:[%s2845 + $0x68] sm:$0xff]
        %v2860 = vld [vmem:[%s2845 + $0x70] sm:$0xff]
        %v2861 = vld [vmem:[%s2845 + $0x78] sm:$0xff]
        %v2862 = vld [vmem:[%s2845 + $0x80] sm:$0xff]
        %v2863 = vld [vmem:[%s2845 + $0x88] sm:$0xff]
        %v2864 = vld [vmem:[%s2845 + $0x90] sm:$0xff]
        %v2865 = vld [vmem:[%s2845 + $0x98] sm:$0x7f]
        %v2868 = vrot.slane %v2803, 1
        %v2869 = vrot.slane %v2823, 1
        %vm2871 = vcmask 252928
        %v2872 = vsel %vm2871, %v2869, 0
        %v2875 = vsel %vm476, %v2865, 0
        %2877 = vmatpush.msra.mxu0 %v2861
        %2878 = vmatpush.msra.mxu0 %v2860
        %2879 = vmatpush.msra.mxu0 %v2859
        %2880 = vmatpush.msra.mxu0 %v2858
        %2881 = vmatpush.msra.mxu0 %v2857
        %2882 = vmatpush.msra.mxu0 %v2856
        %2883 = vmatpush.msra.mxu0 %v2855
        %2884 = vmatpush.msra.mxu0 %v2854
        %2885 = vmatpush.msra.mxu0 %v2853
        %2886 = vmatpush.msra.mxu0 %v2852
        %2887 = vmatpush.msra.mxu0 %v2851
        %2888 = vmatpush.msra.mxu0 %v2850
        %2889 = vmatpush.msra.mxu0 %v2849
        %2890 = vmatpush.msra.mxu0 %v2848
        %2891 = vmatpush.msra.mxu0 %v2847
        %2892 = vmatpush.msra.mxu0 %v2846
        %2893 = vmatmul.f32.gmra.mxu0 %v2868
        %v2894 = vpop.f32.mrf.mxu0
        %v2895 = vadd.f32 0.0, %v2894
        %2896 = vdwg.mxu0
        %2897 = vmatpush.msra.mxu0 0.0
        %2898 = vmatpush.msra.mxu0 0.0
        %2899 = vmatpush.msra.mxu0 0.0
        %2900 = vmatpush.msra.mxu0 0.0
        %2901 = vmatpush.msra.mxu0 0.0
        %2902 = vmatpush.msra.mxu0 0.0
        %2903 = vmatpush.msra.mxu0 0.0
        %2904 = vmatpush.msra.mxu0 0.0
        %2905 = vmatpush.msra.mxu0 0.0
        %2906 = vmatpush.msra.mxu0 0.0
        %2907 = vmatpush.msra.mxu0 0.0
        %2908 = vmatpush.msra.mxu0 0.0
        %2909 = vmatpush.msra.mxu0 %v2875
        %2910 = vmatpush.msra.mxu0 %v2864
        %2911 = vmatpush.msra.mxu0 %v2863
        %2912 = vmatpush.msra.mxu0 %v2862
        %2913 = vmatmul.f32.gmra.mxu0 %v2872
        %v2914 = vpop.f32.mrf.mxu0
        %v2915 = vadd.f32 %v2895, %v2914
        %2916 = vdwg.mxu0
        %v2917 = vsel %vm2871, %v2823, 0
        %v2920 = vsel %vm476, %v2844, 0
        %2922 = vmatpush.msra.mxu0 %v2840
        %2923 = vmatpush.msra.mxu0 %v2839
        %2924 = vmatpush.msra.mxu0 %v2838
        %2925 = vmatpush.msra.mxu0 %v2837
        %2926 = vmatpush.msra.mxu0 %v2836
        %2927 = vmatpush.msra.mxu0 %v2835
        %2928 = vmatpush.msra.mxu0 %v2834
        %2929 = vmatpush.msra.mxu0 %v2833
        %2930 = vmatpush.msra.mxu0 %v2832
        %2931 = vmatpush.msra.mxu0 %v2831
        %2932 = vmatpush.msra.mxu0 %v2830
        %2933 = vmatpush.msra.mxu0 %v2829
        %2934 = vmatpush.msra.mxu0 %v2828
        %2935 = vmatpush.msra.mxu0 %v2827
        %2936 = vmatpush.msra.mxu0 %v2826
        %2937 = vmatpush.msra.mxu0 %v2825
        %2938 = vmatmul.f32.gmra.mxu0 %v2803
        %v2939 = vpop.f32.mrf.mxu0
        %v2940 = vadd.f32 %v2915, %v2939
        %2941 = vdwg.mxu0
        %2942 = vmatpush.msra.mxu0 0.0
        %2943 = vmatpush.msra.mxu0 0.0
        %2944 = vmatpush.msra.mxu0 0.0
        %2945 = vmatpush.msra.mxu0 0.0
        %2946 = vmatpush.msra.mxu0 0.0
        %2947 = vmatpush.msra.mxu0 0.0
        %2948 = vmatpush.msra.mxu0 0.0
        %2949 = vmatpush.msra.mxu0 0.0
        %2950 = vmatpush.msra.mxu0 0.0
        %2951 = vmatpush.msra.mxu0 0.0
        %2952 = vmatpush.msra.mxu0 0.0
        %2953 = vmatpush.msra.mxu0 0.0
        %2954 = vmatpush.msra.mxu0 %v2920
        %2955 = vmatpush.msra.mxu0 %v2843
        %2956 = vmatpush.msra.mxu0 %v2842
        %2957 = vmatpush.msra.mxu0 %v2841
        %2958 = vmatmul.f32.gmra.mxu0 %v2917
        %v2959 = vpop.f32.mrf.mxu0
        %v2960 = vadd.f32 %v2940, %v2959
        %2961 = vdwg.mxu0
        %s2962 = scalar_lea.vmem %s7, 320
        %v2963 = vld [vmem:[%s2962] sm:$0xff]
        %v2964 = vld [vmem:[%s2962 + $0x8] sm:$0xff]
        %v2965 = vld [vmem:[%s2962 + $0x10] sm:$0xff]
        %v2966 = vld [vmem:[%s2962 + $0x18] sm:$0xff]
        %v2967 = vld [vmem:[%s2962 + $0x20] sm:$0xff]
        %v2968 = vld [vmem:[%s2962 + $0x28] sm:$0xff]
        %v2969 = vld [vmem:[%s2962 + $0x30] sm:$0xff]
        %v2970 = vld [vmem:[%s2962 + $0x38] sm:$0xff]
        %v2971 = vld [vmem:[%s2962 + $0x40] sm:$0xff]
        %v2972 = vld [vmem:[%s2962 + $0x48] sm:$0xff]
        %v2973 = vld [vmem:[%s2962 + $0x50] sm:$0xff]
        %v2974 = vld [vmem:[%s2962 + $0x58] sm:$0xff]
        %v2975 = vld [vmem:[%s2962 + $0x60] sm:$0xff]
        %v2976 = vld [vmem:[%s2962 + $0x68] sm:$0xff]
        %v2977 = vld [vmem:[%s2962 + $0x70] sm:$0xff]
        %v2978 = vld [vmem:[%s2962 + $0x78] sm:$0xff]
        %v2979 = vld [vmem:[%s2962 + $0x80] sm:$0xff]
        %v2980 = vld [vmem:[%s2962 + $0x88] sm:$0xff]
        %v2981 = vld [vmem:[%s2962 + $0x90] sm:$0xff]
        %v2982 = vld [vmem:[%s2962 + $0x98] sm:$0x7f]
        %v2983 = vrot.slane %v2803, 2
        %v2984 = vrot.slane %v2823, 2
        %v2986 = vsel %vm2871, %v2984, 0
        %v2989 = vsel %vm476, %v2982, 0
        %2991 = vmatpush.msra.mxu0 %v2978
        %2992 = vmatpush.msra.mxu0 %v2977
        %2993 = vmatpush.msra.mxu0 %v2976
        %2994 = vmatpush.msra.mxu0 %v2975
        %2995 = vmatpush.msra.mxu0 %v2974
        %2996 = vmatpush.msra.mxu0 %v2973
        %2997 = vmatpush.msra.mxu0 %v2972
        %2998 = vmatpush.msra.mxu0 %v2971
        %2999 = vmatpush.msra.mxu0 %v2970
        %3000 = vmatpush.msra.mxu0 %v2969
        %3001 = vmatpush.msra.mxu0 %v2968
        %3002 = vmatpush.msra.mxu0 %v2967
        %3003 = vmatpush.msra.mxu0 %v2966
        %3004 = vmatpush.msra.mxu0 %v2965
        %3005 = vmatpush.msra.mxu0 %v2964
        %3006 = vmatpush.msra.mxu0 %v2963
        %3007 = vmatmul.f32.gmra.mxu0 %v2983
        %v3008 = vpop.f32.mrf.mxu0
        %v3009 = vadd.f32 0.0, %v3008
        %3010 = vdwg.mxu0
        %3011 = vmatpush.msra.mxu0 0.0
        %3012 = vmatpush.msra.mxu0 0.0
        %3013 = vmatpush.msra.mxu0 0.0
        %3014 = vmatpush.msra.mxu0 0.0
        %3015 = vmatpush.msra.mxu0 0.0
        %3016 = vmatpush.msra.mxu0 0.0
        %3017 = vmatpush.msra.mxu0 0.0
        %3018 = vmatpush.msra.mxu0 0.0
        %3019 = vmatpush.msra.mxu0 0.0
        %3020 = vmatpush.msra.mxu0 0.0
        %3021 = vmatpush.msra.mxu0 0.0
        %3022 = vmatpush.msra.mxu0 0.0
        %3023 = vmatpush.msra.mxu0 %v2989
        %3024 = vmatpush.msra.mxu0 %v2981
        %3025 = vmatpush.msra.mxu0 %v2980
        %3026 = vmatpush.msra.mxu0 %v2979
        %3027 = vmatmul.f32.gmra.mxu0 %v2986
        %v3028 = vpop.f32.mrf.mxu0
        %v3029 = vadd.f32 %v3009, %v3028
        %3030 = vdwg.mxu0
        %v3031 = vadd.f32 %v2960, %v3029
        %s3032 = scalar_lea.vmem %s7, 480
        %v3033 = vld [vmem:[%s3032] sm:$0xff]
        %v3034 = vld [vmem:[%s3032 + $0x8] sm:$0xff]
        %v3035 = vld [vmem:[%s3032 + $0x10] sm:$0xff]
        %v3036 = vld [vmem:[%s3032 + $0x18] sm:$0xff]
        %v3037 = vld [vmem:[%s3032 + $0x20] sm:$0xff]
        %v3038 = vld [vmem:[%s3032 + $0x28] sm:$0xff]
        %v3039 = vld [vmem:[%s3032 + $0x30] sm:$0xff]
        %v3040 = vld [vmem:[%s3032 + $0x38] sm:$0xff]
        %v3041 = vld [vmem:[%s3032 + $0x40] sm:$0xff]
        %v3042 = vld [vmem:[%s3032 + $0x48] sm:$0xff]
        %v3043 = vld [vmem:[%s3032 + $0x50] sm:$0xff]
        %v3044 = vld [vmem:[%s3032 + $0x58] sm:$0xff]
        %v3045 = vld [vmem:[%s3032 + $0x60] sm:$0xff]
        %v3046 = vld [vmem:[%s3032 + $0x68] sm:$0xff]
        %v3047 = vld [vmem:[%s3032 + $0x70] sm:$0xff]
        %v3048 = vld [vmem:[%s3032 + $0x78] sm:$0xff]
        %v3049 = vld [vmem:[%s3032 + $0x80] sm:$0xff]
        %v3050 = vld [vmem:[%s3032 + $0x88] sm:$0xff]
        %v3051 = vld [vmem:[%s3032 + $0x90] sm:$0xff]
        %v3052 = vld [vmem:[%s3032 + $0x98] sm:$0x7f]
        %v3053 = vrot.slane %v2803, 3
        %v3054 = vrot.slane %v2823, 3
        %v3056 = vsel %vm2871, %v3054, 0
        %v3059 = vsel %vm476, %v3052, 0
        %3061 = vmatpush.msra.mxu0 %v3048
        %3062 = vmatpush.msra.mxu0 %v3047
        %3063 = vmatpush.msra.mxu0 %v3046
        %3064 = vmatpush.msra.mxu0 %v3045
        %3065 = vmatpush.msra.mxu0 %v3044
        %3066 = vmatpush.msra.mxu0 %v3043
        %3067 = vmatpush.msra.mxu0 %v3042
        %3068 = vmatpush.msra.mxu0 %v3041
        %3069 = vmatpush.msra.mxu0 %v3040
        %3070 = vmatpush.msra.mxu0 %v3039
        %3071 = vmatpush.msra.mxu0 %v3038
        %3072 = vmatpush.msra.mxu0 %v3037
        %3073 = vmatpush.msra.mxu0 %v3036
        %3074 = vmatpush.msra.mxu0 %v3035
        %3075 = vmatpush.msra.mxu0 %v3034
        %3076 = vmatpush.msra.mxu0 %v3033
        %3077 = vmatmul.f32.gmra.mxu0 %v3053
        %v3078 = vpop.f32.mrf.mxu0
        %v3079 = vadd.f32 0.0, %v3078
        %3080 = vdwg.mxu0
        %3081 = vmatpush.msra.mxu0 0.0
        %3082 = vmatpush.msra.mxu0 0.0
        %3083 = vmatpush.msra.mxu0 0.0
        %3084 = vmatpush.msra.mxu0 0.0
        %3085 = vmatpush.msra.mxu0 0.0
        %3086 = vmatpush.msra.mxu0 0.0
        %3087 = vmatpush.msra.mxu0 0.0
        %3088 = vmatpush.msra.mxu0 0.0
        %3089 = vmatpush.msra.mxu0 0.0
        %3090 = vmatpush.msra.mxu0 0.0
        %3091 = vmatpush.msra.mxu0 0.0
        %3092 = vmatpush.msra.mxu0 0.0
        %3093 = vmatpush.msra.mxu0 %v3059
        %3094 = vmatpush.msra.mxu0 %v3051
        %3095 = vmatpush.msra.mxu0 %v3050
        %3096 = vmatpush.msra.mxu0 %v3049
        %3097 = vmatmul.f32.gmra.mxu0 %v3056
        %v3098 = vpop.f32.mrf.mxu0
        %v3099 = vadd.f32 %v3079, %v3098
        %3100 = vdwg.mxu0
        %v3101 = vadd.f32 %v3031, %v3099
        %s3102 = scalar_lea.vmem %s7, 640
        %v3103 = vld [vmem:[%s3102] sm:$0xff]
        %v3104 = vld [vmem:[%s3102 + $0x8] sm:$0xff]
        %v3105 = vld [vmem:[%s3102 + $0x10] sm:$0xff]
        %v3106 = vld [vmem:[%s3102 + $0x18] sm:$0xff]
        %v3107 = vld [vmem:[%s3102 + $0x20] sm:$0xff]
        %v3108 = vld [vmem:[%s3102 + $0x28] sm:$0xff]
        %v3109 = vld [vmem:[%s3102 + $0x30] sm:$0xff]
        %v3110 = vld [vmem:[%s3102 + $0x38] sm:$0xff]
        %v3111 = vld [vmem:[%s3102 + $0x40] sm:$0xff]
        %v3112 = vld [vmem:[%s3102 + $0x48] sm:$0xff]
        %v3113 = vld [vmem:[%s3102 + $0x50] sm:$0xff]
        %v3114 = vld [vmem:[%s3102 + $0x58] sm:$0xff]
        %v3115 = vld [vmem:[%s3102 + $0x60] sm:$0xff]
        %v3116 = vld [vmem:[%s3102 + $0x68] sm:$0xff]
        %v3117 = vld [vmem:[%s3102 + $0x70] sm:$0xff]
        %v3118 = vld [vmem:[%s3102 + $0x78] sm:$0xff]
        %v3119 = vld [vmem:[%s3102 + $0x80] sm:$0xff]
        %v3120 = vld [vmem:[%s3102 + $0x88] sm:$0xff]
        %v3121 = vld [vmem:[%s3102 + $0x90] sm:$0xff]
        %v3122 = vld [vmem:[%s3102 + $0x98] sm:$0x7f]
        %v3123 = vrot.slane %v2803, 4
        %v3124 = vrot.slane %v2823, 4
        %v3126 = vsel %vm2871, %v3124, 0
        %v3129 = vsel %vm476, %v3122, 0
        %3131 = vmatpush.msra.mxu0 %v3118
        %3132 = vmatpush.msra.mxu0 %v3117
        %3133 = vmatpush.msra.mxu0 %v3116
        %3134 = vmatpush.msra.mxu0 %v3115
        %3135 = vmatpush.msra.mxu0 %v3114
        %3136 = vmatpush.msra.mxu0 %v3113
        %3137 = vmatpush.msra.mxu0 %v3112
        %3138 = vmatpush.msra.mxu0 %v3111
        %3139 = vmatpush.msra.mxu0 %v3110
        %3140 = vmatpush.msra.mxu0 %v3109
        %3141 = vmatpush.msra.mxu0 %v3108
        %3142 = vmatpush.msra.mxu0 %v3107
        %3143 = vmatpush.msra.mxu0 %v3106
        %3144 = vmatpush.msra.mxu0 %v3105
        %3145 = vmatpush.msra.mxu0 %v3104
        %3146 = vmatpush.msra.mxu0 %v3103
        %3147 = vmatmul.f32.gmra.mxu0 %v3123
        %v3148 = vpop.f32.mrf.mxu0
        %v3149 = vadd.f32 0.0, %v3148
        %3150 = vdwg.mxu0
        %3151 = vmatpush.msra.mxu0 0.0
        %3152 = vmatpush.msra.mxu0 0.0
        %3153 = vmatpush.msra.mxu0 0.0
        %3154 = vmatpush.msra.mxu0 0.0
        %3155 = vmatpush.msra.mxu0 0.0
        %3156 = vmatpush.msra.mxu0 0.0
        %3157 = vmatpush.msra.mxu0 0.0
        %3158 = vmatpush.msra.mxu0 0.0
        %3159 = vmatpush.msra.mxu0 0.0
        %3160 = vmatpush.msra.mxu0 0.0
        %3161 = vmatpush.msra.mxu0 0.0
        %3162 = vmatpush.msra.mxu0 0.0
        %3163 = vmatpush.msra.mxu0 %v3129
        %3164 = vmatpush.msra.mxu0 %v3121
        %3165 = vmatpush.msra.mxu0 %v3120
        %3166 = vmatpush.msra.mxu0 %v3119
        %3167 = vmatmul.f32.gmra.mxu0 %v3126
        %v3168 = vpop.f32.mrf.mxu0
        %v3169 = vadd.f32 %v3149, %v3168
        %3170 = vdwg.mxu0
        %v3171 = vadd.f32 %v3101, %v3169
        %v3172 = vld [vmem:[%s8] sm:$0x1]
        %v3173 = vadd.f32 %v3171, %v3172
        %v3174 = vmax.f32 %v3173, 0.0
        %v3175 = vld [vmem:[%s9] sm:$0xff]
        %v3176 = vld [vmem:[%s9 + $0x8] sm:$0xff]
        %v3177 = vld [vmem:[%s9 + $0x10] sm:$0xff]
        %v3178 = vld [vmem:[%s9 + $0x18] sm:$0xff]
        %v3179 = vld [vmem:[%s9 + $0x20] sm:$0xff]
        %v3180 = vld [vmem:[%s9 + $0x28] sm:$0xff]
        %v3181 = vld [vmem:[%s9 + $0x30] sm:$0xff]
        %v3182 = vld [vmem:[%s9 + $0x38] sm:$0xff]
        %v3183 = vld [vmem:[%s9 + $0x40] sm:$0xff]
        %v3184 = vld [vmem:[%s9 + $0x48] sm:$0xff]
        %v3185 = vld [vmem:[%s9 + $0x50] sm:$0xff]
        %v3186 = vld [vmem:[%s9 + $0x58] sm:$0xff]
        %v3187 = vld [vmem:[%s9 + $0x60] sm:$0xff]
        %v3188 = vld [vmem:[%s9 + $0x68] sm:$0xff]
        %v3189 = vld [vmem:[%s9 + $0x70] sm:$0xff]
        %v3190 = vld [vmem:[%s9 + $0x78] sm:$0xff]
        %v3191 = vld [vmem:[%s10] sm:$0x1]
        %3192 = vmatpush.msra.mxu0 %v3190
        %3193 = vmatpush.msra.mxu0 %v3189
        %3194 = vmatpush.msra.mxu0 %v3188
        %3195 = vmatpush.msra.mxu0 %v3187
        %3196 = vmatpush.msra.mxu0 %v3186
        %3197 = vmatpush.msra.mxu0 %v3185
        %3198 = vmatpush.msra.mxu0 %v3184
        %3199 = vmatpush.msra.mxu0 %v3183
        %3200 = vmatpush.msra.mxu0 %v3182
        %3201 = vmatpush.msra.mxu0 %v3181
        %3202 = vmatpush.msra.mxu0 %v3180
        %3203 = vmatpush.msra.mxu0 %v3179
        %3204 = vmatpush.msra.mxu0 %v3178
        %3205 = vmatpush.msra.mxu0 %v3177
        %3206 = vmatpush.msra.mxu0 %v3176
        %3207 = vmatpush.msra.mxu0 %v3175
        %3208 = vmatmul.f32.gmra.mxu0 %v3174
        %v3209 = vpop.f32.mrf.mxu0
        %v3210 = vadd.f32 %v3191, %v3209
        %3211 = vdwg.mxu0
        %v3212 = vmax.f32 %v3210, 0.0
        %v3213 = vld [vmem:[%s11] sm:$0xff]
        %v3214 = vld [vmem:[%s11 + $0x8] sm:$0xff]
        %v3215 = vld [vmem:[%s11 + $0x10] sm:$0xff]
        %v3216 = vld [vmem:[%s11 + $0x18] sm:$0xff]
        %v3217 = vld [vmem:[%s11 + $0x20] sm:$0xff]
        %v3218 = vld [vmem:[%s11 + $0x28] sm:$0xff]
        %v3219 = vld [vmem:[%s11 + $0x30] sm:$0xff]
        %v3220 = vld [vmem:[%s11 + $0x38] sm:$0xff]
        %v3221 = vld [vmem:[%s11 + $0x40] sm:$0xff]
        %v3222 = vld [vmem:[%s11 + $0x48] sm:$0xff]
        %v3223 = vld [vmem:[%s11 + $0x50] sm:$0xff]
        %v3224 = vld [vmem:[%s11 + $0x58] sm:$0xff]
        %v3225 = vld [vmem:[%s11 + $0x60] sm:$0xff]
        %v3226 = vld [vmem:[%s11 + $0x68] sm:$0xff]
        %v3227 = vld [vmem:[%s11 + $0x70] sm:$0xff]
        %v3228 = vld [vmem:[%s11 + $0x78] sm:$0xff]
        %v3229 = vld [vmem:[%s12] sm:$0x1]
        %3230 = vmatpush.msra.mxu0 %v3228
        %3231 = vmatpush.msra.mxu0 %v3227
        %3232 = vmatpush.msra.mxu0 %v3226
        %3233 = vmatpush.msra.mxu0 %v3225
        %3234 = vmatpush.msra.mxu0 %v3224
        %3235 = vmatpush.msra.mxu0 %v3223
        %3236 = vmatpush.msra.mxu0 %v3222
        %3237 = vmatpush.msra.mxu0 %v3221
        %3238 = vmatpush.msra.mxu0 %v3220
        %3239 = vmatpush.msra.mxu0 %v3219
        %3240 = vmatpush.msra.mxu0 %v3218
        %3241 = vmatpush.msra.mxu0 %v3217
        %3242 = vmatpush.msra.mxu0 %v3216
        %3243 = vmatpush.msra.mxu0 %v3215
        %3244 = vmatpush.msra.mxu0 %v3214
        %3245 = vmatpush.msra.mxu0 %v3213
        %3246 = vmatmul.f32.gmra.mxu0 %v3212
        %v3247 = vpop.f32.mrf.mxu0
        %v3248 = vadd.f32 %v3229, %v3247
        %3249 = vdwg.mxu0
        %3250 = vst [vmem:[%s432] sm:$0x1] %v3248
        %s3251 = sand.u32 %s313, 1
        %s3252 = scalar_lea.sflag [#allocation3], %s3251
        %s3253 = sand.u32 %s313, 1
        %s3254 = scalar_lea.vmem [#allocation2], %s3253
        // Predicated region
        $region73: #{tpu_custom_call.1} parent=71 // pred_check
          %p3255 = pneg %p323
        $region74: #{tpu_custom_call.1} parent=71 // pred_check_branch
          %3257 = sbr.rel (%p3255) target = $region76
        $region75: #{tpu_custom_call.1} parent=71 // pred_region
          %3259 = vsyncadd %s3252, 0
          %s3260 = scalar_lea.hbm %s13, %s27
          %s3262 = sshll.u32 %s3254, 4
          %s3263 = int_to_ptr.vmem [resolvable:$true] %s3262
          %s3264 = sshll.u32 %s3260, 4
          %s3265 = int_to_ptr.hbm [resolvable:$true] %s3264
          %3267 = dma.vmem_to_hbm [thread:$0]  %s3263, 16, %s3265, %s3252
        $region76: #{tpu_custom_call.1} parent=71 // pred_fallthru
          _
      $region72: #{tpu_custom_call.1} parent=5 // pred_fallthru
        _
      %p3268 = scmp.le.s32.totalorder 2, %s22
      // Predicated region
      $region77: #{tpu_custom_call.1} parent=5 // pred_check
        %p3269 = pneg %p3268
      $region78: #{tpu_custom_call.1} parent=5 // pred_check_branch
        %3271 = sbr.rel (%p3269) target = $region80
      $region79: #{tpu_custom_call.1} parent=5 // pred_region
        %s3272 = ssub.s32 %s22, 2
        // Predicated region
        $region81: #{tpu_custom_call.1} parent=79 // pred_check
          %p3273 = pneg %p329
        $region82: #{tpu_custom_call.1} parent=79 // pred_check_branch
          %3275 = sbr.rel (%p3273) target = $region84
        $region83: #{tpu_custom_call.1} parent=79 // pred_region
          %s3276 = sand.u32 %s314, 1
          %s3277 = scalar_lea.sflag [#allocation3], %s3276
          %s3278 = sand.u32 %s314, 1
          %s3279 = scalar_lea.vmem [#allocation2], %s3278
          %3281 = dma.done %s3277, 16
        $region84: #{tpu_custom_call.1} parent=79 // pred_fallthru
          _
      $region80: #{tpu_custom_call.1} parent=5 // pred_fallthru
        _
    $region6: #{tpu_custom_call.1} parent=1 // loop_footer
      %s26 = sadd.s32 1, %s22
    $region7: #{tpu_custom_call.1} parent=1 // loop_footer_branch
      %21 = sbr.rel target = $region3
    $region8: #{tpu_custom_call.1} parent=1 // loop_exit
      _
    %3282 = vsyncpa [#allocation3], 1
    %s3283 = scalar_lea.sflag [#allocation3], 1
    %3284 = vsyncpa %s3283, 1

</llo_original>
